<compile_context>
chip_gen: v5e
topology: v5e:2x2
jax: 0.10.0
libtpu: 0.0.40
codegen_flags: <defaults>
</compile_context>

<pallas_src>
import functools

import jax
import jax.numpy as jnp
from jax.experimental import pallas as pl
from jax.experimental.pallas import tpu as pltpu


# ----------------------------------------------------------------------------
# Fused kernel: one grid step = one batch element, full decode in VMEM.
# ----------------------------------------------------------------------------
def _recon_fused_kernel(x_ref, wp_ref, bp_ref, w1_ref, b1_ref, w2_ref, b2_ref,
                        hm_ref, o_ref, p1_ref, p2_ref, *, W):
    HW = x_ref.shape[-1]          # H*W (lane dim, lane-dense)
    C_hid = w1_ref.shape[1]
    C_out = w2_ref.shape[1]
    PAD = W + 1                   # one padded row-block + 1 px on each side of the flat slab

    hmask = hm_ref[...]           # (3, 1, HW) bf16 {0,1}: horizontal validity for ox=-1,0,+1

    def tap(slab_ref, oy, ox):
        # Shifted view of the zero-padded activation slab for tap offset (oy, ox).
        start = PAD + oy * W + ox
        v = slab_ref[:, start:start + HW]            # (C, HW) bf16, static lane slice
        if ox != 0:
            v = v * hmask[ox + 1]                    # kill horizontal wrap-around pixels
        return v

    # ---- post_quant_conv: 1x1 conv = channel matmul + bias (fused, bf16 MXU, f32 acc) ----
    x = x_ref[0]                                                     # (C_lat, HW) bf16
    q = jnp.dot(wp_ref[...], x, preferred_element_type=jnp.float32)  # (C_lat, HW) f32
    q = (q + bp_ref[...]).astype(jnp.bfloat16)

    # ---- zero-padded slab for conv_in (decoder conv_in, 3x3, pad=1) ----
    p1_ref[...] = jnp.zeros_like(p1_ref)
    p1_ref[:, PAD:PAD + HW] = q

    # ---- conv_in: 9 shifted dots accumulated in f32, then bias + SiLU (EUP) ----
    acc1 = jnp.zeros((C_hid, HW), jnp.float32)
    for dy in range(3):
        for dx in range(3):
            acc1 = acc1 + jnp.dot(w1_ref[dy * 3 + dx],
                                  tap(p1_ref, dy - 1, dx - 1),
                                  preferred_element_type=jnp.float32)
    h = acc1 + b1_ref[...]
    h = h * jax.nn.sigmoid(h)                     # SiLU
    h = h.astype(jnp.bfloat16)

    # ---- zero-padded slab for conv_out (reads the PRE-upsample activation) ----
    p2_ref[...] = jnp.zeros_like(p2_ref)
    p2_ref[:, PAD:PAD + HW] = h

    # ---- conv_out fused with 2x nearest upsample via parity decomposition:
    #      out[2y+py, 2x+px] = sum over 2x2 effective taps of pre-combined weights ----
    for py in range(2):
        for px in range(2):
            pidx = py * 2 + px
            acc2 = jnp.zeros((C_out, HW), jnp.float32)
            for ty in range(2):
                for tx in range(2):
                    oy = ty + py - 1
                    ox = tx + px - 1
                    w_eff = w2_ref[pidx * 4 + ty * 2 + tx]      # (C_out, C_hid) bf16
                    acc2 = acc2 + jnp.dot(w_eff, tap(p2_ref, oy, ox),
                                          preferred_element_type=jnp.float32)
            # Lane-dense store: (C_out, HW) with HW lanes (unmasked vst along lanes).
            o_ref[0, pidx] = (acc2 + b2_ref[...]).astype(o_ref.dtype)


def _fused_decoder_call(x2, wp, bp, w1t, b1, w2e, b2, hmask,
                        *, N, H, W, C_lat, C_hid, C_out):
    HW = H * W
    PAD = W + 1
    kern = functools.partial(_recon_fused_kernel, W=W)

    flops = 2 * N * HW * (C_lat * C_lat + 9 * C_lat * C_hid + 16 * C_hid * C_out)
    bytes_accessed = int(
        x2.size * 2 + wp.size * 2 + bp.size * 4 + w1t.size * 2 + b1.size * 4
        + w2e.size * 2 + b2.size * 4 + hmask.size * 2 + N * 4 * C_out * HW * 4)

    return pl.pallas_call(
        kern,
        out_shape=jax.ShapeDtypeStruct((N, 4, C_out, HW), jnp.float32),
        grid_spec=pltpu.PrefetchScalarGridSpec(
            num_scalar_prefetch=0,
            grid=(N,),
            in_specs=[
                pl.BlockSpec((1, C_lat, HW), lambda n: (n, 0, 0)),        # latent (bf16)
                pl.BlockSpec((C_lat, C_lat), lambda n: (0, 0)),           # pqc weight
                pl.BlockSpec((C_lat, 1), lambda n: (0, 0)),               # pqc bias
                pl.BlockSpec((9, C_hid, C_lat), lambda n: (0, 0, 0)),     # conv_in taps
                pl.BlockSpec((C_hid, 1), lambda n: (0, 0)),               # conv_in bias
                pl.BlockSpec((16, C_out, C_hid), lambda n: (0, 0, 0)),    # conv_out parity taps
                pl.BlockSpec((C_out, 1), lambda n: (0, 0)),               # conv_out bias
                pl.BlockSpec((3, 1, HW), lambda n: (0, 0, 0)),            # horizontal masks
            ],
            out_specs=pl.BlockSpec((1, 4, C_out, HW), lambda n: (n, 0, 0, 0)),
            scratch_shapes=[
                pltpu.VMEM((C_lat, HW + 2 * PAD), jnp.bfloat16),          # padded latent slab
                pltpu.VMEM((C_hid, HW + 2 * PAD), jnp.bfloat16),          # padded hidden slab
            ],
        ),
        compiler_params=pltpu.CompilerParams(
            dimension_semantics=("parallel",),        # batch axis -> both TCs on v7x
            vmem_limit_bytes=32 * 1024 * 1024,        # explicit, leaves headroom on 64 MiB v7x
        ),
        cost_estimate=pl.CostEstimate(
            flops=flops,
            transcendentals=N * C_hid * HW,
            bytes_accessed=bytes_accessed,
        ),
    )(x2, wp, bp, w1t, b1, w2e, b2, hmask)


# ----------------------------------------------------------------------------
# Parameters (torch Conv2d layout: (Cout, Cin, kh, kw)) and forward pass.
# ----------------------------------------------------------------------------
def init_params(key, latent_dim=4, hidden=32, out_ch=3):
    ks = jax.random.split(key, 6)
    s = 0.1
    return {
        "pqc_w": s * jax.random.normal(ks[0], (latent_dim, latent_dim, 1, 1), jnp.float32),
        "pqc_b": s * jax.random.normal(ks[1], (latent_dim,), jnp.float32),
        "dec_in_w": s * jax.random.normal(ks[2], (hidden, latent_dim, 3, 3), jnp.float32),
        "dec_in_b": s * jax.random.normal(ks[3], (hidden,), jnp.float32),
        "dec_out_w": s * jax.random.normal(ks[4], (out_ch, hidden, 3, 3), jnp.float32),
        "dec_out_b": s * jax.random.normal(ks[5], (out_ch,), jnp.float32),
    }


def recon_forward(params, lat):
    """lat: (N, latent_dim, H, W) NCHW like torch. Returns (N, 3, 2H, 2W) NCHW."""
    N, C_lat, H, W = lat.shape
    HW = H * W
    C_hid = params["dec_in_w"].shape[0]
    C_out = params["dec_out_w"].shape[0]
    cdt = jnp.bfloat16

    # NCHW is already channel-major: flatten spatial -> (N, C, H*W), no transpose needed.
    x2 = lat.reshape(N, C_lat, HW).astype(cdt)

    # post_quant_conv weights (torch (Cout,Cin,1,1) -> (Cout,Cin)).
    wp = params["pqc_w"][:, :, 0, 0].astype(cdt)
    bp = params["pqc_b"].reshape(C_lat, 1).astype(jnp.float32)

    # conv_in: per-tap (Cout, Cin) matrices, tap index = dy*3+dx.
    w1t = jnp.transpose(params["dec_in_w"], (2, 3, 0, 1)).reshape(9, C_hid, C_lat).astype(cdt)
    b1 = params["dec_in_b"].reshape(C_hid, 1).astype(jnp.float32)

    # conv_out fused with nearest-2x upsample: pre-combine 3x3 weights into 4 parity classes
    # of 2x2 effective taps (pure weight preprocessing, done once at trace time).
    S = {(0, 0): (0,), (0, 1): (1, 2), (1, 0): (0, 1), (1, 1): (2,)}
    w2 = params["dec_out_w"]
    blocks = []
    for py in range(2):
        for px in range(2):
            for ty in range(2):
                for tx in range(2):
                    acc = 0.0
                    for dy in S[(py, ty)]:
                        for dx in S[(px, tx)]:
                            acc = acc + w2[:, :, dy, dx]
                    blocks.append(acc)
    w2e = jnp.stack(blocks, axis=0).astype(cdt)            # (16, C_out, C_hid)
    b2 = params["dec_out_b"].reshape(C_out, 1).astype(jnp.float32)

    # Horizontal boundary masks for tap offsets ox in {-1, 0, +1} (kills row wrap-around).
    xcol = jnp.arange(HW, dtype=jnp.int32) % W
    hmask = jnp.stack(
        [(xcol >= 1), jnp.ones((HW,), dtype=bool), (xcol <= W - 2)], axis=0
    ).astype(cdt).reshape(3, 1, HW)

    out4 = _fused_decoder_call(x2, wp, bp, w1t, b1, w2e, b2, hmask,
                               N=N, H=H, W=W, C_lat=C_lat, C_hid=C_hid, C_out=C_out)

    # Interleave the 4 parity classes into NCHW (tiny final reshuffle of the output image).
    out = out4.reshape(N, 2, 2, C_out, H, W)
    out = jnp.transpose(out, (0, 3, 4, 1, 5, 2)).reshape(N, C_out, 2 * H, 2 * W)
    return out


if __name__ == "__main__":
    key = jax.random.PRNGKey(0)
    k_lat, k_params = jax.random.split(key)

    N, latent_dim, H, W = 2, 4, 16, 16
    hidden, out_ch = 32, 3

    lat = jax.random.normal(k_lat, (N, latent_dim, H, W), jnp.float32)   # NCHW like torch
    params = init_params(k_params, latent_dim=latent_dim, hidden=hidden, out_ch=out_ch)

    out = jax.jit(recon_forward)(params, lat)
    out = jax.block_until_ready(out)

    assert out.shape == (N, out_ch, 2 * H, 2 * W), out.shape
    assert bool(jnp.all(jnp.isfinite(out)))
    print("KERNEL_OK")
</pallas_src>

<mosaic_0001>
module attributes {stable_mosaic.version = 11 : i64} {
  func.func @_recon_fused_kernel(%arg0: i32, %arg1: memref<1x4x256xbf16, #tpu.memory_space<vmem>>, %arg2: memref<4x4xbf16, #tpu.memory_space<vmem>>, %arg3: memref<4x1xf32, #tpu.memory_space<vmem>>, %arg4: memref<9x32x4xbf16, #tpu.memory_space<vmem>>, %arg5: memref<32x1xf32, #tpu.memory_space<vmem>>, %arg6: memref<16x3x32xbf16, #tpu.memory_space<vmem>>, %arg7: memref<3x1xf32, #tpu.memory_space<vmem>>, %arg8: memref<3x1x256xbf16, #tpu.memory_space<vmem>>, %arg9: memref<1x4x3x256xf32, #tpu.memory_space<vmem>>, %arg10: memref<4x290xbf16, #tpu.memory_space<vmem>>, %arg11: memref<32x290xbf16, #tpu.memory_space<vmem>>) attributes {dimension_semantics = [#tpu.dimension_semantics<parallel>], iteration_bounds = array<i64: 2>, scalar_prefetch = 0 : i64, scratch_operands = 2 : i64, tpu.core_type = #tpu.core_type<tc>, window_params = [{transform_indices = @transform_0, window_bounds = array<i64: 1, 4, 256>}, {pipeline_mode = #tpu.pipeline_mode<synchronous>, transform_indices = @transform_1, window_bounds = array<i64: 4, 4>}, {pipeline_mode = #tpu.pipeline_mode<synchronous>, transform_indices = @transform_2, window_bounds = array<i64: 4, 1>}, {pipeline_mode = #tpu.pipeline_mode<synchronous>, transform_indices = @transform_3, window_bounds = array<i64: 9, 32, 4>}, {pipeline_mode = #tpu.pipeline_mode<synchronous>, transform_indices = @transform_4, window_bounds = array<i64: 32, 1>}, {pipeline_mode = #tpu.pipeline_mode<synchronous>, transform_indices = @transform_5, window_bounds = array<i64: 16, 3, 32>}, {pipeline_mode = #tpu.pipeline_mode<synchronous>, transform_indices = @transform_6, window_bounds = array<i64: 3, 1>}, {pipeline_mode = #tpu.pipeline_mode<synchronous>, transform_indices = @transform_7, window_bounds = array<i64: 3, 1, 256>}, {transform_indices = @transform_8, window_bounds = array<i64: 1, 4, 3, 256>}]} {
    %c0 = arith.constant 0 : index
    %c0_0 = arith.constant 0 : index
    %c0_1 = arith.constant 0 : index
    %0 = vector.load %arg8[%c0, %c0_0, %c0_1] : memref<3x1x256xbf16, #tpu.memory_space<vmem>>, vector<3x1x256xbf16>
    %c0_2 = arith.constant 0 : index
    %c0_3 = arith.constant 0 : index
    %c0_4 = arith.constant 0 : index
    %1 = vector.load %arg1[%c0_2, %c0_3, %c0_4] : memref<1x4x256xbf16, #tpu.memory_space<vmem>>, vector<1x4x256xbf16>
    %2 = vector.shape_cast %1 : vector<1x4x256xbf16> to vector<4x256xbf16>
    %c0_5 = arith.constant 0 : index
    %c0_6 = arith.constant 0 : index
    %3 = vector.load %arg2[%c0_5, %c0_6] : memref<4x4xbf16, #tpu.memory_space<vmem>>, vector<4x4xbf16>
    %cst = arith.constant dense<0.000000e+00> : vector<4x256xf32>
    %4 = tpu.matmul %3, %2, %cst {dimension_numbers = #tpu.dot_dimension_numbers<[1], [0], [0], [1], [0, 0, 1, 1], [], []>} : vector<4x4xbf16>, vector<4x256xbf16>, vector<4x256xf32> -> vector<4x256xf32>
    %c0_7 = arith.constant 0 : index
    %c0_8 = arith.constant 0 : index
    %5 = vector.load %arg3[%c0_7, %c0_8] : memref<4x1xf32, #tpu.memory_space<vmem>>, vector<4x1xf32>
    %6 = vector.broadcast %5 : vector<4x1xf32> to vector<4x256xf32>
    %7 = arith.addf %4, %6 : vector<4x256xf32>
    %8 = arith.truncf %7 : vector<4x256xf32> to vector<4x256xbf16>
    %cst_9 = arith.constant 0.000000e+00 : bf16
    %9 = vector.broadcast %cst_9 : bf16 to vector<4x290xbf16>
    %c0_10 = arith.constant 0 : index
    %c0_11 = arith.constant 0 : index
    %10 = vector.load %arg10[%c0_10, %c0_11] : memref<4x290xbf16, #tpu.memory_space<vmem>>, vector<4x290xbf16>
    tpu.vector_store %arg10[%c0_10, %c0_11], %9 {strides = array<i32>} : memref<4x290xbf16, #tpu.memory_space<vmem>>, vector<4x290xbf16>,
    %c0_12 = arith.constant 0 : index
    %c17 = arith.constant 17 : index
    %11 = vector.load %arg10[%c0_12, %c17] : memref<4x290xbf16, #tpu.memory_space<vmem>>, vector<4x256xbf16>
    tpu.vector_store %arg10[%c0_12, %c17], %8 {strides = array<i32>} : memref<4x290xbf16, #tpu.memory_space<vmem>>, vector<4x256xbf16>,
    %cst_13 = arith.constant 0.000000e+00 : f32
    %12 = vector.broadcast %cst_13 : f32 to vector<32x256xf32>
    %c0_14 = arith.constant 0 : index
    %c0_15 = arith.constant 0 : index
    %c0_16 = arith.constant 0 : index
    %13 = vector.load %arg4[%c0_14, %c0_15, %c0_16] : memref<9x32x4xbf16, #tpu.memory_space<vmem>>, vector<1x32x4xbf16>
    %14 = vector.shape_cast %13 : vector<1x32x4xbf16> to vector<32x4xbf16>
    %c0_17 = arith.constant 0 : index
    %c0_18 = arith.constant 0 : index
    %15 = vector.load %arg10[%c0_17, %c0_18] : memref<4x290xbf16, #tpu.memory_space<vmem>>, vector<4x256xbf16>
    %16 = vector.extract_strided_slice %0 {offsets = [0, 0, 0], sizes = [1, 1, 256], strides = [1, 1, 1]} : vector<3x1x256xbf16> to vector<1x1x256xbf16>
    %17 = vector.shape_cast %16 : vector<1x1x256xbf16> to vector<1x256xbf16>
    %18 = vector.broadcast %17 : vector<1x256xbf16> to vector<4x256xbf16>
    %19 = arith.mulf %15, %18 : vector<4x256xbf16>
    %cst_19 = arith.constant dense<0.000000e+00> : vector<32x256xf32>
    %20 = tpu.matmul %14, %19, %cst_19 {dimension_numbers = #tpu.dot_dimension_numbers<[1], [0], [0], [1], [0, 0, 1, 1], [], []>} : vector<32x4xbf16>, vector<4x256xbf16>, vector<32x256xf32> -> vector<32x256xf32>
    %21 = arith.addf %12, %20 : vector<32x256xf32>
    %c1 = arith.constant 1 : index
    %c0_20 = arith.constant 0 : index
    %c0_21 = arith.constant 0 : index
    %22 = vector.load %arg4[%c1, %c0_20, %c0_21] : memref<9x32x4xbf16, #tpu.memory_space<vmem>>, vector<1x32x4xbf16>
    %23 = vector.shape_cast %22 : vector<1x32x4xbf16> to vector<32x4xbf16>
    %c0_22 = arith.constant 0 : index
    %c1_23 = arith.constant 1 : index
    %24 = vector.load %arg10[%c0_22, %c1_23] : memref<4x290xbf16, #tpu.memory_space<vmem>>, vector<4x256xbf16>
    %cst_24 = arith.constant dense<0.000000e+00> : vector<32x256xf32>
    %25 = tpu.matmul %23, %24, %cst_24 {dimension_numbers = #tpu.dot_dimension_numbers<[1], [0], [0], [1], [0, 0, 1, 1], [], []>} : vector<32x4xbf16>, vector<4x256xbf16>, vector<32x256xf32> -> vector<32x256xf32>
    %26 = arith.addf %21, %25 : vector<32x256xf32>
    %c2 = arith.constant 2 : index
    %c0_25 = arith.constant 0 : index
    %c0_26 = arith.constant 0 : index
    %27 = vector.load %arg4[%c2, %c0_25, %c0_26] : memref<9x32x4xbf16, #tpu.memory_space<vmem>>, vector<1x32x4xbf16>
    %28 = vector.shape_cast %27 : vector<1x32x4xbf16> to vector<32x4xbf16>
    %c0_27 = arith.constant 0 : index
    %c2_28 = arith.constant 2 : index
    %29 = vector.load %arg10[%c0_27, %c2_28] : memref<4x290xbf16, #tpu.memory_space<vmem>>, vector<4x256xbf16>
    %30 = vector.extract_strided_slice %0 {offsets = [2, 0, 0], sizes = [1, 1, 256], strides = [1, 1, 1]} : vector<3x1x256xbf16> to vector<1x1x256xbf16>
    %31 = vector.shape_cast %30 : vector<1x1x256xbf16> to vector<1x256xbf16>
    %32 = vector.broadcast %31 : vector<1x256xbf16> to vector<4x256xbf16>
    %33 = arith.mulf %29, %32 : vector<4x256xbf16>
    %cst_29 = arith.constant dense<0.000000e+00> : vector<32x256xf32>
    %34 = tpu.matmul %28, %33, %cst_29 {dimension_numbers = #tpu.dot_dimension_numbers<[1], [0], [0], [1], [0, 0, 1, 1], [], []>} : vector<32x4xbf16>, vector<4x256xbf16>, vector<32x256xf32> -> vector<32x256xf32>
    %35 = arith.addf %26, %34 : vector<32x256xf32>
    %c3 = arith.constant 3 : index
    %c0_30 = arith.constant 0 : index
    %c0_31 = arith.constant 0 : index
    %36 = vector.load %arg4[%c3, %c0_30, %c0_31] : memref<9x32x4xbf16, #tpu.memory_space<vmem>>, vector<1x32x4xbf16>
    %37 = vector.shape_cast %36 : vector<1x32x4xbf16> to vector<32x4xbf16>
    %c0_32 = arith.constant 0 : index
    %c16 = arith.constant 16 : index
    %38 = vector.load %arg10[%c0_32, %c16] : memref<4x290xbf16, #tpu.memory_space<vmem>>, vector<4x256xbf16>
    %39 = vector.extract_strided_slice %0 {offsets = [0, 0, 0], sizes = [1, 1, 256], strides = [1, 1, 1]} : vector<3x1x256xbf16> to vector<1x1x256xbf16>
    %40 = vector.shape_cast %39 : vector<1x1x256xbf16> to vector<1x256xbf16>
    %41 = vector.broadcast %40 : vector<1x256xbf16> to vector<4x256xbf16>
    %42 = arith.mulf %38, %41 : vector<4x256xbf16>
    %cst_33 = arith.constant dense<0.000000e+00> : vector<32x256xf32>
    %43 = tpu.matmul %37, %42, %cst_33 {dimension_numbers = #tpu.dot_dimension_numbers<[1], [0], [0], [1], [0, 0, 1, 1], [], []>} : vector<32x4xbf16>, vector<4x256xbf16>, vector<32x256xf32> -> vector<32x256xf32>
    %44 = arith.addf %35, %43 : vector<32x256xf32>
    %c4 = arith.constant 4 : index
    %c0_34 = arith.constant 0 : index
    %c0_35 = arith.constant 0 : index
    %45 = vector.load %arg4[%c4, %c0_34, %c0_35] : memref<9x32x4xbf16, #tpu.memory_space<vmem>>, vector<1x32x4xbf16>
    %46 = vector.shape_cast %45 : vector<1x32x4xbf16> to vector<32x4xbf16>
    %c0_36 = arith.constant 0 : index
    %c17_37 = arith.constant 17 : index
    %47 = vector.load %arg10[%c0_36, %c17_37] : memref<4x290xbf16, #tpu.memory_space<vmem>>, vector<4x256xbf16>
    %cst_38 = arith.constant dense<0.000000e+00> : vector<32x256xf32>
    %48 = tpu.matmul %46, %47, %cst_38 {dimension_numbers = #tpu.dot_dimension_numbers<[1], [0], [0], [1], [0, 0, 1, 1], [], []>} : vector<32x4xbf16>, vector<4x256xbf16>, vector<32x256xf32> -> vector<32x256xf32>
    %49 = arith.addf %44, %48 : vector<32x256xf32>
    %c5 = arith.constant 5 : index
    %c0_39 = arith.constant 0 : index
    %c0_40 = arith.constant 0 : index
    %50 = vector.load %arg4[%c5, %c0_39, %c0_40] : memref<9x32x4xbf16, #tpu.memory_space<vmem>>, vector<1x32x4xbf16>
    %51 = vector.shape_cast %50 : vector<1x32x4xbf16> to vector<32x4xbf16>
    %c0_41 = arith.constant 0 : index
    %c18 = arith.constant 18 : index
    %52 = vector.load %arg10[%c0_41, %c18] : memref<4x290xbf16, #tpu.memory_space<vmem>>, vector<4x256xbf16>
    %53 = vector.extract_strided_slice %0 {offsets = [2, 0, 0], sizes = [1, 1, 256], strides = [1, 1, 1]} : vector<3x1x256xbf16> to vector<1x1x256xbf16>
    %54 = vector.shape_cast %53 : vector<1x1x256xbf16> to vector<1x256xbf16>
    %55 = vector.broadcast %54 : vector<1x256xbf16> to vector<4x256xbf16>
    %56 = arith.mulf %52, %55 : vector<4x256xbf16>
    %cst_42 = arith.constant dense<0.000000e+00> : vector<32x256xf32>
    %57 = tpu.matmul %51, %56, %cst_42 {dimension_numbers = #tpu.dot_dimension_numbers<[1], [0], [0], [1], [0, 0, 1, 1], [], []>} : vector<32x4xbf16>, vector<4x256xbf16>, vector<32x256xf32> -> vector<32x256xf32>
    %58 = arith.addf %49, %57 : vector<32x256xf32>
    %c6 = arith.constant 6 : index
    %c0_43 = arith.constant 0 : index
    %c0_44 = arith.constant 0 : index
    %59 = vector.load %arg4[%c6, %c0_43, %c0_44] : memref<9x32x4xbf16, #tpu.memory_space<vmem>>, vector<1x32x4xbf16>
    %60 = vector.shape_cast %59 : vector<1x32x4xbf16> to vector<32x4xbf16>
    %c0_45 = arith.constant 0 : index
    %c32 = arith.constant 32 : index
    %61 = vector.load %arg10[%c0_45, %c32] : memref<4x290xbf16, #tpu.memory_space<vmem>>, vector<4x256xbf16>
    %62 = vector.extract_strided_slice %0 {offsets = [0, 0, 0], sizes = [1, 1, 256], strides = [1, 1, 1]} : vector<3x1x256xbf16> to vector<1x1x256xbf16>
    %63 = vector.shape_cast %62 : vector<1x1x256xbf16> to vector<1x256xbf16>
    %64 = vector.broadcast %63 : vector<1x256xbf16> to vector<4x256xbf16>
    %65 = arith.mulf %61, %64 : vector<4x256xbf16>
    %cst_46 = arith.constant dense<0.000000e+00> : vector<32x256xf32>
    %66 = tpu.matmul %60, %65, %cst_46 {dimension_numbers = #tpu.dot_dimension_numbers<[1], [0], [0], [1], [0, 0, 1, 1], [], []>} : vector<32x4xbf16>, vector<4x256xbf16>, vector<32x256xf32> -> vector<32x256xf32>
    %67 = arith.addf %58, %66 : vector<32x256xf32>
    %c7 = arith.constant 7 : index
    %c0_47 = arith.constant 0 : index
    %c0_48 = arith.constant 0 : index
    %68 = vector.load %arg4[%c7, %c0_47, %c0_48] : memref<9x32x4xbf16, #tpu.memory_space<vmem>>, vector<1x32x4xbf16>
    %69 = vector.shape_cast %68 : vector<1x32x4xbf16> to vector<32x4xbf16>
    %c0_49 = arith.constant 0 : index
    %c33 = arith.constant 33 : index
    %70 = vector.load %arg10[%c0_49, %c33] : memref<4x290xbf16, #tpu.memory_space<vmem>>, vector<4x256xbf16>
    %cst_50 = arith.constant dense<0.000000e+00> : vector<32x256xf32>
    %71 = tpu.matmul %69, %70, %cst_50 {dimension_numbers = #tpu.dot_dimension_numbers<[1], [0], [0], [1], [0, 0, 1, 1], [], []>} : vector<32x4xbf16>, vector<4x256xbf16>, vector<32x256xf32> -> vector<32x256xf32>
    %72 = arith.addf %67, %71 : vector<32x256xf32>
    %c8 = arith.constant 8 : index
    %c0_51 = arith.constant 0 : index
    %c0_52 = arith.constant 0 : index
    %73 = vector.load %arg4[%c8, %c0_51, %c0_52] : memref<9x32x4xbf16, #tpu.memory_space<vmem>>, vector<1x32x4xbf16>
    %74 = vector.shape_cast %73 : vector<1x32x4xbf16> to vector<32x4xbf16>
    %c0_53 = arith.constant 0 : index
    %c34 = arith.constant 34 : index
    %75 = vector.load %arg10[%c0_53, %c34] : memref<4x290xbf16, #tpu.memory_space<vmem>>, vector<4x256xbf16>
    %76 = vector.extract_strided_slice %0 {offsets = [2, 0, 0], sizes = [1, 1, 256], strides = [1, 1, 1]} : vector<3x1x256xbf16> to vector<1x1x256xbf16>
    %77 = vector.shape_cast %76 : vector<1x1x256xbf16> to vector<1x256xbf16>
    %78 = vector.broadcast %77 : vector<1x256xbf16> to vector<4x256xbf16>
    %79 = arith.mulf %75, %78 : vector<4x256xbf16>
    %cst_54 = arith.constant dense<0.000000e+00> : vector<32x256xf32>
    %80 = tpu.matmul %74, %79, %cst_54 {dimension_numbers = #tpu.dot_dimension_numbers<[1], [0], [0], [1], [0, 0, 1, 1], [], []>} : vector<32x4xbf16>, vector<4x256xbf16>, vector<32x256xf32> -> vector<32x256xf32>
    %81 = arith.addf %72, %80 : vector<32x256xf32>
    %c0_55 = arith.constant 0 : index
    %c0_56 = arith.constant 0 : index
    %82 = vector.load %arg5[%c0_55, %c0_56] : memref<32x1xf32, #tpu.memory_space<vmem>>, vector<32x1xf32>
    %83 = vector.broadcast %82 : vector<32x1xf32> to vector<32x256xf32>
    %84 = arith.addf %81, %83 : vector<32x256xf32>
    %85 = arith.negf %84 : vector<32x256xf32>
    %86 = math.exp %85 : vector<32x256xf32>
    %cst_57 = arith.constant 1.000000e+00 : f32
    %87 = vector.broadcast %cst_57 : f32 to vector<32x256xf32>
    %88 = arith.addf %87, %86 : vector<32x256xf32>
    %89 = arith.divf %87, %88 : vector<32x256xf32>
    %90 = arith.mulf %84, %89 : vector<32x256xf32>
    %91 = arith.truncf %90 : vector<32x256xf32> to vector<32x256xbf16>
    %cst_58 = arith.constant 0.000000e+00 : bf16
    %92 = vector.broadcast %cst_58 : bf16 to vector<32x290xbf16>
    %c0_59 = arith.constant 0 : index
    %c0_60 = arith.constant 0 : index
    %93 = vector.load %arg11[%c0_59, %c0_60] : memref<32x290xbf16, #tpu.memory_space<vmem>>, vector<32x290xbf16>
    tpu.vector_store %arg11[%c0_59, %c0_60], %92 {strides = array<i32>} : memref<32x290xbf16, #tpu.memory_space<vmem>>, vector<32x290xbf16>,
    %c0_61 = arith.constant 0 : index
    %c17_62 = arith.constant 17 : index
    %94 = vector.load %arg11[%c0_61, %c17_62] : memref<32x290xbf16, #tpu.memory_space<vmem>>, vector<32x256xbf16>
    tpu.vector_store %arg11[%c0_61, %c17_62], %91 {strides = array<i32>} : memref<32x290xbf16, #tpu.memory_space<vmem>>, vector<32x256xbf16>,
    %cst_63 = arith.constant 0.000000e+00 : f32
    %95 = vector.broadcast %cst_63 : f32 to vector<3x256xf32>
    %c0_64 = arith.constant 0 : index
    %c0_65 = arith.constant 0 : index
    %c0_66 = arith.constant 0 : index
    %96 = vector.load %arg6[%c0_64, %c0_65, %c0_66] : memref<16x3x32xbf16, #tpu.memory_space<vmem>>, vector<1x3x32xbf16>
    %97 = vector.shape_cast %96 : vector<1x3x32xbf16> to vector<3x32xbf16>
    %c0_67 = arith.constant 0 : index
    %c0_68 = arith.constant 0 : index
    %98 = vector.load %arg11[%c0_67, %c0_68] : memref<32x290xbf16, #tpu.memory_space<vmem>>, vector<32x256xbf16>
    %99 = vector.extract_strided_slice %0 {offsets = [0, 0, 0], sizes = [1, 1, 256], strides = [1, 1, 1]} : vector<3x1x256xbf16> to vector<1x1x256xbf16>
    %100 = vector.shape_cast %99 : vector<1x1x256xbf16> to vector<1x256xbf16>
    %101 = vector.broadcast %100 : vector<1x256xbf16> to vector<32x256xbf16>
    %102 = arith.mulf %98, %101 : vector<32x256xbf16>
    %cst_69 = arith.constant dense<0.000000e+00> : vector<3x256xf32>
    %103 = tpu.matmul %97, %102, %cst_69 {dimension_numbers = #tpu.dot_dimension_numbers<[1], [0], [0], [1], [0, 0, 1, 1], [], []>} : vector<3x32xbf16>, vector<32x256xbf16>, vector<3x256xf32> -> vector<3x256xf32>
    %104 = arith.addf %95, %103 : vector<3x256xf32>
    %c1_70 = arith.constant 1 : index
    %c0_71 = arith.constant 0 : index
    %c0_72 = arith.constant 0 : index
    %105 = vector.load %arg6[%c1_70, %c0_71, %c0_72] : memref<16x3x32xbf16, #tpu.memory_space<vmem>>, vector<1x3x32xbf16>
    %106 = vector.shape_cast %105 : vector<1x3x32xbf16> to vector<3x32xbf16>
    %c0_73 = arith.constant 0 : index
    %c1_74 = arith.constant 1 : index
    %107 = vector.load %arg11[%c0_73, %c1_74] : memref<32x290xbf16, #tpu.memory_space<vmem>>, vector<32x256xbf16>
    %cst_75 = arith.constant dense<0.000000e+00> : vector<3x256xf32>
    %108 = tpu.matmul %106, %107, %cst_75 {dimension_numbers = #tpu.dot_dimension_numbers<[1], [0], [0], [1], [0, 0, 1, 1], [], []>} : vector<3x32xbf16>, vector<32x256xbf16>, vector<3x256xf32> -> vector<3x256xf32>
    %109 = arith.addf %104, %108 : vector<3x256xf32>
    %c2_76 = arith.constant 2 : index
    %c0_77 = arith.constant 0 : index
    %c0_78 = arith.constant 0 : index
    %110 = vector.load %arg6[%c2_76, %c0_77, %c0_78] : memref<16x3x32xbf16, #tpu.memory_space<vmem>>, vector<1x3x32xbf16>
    %111 = vector.shape_cast %110 : vector<1x3x32xbf16> to vector<3x32xbf16>
    %c0_79 = arith.constant 0 : index
    %c16_80 = arith.constant 16 : index
    %112 = vector.load %arg11[%c0_79, %c16_80] : memref<32x290xbf16, #tpu.memory_space<vmem>>, vector<32x256xbf16>
    %113 = vector.extract_strided_slice %0 {offsets = [0, 0, 0], sizes = [1, 1, 256], strides = [1, 1, 1]} : vector<3x1x256xbf16> to vector<1x1x256xbf16>
    %114 = vector.shape_cast %113 : vector<1x1x256xbf16> to vector<1x256xbf16>
    %115 = vector.broadcast %114 : vector<1x256xbf16> to vector<32x256xbf16>
    %116 = arith.mulf %112, %115 : vector<32x256xbf16>
    %cst_81 = arith.constant dense<0.000000e+00> : vector<3x256xf32>
    %117 = tpu.matmul %111, %116, %cst_81 {dimension_numbers = #tpu.dot_dimension_numbers<[1], [0], [0], [1], [0, 0, 1, 1], [], []>} : vector<3x32xbf16>, vector<32x256xbf16>, vector<3x256xf32> -> vector<3x256xf32>
    %118 = arith.addf %109, %117 : vector<3x256xf32>
    %c3_82 = arith.constant 3 : index
    %c0_83 = arith.constant 0 : index
    %c0_84 = arith.constant 0 : index
    %119 = vector.load %arg6[%c3_82, %c0_83, %c0_84] : memref<16x3x32xbf16, #tpu.memory_space<vmem>>, vector<1x3x32xbf16>
    %120 = vector.shape_cast %119 : vector<1x3x32xbf16> to vector<3x32xbf16>
    %c0_85 = arith.constant 0 : index
    %c17_86 = arith.constant 17 : index
    %121 = vector.load %arg11[%c0_85, %c17_86] : memref<32x290xbf16, #tpu.memory_space<vmem>>, vector<32x256xbf16>
    %cst_87 = arith.constant dense<0.000000e+00> : vector<3x256xf32>
    %122 = tpu.matmul %120, %121, %cst_87 {dimension_numbers = #tpu.dot_dimension_numbers<[1], [0], [0], [1], [0, 0, 1, 1], [], []>} : vector<3x32xbf16>, vector<32x256xbf16>, vector<3x256xf32> -> vector<3x256xf32>
    %123 = arith.addf %118, %122 : vector<3x256xf32>
    %c0_88 = arith.constant 0 : index
    %c0_89 = arith.constant 0 : index
    %124 = vector.load %arg7[%c0_88, %c0_89] : memref<3x1xf32, #tpu.memory_space<vmem>>, vector<3x1xf32>
    %125 = vector.broadcast %124 : vector<3x1xf32> to vector<3x256xf32>
    %126 = arith.addf %123, %125 : vector<3x256xf32>
    %c0_90 = arith.constant 0 : index
    %c0_91 = arith.constant 0 : index
    %c0_92 = arith.constant 0 : index
    %c0_93 = arith.constant 0 : index
    %127 = vector.load %arg9[%c0_90, %c0_91, %c0_92, %c0_93] : memref<1x4x3x256xf32, #tpu.memory_space<vmem>>, vector<1x1x3x256xf32>
    %128 = vector.shape_cast %127 : vector<1x1x3x256xf32> to vector<3x256xf32>
    %129 = vector.shape_cast %126 : vector<3x256xf32> to vector<1x1x3x256xf32>
    tpu.vector_store %arg9[%c0_90, %c0_91, %c0_92, %c0_93], %129 {strides = array<i32>} : memref<1x4x3x256xf32, #tpu.memory_space<vmem>>, vector<1x1x3x256xf32>,
    %cst_94 = arith.constant 0.000000e+00 : f32
    %130 = vector.broadcast %cst_94 : f32 to vector<3x256xf32>
    %c4_95 = arith.constant 4 : index
    %c0_96 = arith.constant 0 : index
    %c0_97 = arith.constant 0 : index
    %131 = vector.load %arg6[%c4_95, %c0_96, %c0_97] : memref<16x3x32xbf16, #tpu.memory_space<vmem>>, vector<1x3x32xbf16>
    %132 = vector.shape_cast %131 : vector<1x3x32xbf16> to vector<3x32xbf16>
    %c0_98 = arith.constant 0 : index
    %c1_99 = arith.constant 1 : index
    %133 = vector.load %arg11[%c0_98, %c1_99] : memref<32x290xbf16, #tpu.memory_space<vmem>>, vector<32x256xbf16>
    %cst_100 = arith.constant dense<0.000000e+00> : vector<3x256xf32>
    %134 = tpu.matmul %132, %133, %cst_100 {dimension_numbers = #tpu.dot_dimension_numbers<[1], [0], [0], [1], [0, 0, 1, 1], [], []>} : vector<3x32xbf16>, vector<32x256xbf16>, vector<3x256xf32> -> vector<3x256xf32>
    %135 = arith.addf %130, %134 : vector<3x256xf32>
    %c5_101 = arith.constant 5 : index
    %c0_102 = arith.constant 0 : index
    %c0_103 = arith.constant 0 : index
    %136 = vector.load %arg6[%c5_101, %c0_102, %c0_103] : memref<16x3x32xbf16, #tpu.memory_space<vmem>>, vector<1x3x32xbf16>
    %137 = vector.shape_cast %136 : vector<1x3x32xbf16> to vector<3x32xbf16>
    %c0_104 = arith.constant 0 : index
    %c2_105 = arith.constant 2 : index
    %138 = vector.load %arg11[%c0_104, %c2_105] : memref<32x290xbf16, #tpu.memory_space<vmem>>, vector<32x256xbf16>
    %139 = vector.extract_strided_slice %0 {offsets = [2, 0, 0], sizes = [1, 1, 256], strides = [1, 1, 1]} : vector<3x1x256xbf16> to vector<1x1x256xbf16>
    %140 = vector.shape_cast %139 : vector<1x1x256xbf16> to vector<1x256xbf16>
    %141 = vector.broadcast %140 : vector<1x256xbf16> to vector<32x256xbf16>
    %142 = arith.mulf %138, %141 : vector<32x256xbf16>
    %cst_106 = arith.constant dense<0.000000e+00> : vector<3x256xf32>
    %143 = tpu.matmul %137, %142, %cst_106 {dimension_numbers = #tpu.dot_dimension_numbers<[1], [0], [0], [1], [0, 0, 1, 1], [], []>} : vector<3x32xbf16>, vector<32x256xbf16>, vector<3x256xf32> -> vector<3x256xf32>
    %144 = arith.addf %135, %143 : vector<3x256xf32>
    %c6_107 = arith.constant 6 : index
    %c0_108 = arith.constant 0 : index
    %c0_109 = arith.constant 0 : index
    %145 = vector.load %arg6[%c6_107, %c0_108, %c0_109] : memref<16x3x32xbf16, #tpu.memory_space<vmem>>, vector<1x3x32xbf16>
    %146 = vector.shape_cast %145 : vector<1x3x32xbf16> to vector<3x32xbf16>
    %c0_110 = arith.constant 0 : index
    %c17_111 = arith.constant 17 : index
    %147 = vector.load %arg11[%c0_110, %c17_111] : memref<32x290xbf16, #tpu.memory_space<vmem>>, vector<32x256xbf16>
    %cst_112 = arith.constant dense<0.000000e+00> : vector<3x256xf32>
    %148 = tpu.matmul %146, %147, %cst_112 {dimension_numbers = #tpu.dot_dimension_numbers<[1], [0], [0], [1], [0, 0, 1, 1], [], []>} : vector<3x32xbf16>, vector<32x256xbf16>, vector<3x256xf32> -> vector<3x256xf32>
    %149 = arith.addf %144, %148 : vector<3x256xf32>
    %c7_113 = arith.constant 7 : index
    %c0_114 = arith.constant 0 : index
    %c0_115 = arith.constant 0 : index
    %150 = vector.load %arg6[%c7_113, %c0_114, %c0_115] : memref<16x3x32xbf16, #tpu.memory_space<vmem>>, vector<1x3x32xbf16>
    %151 = vector.shape_cast %150 : vector<1x3x32xbf16> to vector<3x32xbf16>
    %c0_116 = arith.constant 0 : index
    %c18_117 = arith.constant 18 : index
    %152 = vector.load %arg11[%c0_116, %c18_117] : memref<32x290xbf16, #tpu.memory_space<vmem>>, vector<32x256xbf16>
    %153 = vector.extract_strided_slice %0 {offsets = [2, 0, 0], sizes = [1, 1, 256], strides = [1, 1, 1]} : vector<3x1x256xbf16> to vector<1x1x256xbf16>
    %154 = vector.shape_cast %153 : vector<1x1x256xbf16> to vector<1x256xbf16>
    %155 = vector.broadcast %154 : vector<1x256xbf16> to vector<32x256xbf16>
    %156 = arith.mulf %152, %155 : vector<32x256xbf16>
    %cst_118 = arith.constant dense<0.000000e+00> : vector<3x256xf32>
    %157 = tpu.matmul %151, %156, %cst_118 {dimension_numbers = #tpu.dot_dimension_numbers<[1], [0], [0], [1], [0, 0, 1, 1], [], []>} : vector<3x32xbf16>, vector<32x256xbf16>, vector<3x256xf32> -> vector<3x256xf32>
    %158 = arith.addf %149, %157 : vector<3x256xf32>
    %c0_119 = arith.constant 0 : index
    %c0_120 = arith.constant 0 : index
    %159 = vector.load %arg7[%c0_119, %c0_120] : memref<3x1xf32, #tpu.memory_space<vmem>>, vector<3x1xf32>
    %160 = vector.broadcast %159 : vector<3x1xf32> to vector<3x256xf32>
    %161 = arith.addf %158, %160 : vector<3x256xf32>
    %c0_121 = arith.constant 0 : index
    %c1_122 = arith.constant 1 : index
    %c0_123 = arith.constant 0 : index
    %c0_124 = arith.constant 0 : index
    %162 = vector.load %arg9[%c0_121, %c1_122, %c0_123, %c0_124] : memref<1x4x3x256xf32, #tpu.memory_space<vmem>>, vector<1x1x3x256xf32>
    %163 = vector.shape_cast %162 : vector<1x1x3x256xf32> to vector<3x256xf32>
    %164 = vector.shape_cast %161 : vector<3x256xf32> to vector<1x1x3x256xf32>
    tpu.vector_store %arg9[%c0_121, %c1_122, %c0_123, %c0_124], %164 {strides = array<i32>} : memref<1x4x3x256xf32, #tpu.memory_space<vmem>>, vector<1x1x3x256xf32>,
    %cst_125 = arith.constant 0.000000e+00 : f32
    %165 = vector.broadcast %cst_125 : f32 to vector<3x256xf32>
    %c8_126 = arith.constant 8 : index
    %c0_127 = arith.constant 0 : index
    %c0_128 = arith.constant 0 : index
    %166 = vector.load %arg6[%c8_126, %c0_127, %c0_128] : memref<16x3x32xbf16, #tpu.memory_space<vmem>>, vector<1x3x32xbf16>
    %167 = vector.shape_cast %166 : vector<1x3x32xbf16> to vector<3x32xbf16>
    %c0_129 = arith.constant 0 : index
    %c16_130 = arith.constant 16 : index
    %168 = vector.load %arg11[%c0_129, %c16_130] : memref<32x290xbf16, #tpu.memory_space<vmem>>, vector<32x256xbf16>
    %169 = vector.extract_strided_slice %0 {offsets = [0, 0, 0], sizes = [1, 1, 256], strides = [1, 1, 1]} : vector<3x1x256xbf16> to vector<1x1x256xbf16>
    %170 = vector.shape_cast %169 : vector<1x1x256xbf16> to vector<1x256xbf16>
    %171 = vector.broadcast %170 : vector<1x256xbf16> to vector<32x256xbf16>
    %172 = arith.mulf %168, %171 : vector<32x256xbf16>
    %cst_131 = arith.constant dense<0.000000e+00> : vector<3x256xf32>
    %173 = tpu.matmul %167, %172, %cst_131 {dimension_numbers = #tpu.dot_dimension_numbers<[1], [0], [0], [1], [0, 0, 1, 1], [], []>} : vector<3x32xbf16>, vector<32x256xbf16>, vector<3x256xf32> -> vector<3x256xf32>
    %174 = arith.addf %165, %173 : vector<3x256xf32>
    %c9 = arith.constant 9 : index
    %c0_132 = arith.constant 0 : index
    %c0_133 = arith.constant 0 : index
    %175 = vector.load %arg6[%c9, %c0_132, %c0_133] : memref<16x3x32xbf16, #tpu.memory_space<vmem>>, vector<1x3x32xbf16>
    %176 = vector.shape_cast %175 : vector<1x3x32xbf16> to vector<3x32xbf16>
    %c0_134 = arith.constant 0 : index
    %c17_135 = arith.constant 17 : index
    %177 = vector.load %arg11[%c0_134, %c17_135] : memref<32x290xbf16, #tpu.memory_space<vmem>>, vector<32x256xbf16>
    %cst_136 = arith.constant dense<0.000000e+00> : vector<3x256xf32>
    %178 = tpu.matmul %176, %177, %cst_136 {dimension_numbers = #tpu.dot_dimension_numbers<[1], [0], [0], [1], [0, 0, 1, 1], [], []>} : vector<3x32xbf16>, vector<32x256xbf16>, vector<3x256xf32> -> vector<3x256xf32>
    %179 = arith.addf %174, %178 : vector<3x256xf32>
    %c10 = arith.constant 10 : index
    %c0_137 = arith.constant 0 : index
    %c0_138 = arith.constant 0 : index
    %180 = vector.load %arg6[%c10, %c0_137, %c0_138] : memref<16x3x32xbf16, #tpu.memory_space<vmem>>, vector<1x3x32xbf16>
    %181 = vector.shape_cast %180 : vector<1x3x32xbf16> to vector<3x32xbf16>
    %c0_139 = arith.constant 0 : index
    %c32_140 = arith.constant 32 : index
    %182 = vector.load %arg11[%c0_139, %c32_140] : memref<32x290xbf16, #tpu.memory_space<vmem>>, vector<32x256xbf16>
    %183 = vector.extract_strided_slice %0 {offsets = [0, 0, 0], sizes = [1, 1, 256], strides = [1, 1, 1]} : vector<3x1x256xbf16> to vector<1x1x256xbf16>
    %184 = vector.shape_cast %183 : vector<1x1x256xbf16> to vector<1x256xbf16>
    %185 = vector.broadcast %184 : vector<1x256xbf16> to vector<32x256xbf16>
    %186 = arith.mulf %182, %185 : vector<32x256xbf16>
    %cst_141 = arith.constant dense<0.000000e+00> : vector<3x256xf32>
    %187 = tpu.matmul %181, %186, %cst_141 {dimension_numbers = #tpu.dot_dimension_numbers<[1], [0], [0], [1], [0, 0, 1, 1], [], []>} : vector<3x32xbf16>, vector<32x256xbf16>, vector<3x256xf32> -> vector<3x256xf32>
    %188 = arith.addf %179, %187 : vector<3x256xf32>
    %c11 = arith.constant 11 : index
    %c0_142 = arith.constant 0 : index
    %c0_143 = arith.constant 0 : index
    %189 = vector.load %arg6[%c11, %c0_142, %c0_143] : memref<16x3x32xbf16, #tpu.memory_space<vmem>>, vector<1x3x32xbf16>
    %190 = vector.shape_cast %189 : vector<1x3x32xbf16> to vector<3x32xbf16>
    %c0_144 = arith.constant 0 : index
    %c33_145 = arith.constant 33 : index
    %191 = vector.load %arg11[%c0_144, %c33_145] : memref<32x290xbf16, #tpu.memory_space<vmem>>, vector<32x256xbf16>
    %cst_146 = arith.constant dense<0.000000e+00> : vector<3x256xf32>
    %192 = tpu.matmul %190, %191, %cst_146 {dimension_numbers = #tpu.dot_dimension_numbers<[1], [0], [0], [1], [0, 0, 1, 1], [], []>} : vector<3x32xbf16>, vector<32x256xbf16>, vector<3x256xf32> -> vector<3x256xf32>
    %193 = arith.addf %188, %192 : vector<3x256xf32>
    %c0_147 = arith.constant 0 : index
    %c0_148 = arith.constant 0 : index
    %194 = vector.load %arg7[%c0_147, %c0_148] : memref<3x1xf32, #tpu.memory_space<vmem>>, vector<3x1xf32>
    %195 = vector.broadcast %194 : vector<3x1xf32> to vector<3x256xf32>
    %196 = arith.addf %193, %195 : vector<3x256xf32>
    %c0_149 = arith.constant 0 : index
    %c2_150 = arith.constant 2 : index
    %c0_151 = arith.constant 0 : index
    %c0_152 = arith.constant 0 : index
    %197 = vector.load %arg9[%c0_149, %c2_150, %c0_151, %c0_152] : memref<1x4x3x256xf32, #tpu.memory_space<vmem>>, vector<1x1x3x256xf32>
    %198 = vector.shape_cast %197 : vector<1x1x3x256xf32> to vector<3x256xf32>
    %199 = vector.shape_cast %196 : vector<3x256xf32> to vector<1x1x3x256xf32>
    tpu.vector_store %arg9[%c0_149, %c2_150, %c0_151, %c0_152], %199 {strides = array<i32>} : memref<1x4x3x256xf32, #tpu.memory_space<vmem>>, vector<1x1x3x256xf32>,
    %cst_153 = arith.constant 0.000000e+00 : f32
    %200 = vector.broadcast %cst_153 : f32 to vector<3x256xf32>
    %c12 = arith.constant 12 : index
    %c0_154 = arith.constant 0 : index
    %c0_155 = arith.constant 0 : index
    %201 = vector.load %arg6[%c12, %c0_154, %c0_155] : memref<16x3x32xbf16, #tpu.memory_space<vmem>>, vector<1x3x32xbf16>
    %202 = vector.shape_cast %201 : vector<1x3x32xbf16> to vector<3x32xbf16>
    %c0_156 = arith.constant 0 : index
    %c17_157 = arith.constant 17 : index
    %203 = vector.load %arg11[%c0_156, %c17_157] : memref<32x290xbf16, #tpu.memory_space<vmem>>, vector<32x256xbf16>
    %cst_158 = arith.constant dense<0.000000e+00> : vector<3x256xf32>
    %204 = tpu.matmul %202, %203, %cst_158 {dimension_numbers = #tpu.dot_dimension_numbers<[1], [0], [0], [1], [0, 0, 1, 1], [], []>} : vector<3x32xbf16>, vector<32x256xbf16>, vector<3x256xf32> -> vector<3x256xf32>
    %205 = arith.addf %200, %204 : vector<3x256xf32>
    %c13 = arith.constant 13 : index
    %c0_159 = arith.constant 0 : index
    %c0_160 = arith.constant 0 : index
    %206 = vector.load %arg6[%c13, %c0_159, %c0_160] : memref<16x3x32xbf16, #tpu.memory_space<vmem>>, vector<1x3x32xbf16>
    %207 = vector.shape_cast %206 : vector<1x3x32xbf16> to vector<3x32xbf16>
    %c0_161 = arith.constant 0 : index
    %c18_162 = arith.constant 18 : index
    %208 = vector.load %arg11[%c0_161, %c18_162] : memref<32x290xbf16, #tpu.memory_space<vmem>>, vector<32x256xbf16>
    %209 = vector.extract_strided_slice %0 {offsets = [2, 0, 0], sizes = [1, 1, 256], strides = [1, 1, 1]} : vector<3x1x256xbf16> to vector<1x1x256xbf16>
    %210 = vector.shape_cast %209 : vector<1x1x256xbf16> to vector<1x256xbf16>
    %211 = vector.broadcast %210 : vector<1x256xbf16> to vector<32x256xbf16>
    %212 = arith.mulf %208, %211 : vector<32x256xbf16>
    %cst_163 = arith.constant dense<0.000000e+00> : vector<3x256xf32>
    %213 = tpu.matmul %207, %212, %cst_163 {dimension_numbers = #tpu.dot_dimension_numbers<[1], [0], [0], [1], [0, 0, 1, 1], [], []>} : vector<3x32xbf16>, vector<32x256xbf16>, vector<3x256xf32> -> vector<3x256xf32>
    %214 = arith.addf %205, %213 : vector<3x256xf32>
    %c14 = arith.constant 14 : index
    %c0_164 = arith.constant 0 : index
    %c0_165 = arith.constant 0 : index
    %215 = vector.load %arg6[%c14, %c0_164, %c0_165] : memref<16x3x32xbf16, #tpu.memory_space<vmem>>, vector<1x3x32xbf16>
    %216 = vector.shape_cast %215 : vector<1x3x32xbf16> to vector<3x32xbf16>
    %c0_166 = arith.constant 0 : index
    %c33_167 = arith.constant 33 : index
    %217 = vector.load %arg11[%c0_166, %c33_167] : memref<32x290xbf16, #tpu.memory_space<vmem>>, vector<32x256xbf16>
    %cst_168 = arith.constant dense<0.000000e+00> : vector<3x256xf32>
    %218 = tpu.matmul %216, %217, %cst_168 {dimension_numbers = #tpu.dot_dimension_numbers<[1], [0], [0], [1], [0, 0, 1, 1], [], []>} : vector<3x32xbf16>, vector<32x256xbf16>, vector<3x256xf32> -> vector<3x256xf32>
    %219 = arith.addf %214, %218 : vector<3x256xf32>
    %c15 = arith.constant 15 : index
    %c0_169 = arith.constant 0 : index
    %c0_170 = arith.constant 0 : index
    %220 = vector.load %arg6[%c15, %c0_169, %c0_170] : memref<16x3x32xbf16, #tpu.memory_space<vmem>>, vector<1x3x32xbf16>
    %221 = vector.shape_cast %220 : vector<1x3x32xbf16> to vector<3x32xbf16>
    %c0_171 = arith.constant 0 : index
    %c34_172 = arith.constant 34 : index
    %222 = vector.load %arg11[%c0_171, %c34_172] : memref<32x290xbf16, #tpu.memory_space<vmem>>, vector<32x256xbf16>
    %223 = vector.extract_strided_slice %0 {offsets = [2, 0, 0], sizes = [1, 1, 256], strides = [1, 1, 1]} : vector<3x1x256xbf16> to vector<1x1x256xbf16>
    %224 = vector.shape_cast %223 : vector<1x1x256xbf16> to vector<1x256xbf16>
    %225 = vector.broadcast %224 : vector<1x256xbf16> to vector<32x256xbf16>
    %226 = arith.mulf %222, %225 : vector<32x256xbf16>
    %cst_173 = arith.constant dense<0.000000e+00> : vector<3x256xf32>
    %227 = tpu.matmul %221, %226, %cst_173 {dimension_numbers = #tpu.dot_dimension_numbers<[1], [0], [0], [1], [0, 0, 1, 1], [], []>} : vector<3x32xbf16>, vector<32x256xbf16>, vector<3x256xf32> -> vector<3x256xf32>
    %228 = arith.addf %219, %227 : vector<3x256xf32>
    %c0_174 = arith.constant 0 : index
    %c0_175 = arith.constant 0 : index
    %229 = vector.load %arg7[%c0_174, %c0_175] : memref<3x1xf32, #tpu.memory_space<vmem>>, vector<3x1xf32>
    %230 = vector.broadcast %229 : vector<3x1xf32> to vector<3x256xf32>
    %231 = arith.addf %228, %230 : vector<3x256xf32>
    %c0_176 = arith.constant 0 : index
    %c3_177 = arith.constant 3 : index
    %c0_178 = arith.constant 0 : index
    %c0_179 = arith.constant 0 : index
    %232 = vector.load %arg9[%c0_176, %c3_177, %c0_178, %c0_179] : memref<1x4x3x256xf32, #tpu.memory_space<vmem>>, vector<1x1x3x256xf32>
    %233 = vector.shape_cast %232 : vector<1x1x3x256xf32> to vector<3x256xf32>
    %234 = vector.shape_cast %231 : vector<3x256xf32> to vector<1x1x3x256xf32>
    tpu.vector_store %arg9[%c0_176, %c3_177, %c0_178, %c0_179], %234 {strides = array<i32>} : memref<1x4x3x256xf32, #tpu.memory_space<vmem>>, vector<1x1x3x256xf32>,
    return
  }
  func.func @transform_0(%arg0: i32) -> (i32, i32, i32) {
    %c0_i32 = arith.constant 0 : i32
    %c0_i32_0 = arith.constant 0 : i32
    %c0_i32_1 = arith.constant 0 : i32
    return %arg0, %c0_i32, %c0_i32_0 : i32, i32, i32
  }
  func.func @transform_1(%arg0: i32) -> (i32, i32) {
    %c0_i32 = arith.constant 0 : i32
    %c0_i32_0 = arith.constant 0 : i32
    %c0_i32_1 = arith.constant 0 : i32
    return %c0_i32, %c0_i32_0 : i32, i32
  }
  func.func @transform_2(%arg0: i32) -> (i32, i32) {
    %c0_i32 = arith.constant 0 : i32
    %c0_i32_0 = arith.constant 0 : i32
    %c0_i32_1 = arith.constant 0 : i32
    return %c0_i32, %c0_i32_0 : i32, i32
  }
  func.func @transform_3(%arg0: i32) -> (i32, i32, i32) {
    %c0_i32 = arith.constant 0 : i32
    %c0_i32_0 = arith.constant 0 : i32
    %c0_i32_1 = arith.constant 0 : i32
    %c0_i32_2 = arith.constant 0 : i32
    return %c0_i32, %c0_i32_0, %c0_i32_1 : i32, i32, i32
  }
  func.func @transform_4(%arg0: i32) -> (i32, i32) {
    %c0_i32 = arith.constant 0 : i32
    %c0_i32_0 = arith.constant 0 : i32
    %c0_i32_1 = arith.constant 0 : i32
    return %c0_i32, %c0_i32_0 : i32, i32
  }
  func.func @transform_5(%arg0: i32) -> (i32, i32, i32) {
    %c0_i32 = arith.constant 0 : i32
    %c0_i32_0 = arith.constant 0 : i32
    %c0_i32_1 = arith.constant 0 : i32
    %c0_i32_2 = arith.constant 0 : i32
    return %c0_i32, %c0_i32_0, %c0_i32_1 : i32, i32, i32
  }
  func.func @transform_6(%arg0: i32) -> (i32, i32) {
    %c0_i32 = arith.constant 0 : i32
    %c0_i32_0 = arith.constant 0 : i32
    %c0_i32_1 = arith.constant 0 : i32
    return %c0_i32, %c0_i32_0 : i32, i32
  }
  func.func @transform_7(%arg0: i32) -> (i32, i32, i32) {
    %c0_i32 = arith.constant 0 : i32
    %c0_i32_0 = arith.constant 0 : i32
    %c0_i32_1 = arith.constant 0 : i32
    %c0_i32_2 = arith.constant 0 : i32
    return %c0_i32, %c0_i32_0, %c0_i32_1 : i32, i32, i32
  }
  func.func @transform_8(%arg0: i32) -> (i32, i32, i32, i32) {
    %c0_i32 = arith.constant 0 : i32
    %c0_i32_0 = arith.constant 0 : i32
    %c0_i32_1 = arith.constant 0 : i32
    %c0_i32_2 = arith.constant 0 : i32
    return %arg0, %c0_i32, %c0_i32_0, %c0_i32_1 : i32, i32, i32, i32
  }
}

</mosaic_0001>

<llo_original>
// kernel: recon_forward.1
$region0: #{recon_forward.1}
  #allocation0 [shape = 'u32[]', space=smem, size = 0x4, offset = 0x4, fixed_abs, tag = 'smem constant byte address 0x4 - core index']
  #allocation1 [shape = 'u32[72,128]{1,0:T(1,128)}', space=vmem, size = 0x9000, scoped, tag = 'internal scratch']
  #allocation2 [shape = 'bf16[4,290]{1,0:T(4,128)(2,1)}', space=vmem, size = 0xc00, scoped, tag = 'scratch operand']
  #allocation3 [shape = 'bf16[32,290]{1,0:T(8,128)(2,1)}', space=vmem, size = 0x6000, scoped, tag = 'scratch operand']
  %s0 = inlined_call_operand.vmem [shape: bf16[2,4,256], index: 0, kind: input, shape index: {}]
  %s1 = inlined_call_operand.vmem [shape: bf16[4,4], index: 1, kind: input, shape index: {}]
  %s2 = inlined_call_operand.vmem [shape: f32[4,1], index: 2, kind: input, shape index: {}]
  %s3 = inlined_call_operand.vmem [shape: bf16[9,32,4], index: 3, kind: input, shape index: {}]
  %s4 = inlined_call_operand.vmem [shape: f32[32,1], index: 4, kind: input, shape index: {}]
  %s5 = inlined_call_operand.vmem [shape: bf16[16,3,32], index: 5, kind: input, shape index: {}]
  %s6 = inlined_call_operand.vmem [shape: f32[3,1], index: 6, kind: input, shape index: {}]
  %s7 = inlined_call_operand.vmem [shape: bf16[3,1,256], index: 7, kind: input, shape index: {}]
  %s8 = inlined_call_operand.vmem [shape: f32[2,4,3,256], index: 8, kind: output, shape index: {}]
  %s9 = sld [smem:[#allocation0]]
  $region65: #{recon_forward.1} parent=0
    _
  %s11 = ssub.s32 1, %s9
  %s12 = scalar_select 0, %s11, %s9
  loop: start=0, step=1, limit=4
  $region2: #{recon_forward.1} parent=0 // loop_pre_header
    _
  $region3: #{recon_forward.1} parent=0 // loop_header
    %s14 = sphi 0, %s18
    %p15 = scmp.ge.s32.totalorder %s14, 4
    %s24 = sphi 0, %s26
    %s27 = sphi 0, %s24
    %s28 = sphi 0, %s27
    %s44 = sphi 0, %s28
    %s48 = sphi 0, %s48
    %s50 = sphi 0, %s48
    %s51 = sphi 0, %s50
    %s65 = sphi 0, %s51
    %s69 = sphi 0, %s69
    %s71 = sphi 0, %s69
    %s72 = sphi 0, %s71
    %s86 = sphi 0, %s72
    %s90 = sphi 0, %s90
    %s92 = sphi 0, %s90
    %s93 = sphi 0, %s92
    %s107 = sphi 0, %s93
    %s111 = sphi 0, %s111
    %s113 = sphi 0, %s111
    %s114 = sphi 0, %s113
    %s128 = sphi 0, %s114
    %s132 = sphi 0, %s132
    %s134 = sphi 0, %s132
    %s135 = sphi 0, %s134
    %s149 = sphi 0, %s135
    %s153 = sphi 0, %s153
    %s155 = sphi 0, %s153
    %s156 = sphi 0, %s155
    %s170 = sphi 0, %s156
    %s174 = sphi 0, %s174
    %s176 = sphi 0, %s174
    %s177 = sphi 0, %s176
    %s191 = sphi 0, %s177
    %s197 = sphi 0, %s199
    %s200 = sphi 0, %s197
    %s201 = sphi 0, %s200
    %s217 = sphi 0, %s201
  $region4: #{recon_forward.1} parent=0 // loop_header_branch
    %17 = sbr.rel (%p15) target = $region8
  $region5: #{recon_forward.1} parent=0 // loop_body
    %s19 = ssub.s32 %s14, 1
    %s20 = ssub.s32 %s14, 2
    %s21 = sadd.s32 %s14, 1
    %s22 = ssub.s32 %s14, %s21
    %p23 = scmp.eq.s32.totalorder %s22, 0
    %s25 = sadd.s32 %s24, 1
    %s26 = scalar_select %p23, %s24, %s25
    %p29 = pneg %p23
    %p30 = scmp.eq.s32.totalorder %s14, 1
    %p31 = por %p29, %p30
    %p32 = scmp.ne.s32.totalorder %s24, %s27
    %p33 = scmp.eq.s32.totalorder %s14, 0
    %p34 = por %p32, %p33
    %p35 = scmp.ne.s32.totalorder %s24, %s27
    %p36 = scmp.eq.s32.totalorder %s19, 1
    %p37 = por %p35, %p36
    %p38 = scmp.ne.s32.totalorder %s27, %s28
    %p39 = scmp.eq.s32.totalorder %s19, 0
    %p40 = por %p38, %p39
    %p41 = scmp.ne.s32.totalorder %s27, %s28
    %p42 = scmp.eq.s32.totalorder %s20, 1
    %p43 = por %p41, %p42
    %p45 = scmp.ne.s32.totalorder %s28, %s44
    %p46 = scmp.eq.s32.totalorder %s20, 0
    %p47 = por %p45, %p46
    %s49 = sadd.s32 %s48, 1
    %p52 = scmp.eq.s32.totalorder %s14, 1
    %p53 = scmp.ne.s32.totalorder %s48, %s50
    %p54 = scmp.eq.s32.totalorder %s14, 0
    %p55 = por %p53, %p54
    %p56 = scmp.ne.s32.totalorder %s48, %s50
    %p57 = scmp.eq.s32.totalorder %s19, 1
    %p58 = por %p56, %p57
    %p59 = scmp.ne.s32.totalorder %s50, %s51
    %p60 = scmp.eq.s32.totalorder %s19, 0
    %p61 = por %p59, %p60
    %p62 = scmp.ne.s32.totalorder %s50, %s51
    %p63 = scmp.eq.s32.totalorder %s20, 1
    %p64 = por %p62, %p63
    %p66 = scmp.ne.s32.totalorder %s51, %s65
    %p67 = scmp.eq.s32.totalorder %s20, 0
    %p68 = por %p66, %p67
    %s70 = sadd.s32 %s69, 1
    %p73 = scmp.eq.s32.totalorder %s14, 1
    %p74 = scmp.ne.s32.totalorder %s69, %s71
    %p75 = scmp.eq.s32.totalorder %s14, 0
    %p76 = por %p74, %p75
    %p77 = scmp.ne.s32.totalorder %s69, %s71
    %p78 = scmp.eq.s32.totalorder %s19, 1
    %p79 = por %p77, %p78
    %p80 = scmp.ne.s32.totalorder %s71, %s72
    %p81 = scmp.eq.s32.totalorder %s19, 0
    %p82 = por %p80, %p81
    %p83 = scmp.ne.s32.totalorder %s71, %s72
    %p84 = scmp.eq.s32.totalorder %s20, 1
    %p85 = por %p83, %p84
    %p87 = scmp.ne.s32.totalorder %s72, %s86
    %p88 = scmp.eq.s32.totalorder %s20, 0
    %p89 = por %p87, %p88
    %s91 = sadd.s32 %s90, 1
    %p94 = scmp.eq.s32.totalorder %s14, 1
    %p95 = scmp.ne.s32.totalorder %s90, %s92
    %p96 = scmp.eq.s32.totalorder %s14, 0
    %p97 = por %p95, %p96
    %p98 = scmp.ne.s32.totalorder %s90, %s92
    %p99 = scmp.eq.s32.totalorder %s19, 1
    %p100 = por %p98, %p99
    %p101 = scmp.ne.s32.totalorder %s92, %s93
    %p102 = scmp.eq.s32.totalorder %s19, 0
    %p103 = por %p101, %p102
    %p104 = scmp.ne.s32.totalorder %s92, %s93
    %p105 = scmp.eq.s32.totalorder %s20, 1
    %p106 = por %p104, %p105
    %p108 = scmp.ne.s32.totalorder %s93, %s107
    %p109 = scmp.eq.s32.totalorder %s20, 0
    %p110 = por %p108, %p109
    %s112 = sadd.s32 %s111, 1
    %p115 = scmp.eq.s32.totalorder %s14, 1
    %p116 = scmp.ne.s32.totalorder %s111, %s113
    %p117 = scmp.eq.s32.totalorder %s14, 0
    %p118 = por %p116, %p117
    %p119 = scmp.ne.s32.totalorder %s111, %s113
    %p120 = scmp.eq.s32.totalorder %s19, 1
    %p121 = por %p119, %p120
    %p122 = scmp.ne.s32.totalorder %s113, %s114
    %p123 = scmp.eq.s32.totalorder %s19, 0
    %p124 = por %p122, %p123
    %p125 = scmp.ne.s32.totalorder %s113, %s114
    %p126 = scmp.eq.s32.totalorder %s20, 1
    %p127 = por %p125, %p126
    %p129 = scmp.ne.s32.totalorder %s114, %s128
    %p130 = scmp.eq.s32.totalorder %s20, 0
    %p131 = por %p129, %p130
    %s133 = sadd.s32 %s132, 1
    %p136 = scmp.eq.s32.totalorder %s14, 1
    %p137 = scmp.ne.s32.totalorder %s132, %s134
    %p138 = scmp.eq.s32.totalorder %s14, 0
    %p139 = por %p137, %p138
    %p140 = scmp.ne.s32.totalorder %s132, %s134
    %p141 = scmp.eq.s32.totalorder %s19, 1
    %p142 = por %p140, %p141
    %p143 = scmp.ne.s32.totalorder %s134, %s135
    %p144 = scmp.eq.s32.totalorder %s19, 0
    %p145 = por %p143, %p144
    %p146 = scmp.ne.s32.totalorder %s134, %s135
    %p147 = scmp.eq.s32.totalorder %s20, 1
    %p148 = por %p146, %p147
    %p150 = scmp.ne.s32.totalorder %s135, %s149
    %p151 = scmp.eq.s32.totalorder %s20, 0
    %p152 = por %p150, %p151
    %s154 = sadd.s32 %s153, 1
    %p157 = scmp.eq.s32.totalorder %s14, 1
    %p158 = scmp.ne.s32.totalorder %s153, %s155
    %p159 = scmp.eq.s32.totalorder %s14, 0
    %p160 = por %p158, %p159
    %p161 = scmp.ne.s32.totalorder %s153, %s155
    %p162 = scmp.eq.s32.totalorder %s19, 1
    %p163 = por %p161, %p162
    %p164 = scmp.ne.s32.totalorder %s155, %s156
    %p165 = scmp.eq.s32.totalorder %s19, 0
    %p166 = por %p164, %p165
    %p167 = scmp.ne.s32.totalorder %s155, %s156
    %p168 = scmp.eq.s32.totalorder %s20, 1
    %p169 = por %p167, %p168
    %p171 = scmp.ne.s32.totalorder %s156, %s170
    %p172 = scmp.eq.s32.totalorder %s20, 0
    %p173 = por %p171, %p172
    %s175 = sadd.s32 %s174, 1
    %p178 = scmp.eq.s32.totalorder %s14, 1
    %p179 = scmp.ne.s32.totalorder %s174, %s176
    %p180 = scmp.eq.s32.totalorder %s14, 0
    %p181 = por %p179, %p180
    %p182 = scmp.ne.s32.totalorder %s174, %s176
    %p183 = scmp.eq.s32.totalorder %s19, 1
    %p184 = por %p182, %p183
    %p185 = scmp.ne.s32.totalorder %s176, %s177
    %p186 = scmp.eq.s32.totalorder %s19, 0
    %p187 = por %p185, %p186
    %p188 = scmp.ne.s32.totalorder %s176, %s177
    %p189 = scmp.eq.s32.totalorder %s20, 1
    %p190 = por %p188, %p189
    %p192 = scmp.ne.s32.totalorder %s177, %s191
    %p193 = scmp.eq.s32.totalorder %s20, 0
    %p194 = por %p192, %p193
    %s195 = ssub.s32 %s14, %s21
    %p196 = scmp.eq.s32.totalorder %s195, 0
    %s198 = sadd.s32 %s197, 1
    %s199 = scalar_select %p196, %s197, %s198
    %p202 = pneg %p196
    %p203 = scmp.eq.s32.totalorder %s14, 1
    %p204 = por %p202, %p203
    %p205 = scmp.ne.s32.totalorder %s197, %s200
    %p206 = scmp.eq.s32.totalorder %s14, 0
    %p207 = por %p205, %p206
    %p208 = scmp.ne.s32.totalorder %s197, %s200
    %p209 = scmp.eq.s32.totalorder %s19, 1
    %p210 = por %p208, %p209
    %p211 = scmp.ne.s32.totalorder %s200, %s201
    %p212 = scmp.eq.s32.totalorder %s19, 0
    %p213 = por %p211, %p212
    %p214 = scmp.ne.s32.totalorder %s200, %s201
    %p215 = scmp.eq.s32.totalorder %s20, 1
    %p216 = por %p214, %p215
    %p218 = scmp.ne.s32.totalorder %s201, %s217
    %p219 = scmp.eq.s32.totalorder %s20, 0
    %p220 = por %p218, %p219
    %p221 = scmp.le.s32.totalorder 1, %s14
    %p222 = scmp.lt.s32.totalorder %s14, 3
    %p223 = pnand %p221, %p222
    %p224 = pneg %p223
    // Predicated region
    $region9: #{recon_forward.1} parent=5 // pred_check
      _
    $region10: #{recon_forward.1} parent=5 // pred_check_branch
      %226 = sbr.rel (%p223) target = $region12
    $region11: #{recon_forward.1} parent=5 // pred_region
      %s227 = ssub.s32 %s14, 1
      // Predicated region
      $region13: #{recon_forward.1} parent=11 // pred_check
        %p228 = pneg %p61
      $region14: #{recon_forward.1} parent=11 // pred_check_branch
        %230 = sbr.rel (%p228) target = $region16
      $region15: #{recon_forward.1} parent=11 // pred_region
        _
      $region16: #{recon_forward.1} parent=11 // pred_fallthru
        _
      // Predicated region
      $region17: #{recon_forward.1} parent=11 // pred_check
        %p231 = pneg %p82
      $region18: #{recon_forward.1} parent=11 // pred_check_branch
        %233 = sbr.rel (%p231) target = $region20
      $region19: #{recon_forward.1} parent=11 // pred_region
        _
      $region20: #{recon_forward.1} parent=11 // pred_fallthru
        _
      // Predicated region
      $region21: #{recon_forward.1} parent=11 // pred_check
        %p234 = pneg %p103
      $region22: #{recon_forward.1} parent=11 // pred_check_branch
        %236 = sbr.rel (%p234) target = $region24
      $region23: #{recon_forward.1} parent=11 // pred_region
        _
      $region24: #{recon_forward.1} parent=11 // pred_fallthru
        _
      // Predicated region
      $region25: #{recon_forward.1} parent=11 // pred_check
        %p237 = pneg %p124
      $region26: #{recon_forward.1} parent=11 // pred_check_branch
        %239 = sbr.rel (%p237) target = $region28
      $region27: #{recon_forward.1} parent=11 // pred_region
        _
      $region28: #{recon_forward.1} parent=11 // pred_fallthru
        _
      // Predicated region
      $region29: #{recon_forward.1} parent=11 // pred_check
        %p240 = pneg %p145
      $region30: #{recon_forward.1} parent=11 // pred_check_branch
        %242 = sbr.rel (%p240) target = $region32
      $region31: #{recon_forward.1} parent=11 // pred_region
        _
      $region32: #{recon_forward.1} parent=11 // pred_fallthru
        _
      // Predicated region
      $region33: #{recon_forward.1} parent=11 // pred_check
        %p243 = pneg %p166
      $region34: #{recon_forward.1} parent=11 // pred_check_branch
        %245 = sbr.rel (%p243) target = $region36
      $region35: #{recon_forward.1} parent=11 // pred_region
        _
      $region36: #{recon_forward.1} parent=11 // pred_fallthru
        _
      // Predicated region
      $region37: #{recon_forward.1} parent=11 // pred_check
        %p246 = pneg %p187
      $region38: #{recon_forward.1} parent=11 // pred_check_branch
        %248 = sbr.rel (%p246) target = $region40
      $region39: #{recon_forward.1} parent=11 // pred_region
        _
      $region40: #{recon_forward.1} parent=11 // pred_fallthru
        _
    $region12: #{recon_forward.1} parent=5 // pred_fallthru
      _
    %p249 = scmp.lt.s32.totalorder %s14, 2
    // Predicated region
    $region41: #{recon_forward.1} parent=5 // pred_check
      %p250 = pneg %p249
    $region42: #{recon_forward.1} parent=5 // pred_check_branch
      %252 = sbr.rel (%p250) target = $region44
    $region43: #{recon_forward.1} parent=5 // pred_region
      // Predicated region
      $region45: #{recon_forward.1} parent=43 // pred_check
        %p253 = pneg %p34
      $region46: #{recon_forward.1} parent=43 // pred_check_branch
        %255 = sbr.rel (%p253) target = $region48
      $region47: #{recon_forward.1} parent=43 // pred_region
        %p256 = scmp.lt.s32.totalorder %s14, 1
        %s257 = scalar_select %p256, %s14, 1
        %s258 = smul.addr %s257, 2
        %s259 = smul.addr %s258, 2
        %s260 = scalar_lea.vmem %s0, %s259
      $region48: #{recon_forward.1} parent=43 // pred_fallthru
        _
    $region44: #{recon_forward.1} parent=5 // pred_fallthru
      _
    %p261 = scmp.le.s32.totalorder 1, %s14
    %p262 = scmp.lt.s32.totalorder %s14, 3
    %p263 = pnand %p261, %p262
    %p264 = pneg %p263
    // Predicated region
    $region49: #{recon_forward.1} parent=5 // pred_check
      _
    $region50: #{recon_forward.1} parent=5 // pred_check_branch
      %266 = sbr.rel (%p263) target = $region52
    $region51: #{recon_forward.1} parent=5 // pred_region
      %s267 = ssub.s32 %s14, 1
      %p268 = scmp.lt.s32.totalorder %s19, 1
      %s269 = scalar_select %p268, %s19, 1
      %s270 = smul.addr %s269, 2
      %s271 = smul.addr %s270, 2
      %s272 = scalar_lea.vmem %s0, %s271
      %p273 = pneg %p40
      %p274 = pneg %p37
      %p275 = pneg %p61
      %p276 = pneg %p58
      %p277 = pneg %p82
      %p278 = pneg %p79
      %p279 = pneg %p103
      %p280 = pneg %p100
      %p281 = pneg %p124
      %p282 = pneg %p121
      %p283 = pneg %p145
      %p284 = pneg %p142
      %p285 = pneg %p166
      %p286 = pneg %p163
      %p287 = pneg %p187
      %p288 = pneg %p184
      %p289 = pneg %p213
      %p290 = pneg %p210
      %p291 = scmp.lt.s32.totalorder %s19, 1
      %s292 = scalar_select %p291, %s19, 1
      %s293 = smul.addr %s292, 8
      %s294 = smul.addr %s293, 4
      %s295 = scalar_lea.vmem %s8, %s294
      %p296 = scmp.lt.s32.totalorder %s19, 1
      %s297 = scalar_select %p296, %s19, 1
      %s298 = smul.addr %s297, 2
      %s299 = smul.addr %s298, 2
      %s300 = scalar_lea.vmem %s0, %s299
      %p301 = scmp.lt.s32.totalorder %s19, 1
      %s302 = scalar_select %p301, %s19, 1
      %s303 = smul.addr %s302, 8
      %s304 = smul.addr %s303, 4
      %s305 = scalar_lea.vmem %s8, %s304
      %v307 = vld [vmem:[%s7] sm:$0x3]
      %v308 = vld [vmem:[%s7 + $0x4] sm:$0x3]
      %v309 = vld [vmem:[%s300] sm:$0xf]
      %v310 = vld [vmem:[%s1] sm:$0x3]
      %v311 = vld [vmem:[%s2] sm:$0xf]
      %313 = vset.pattern.permute.xlu0 0
      %314 = vperm.xlu0 %313, %v311
      %v315 = vpop.permute.xlu0 %314
      %318 = vst [vmem:[#allocation1] ss:$4 sm:$0xff] %v309
      %v319 = vld.sshfl [vmem:[#allocation1] sm:$0xff pattern:$0x73625140]
      %v320 = vld.sshfl [vmem:[#allocation1 + $0x8] sm:$0xff pattern:$0x73625140]
      %vm321 = vcmask 31744
      %v323 = vsel %vm321, %v310, 0
      %vm325 = vcmask 1041408
      %v326 = vsel %vm325, %v319, 0
      %v328 = vsel %vm325, %v320, 0
      %330 = vmatpush.bf16.msra.mxu0 0
      %331 = vmatpush.bf16.msra.mxu0 0
      %332 = vmatpush.bf16.msra.mxu0 0
      %333 = vmatpush.bf16.msra.mxu0 0
      %334 = vmatpush.bf16.msra.mxu0 0
      %335 = vmatpush.bf16.msra.mxu0 0
      %336 = vmatpush.bf16.msra.mxu0 0
      %337 = vmatpush.bf16.msra.mxu0 %v326
      %338 = vmatmul.bf16.gmra.mxu0 %v323
      %v339 = vpop.f32.mrf.mxu0
      %v340 = vadd.f32 %v315, %v339
      %v341 = vpop.f32.mrf.mxu0
      %342 = vdwg.mxu0
      %343 = vmatpush.bf16.msra.mxu0 0
      %344 = vmatpush.bf16.msra.mxu0 0
      %345 = vmatpush.bf16.msra.mxu0 0
      %346 = vmatpush.bf16.msra.mxu0 0
      %347 = vmatpush.bf16.msra.mxu0 0
      %348 = vmatpush.bf16.msra.mxu0 0
      %349 = vmatpush.bf16.msra.mxu0 0
      %350 = vmatpush.bf16.msra.mxu0 %v328
      %351 = vmatmul.bf16.gmra.mxu0 %v323
      %v352 = vpop.f32.mrf.mxu0
      %v353 = vadd.f32 %v315, %v352
      %v354 = vpop.f32.mrf.mxu0
      %355 = vdwg.mxu0
      %v356 = vpack.c.bf16 %v353, %v340
      %vm357 = vcmask 1043458
      %vm358 = vmor %vm357, %vm325
      %vm359 = vcmask 275460
      %vm360 = vmor %vm359, %vm358
      %361 = vst.msk [vmem:[#allocation2] sm:$0x3f] %vm360, 0
      %v363 = vrot.slane %v356, 2
      %v366 = vsel %vm325, %v356, %v363
      %368 = vrot.lane.b32.xlu0 %v366, 17
      %v369 = vpop.permute.xlu0 %368
      %v370 = vrot.slane %v369, 6
      %vm371 = vcmask 138240
      %v372 = vsel %vm371, %v370, %v369
      %vm374 = vcmask 1041544
      %vm375 = vmor %vm357, %vm374
      %vm376 = vcmask 136196
      %vm377 = vmor %vm376, %vm375
      %378 = vst.msk [vmem:[#allocation2] sm:$0x3f] %vm377, %v372
      %v379 = vld [vmem:[%s3] sm:$0xf]
      %v380 = vld [vmem:[%s3 + $0x4] sm:$0xf]
      %v381 = vld [vmem:[%s3 + $0x8] sm:$0xf]
      %v382 = vld [vmem:[%s3 + $0xc] sm:$0xf]
      %v383 = vld [vmem:[#allocation2] sm:$0xf]
      %385 = vst [vmem:[#allocation1] ss:$9 sm:$0xff] %v307
      %v386 = vld [vmem:[#allocation1] sm:$0xff]
      %v387 = vld [vmem:[#allocation1 + $0x9] sm:$0xff]
      %v388 = vpack.i.b16 %v386, %v386
      %v390 = vperm.slane %v388, 0
      %v391 = vpack.i.b16 %v387, %v387
      %v393 = vperm.slane %v391, 0
      %v394 = vunpack.c.l.bf16 %v383
      %v395 = vunpack.c.l.bf16 %v390
      %v396 = vunpack.c.l.bf16 %v393
      %v399 = vrot.slane %v396, 4
      %vm400 = vcmask 1043456
      %v401 = vsel %vm400, %v395, %v399
      %v403 = vmul.f32 %v394, %v401
      %405 = vst [vmem:[#allocation1] ss:$2 sm:$0xff] %v403
      %v406 = vld.sshfl [vmem:[#allocation1] sm:$0xff pattern:$0x75316420]
      %v407 = vld.sshfl [vmem:[#allocation1 + $0x8] sm:$0xff pattern:$0x75316420]
      %v410 = vpack.c.bf16 %v406, %v406
      %v411 = vpack.c.bf16 %v407, %v407
      %s412 = scalar_lea.vmem %s3, 16
      %v413 = vld [vmem:[%s412] sm:$0xf]
      %v414 = vld [vmem:[%s412 + $0x4] sm:$0xf]
      %v415 = vld [vmem:[%s412 + $0x8] sm:$0xf]
      %v416 = vld [vmem:[%s412 + $0xc] sm:$0xf]
      %v417 = vld [vmem:[#allocation2] sm:$0x3f]
      %v422 = vunpack.c.l.b16 %v413
      %v423 = vunpack.c.l.b16 %v414
      %v424 = vunpack.c.l.b16 %v415
      %v425 = vunpack.c.l.b16 %v416
      %v426 = vpack.c.b16 %v423, %v422
      %v427 = vpack.c.b16 %v425, %v424
      %429 = vst [vmem:[#allocation1] ss:$4 sm:$0xff] %v417
      %v430 = vld.sshfl [vmem:[#allocation1] sm:$0xff pattern:$0x73625140]
      %v432 = vld.sshfl [vmem:[#allocation1 + $0x8] sm:$0xff pattern:$0x73625140]
      %v434 = vld.sshfl [vmem:[#allocation1 + $0x10] sm:$0xff pattern:$0x73625140]
      %436 = vrot.lane.b32.xlu0 %v430, 127
      %v437 = vpop.permute.xlu0 %436
      %438 = vrot.lane.b32.xlu0 %v432, 127
      %v439 = vpop.permute.xlu0 %438
      %440 = vrot.lane.b32.xlu0 %v434, 127
      %v441 = vpop.permute.xlu0 %440
      %vm442 = vcmask 1039360
      %v443 = vsel %vm442, %v437, %v439
      %v444 = vsel %vm442, %v439, %v441
      %v446 = vsel %vm321, %v426, 0
      %v449 = vsel %vm321, %v427, 0
      %v452 = vsel %vm325, %v443, 0
      %v455 = vsel %vm325, %v444, 0
      %457 = vmatpush.bf16.msra.mxu0 0
      %458 = vmatpush.bf16.msra.mxu0 0
      %459 = vmatpush.bf16.msra.mxu0 0
      %460 = vmatpush.bf16.msra.mxu0 0
      %461 = vmatpush.bf16.msra.mxu0 0
      %462 = vmatpush.bf16.msra.mxu0 0
      %463 = vmatpush.bf16.msra.mxu0 0
      %464 = vmatpush.bf16.msra.mxu0 %v452
      %465 = vmatmul.bf16.gmra.mxu0 %v446
      %v466 = vpop.f32.mrf.mxu0
      %v467 = vadd.f32 0.0, %v466
      %v468 = vpop.f32.mrf.mxu0
      %v469 = vadd.f32 0.0, %v468
      %470 = vmatmul.bf16.gmra.mxu0 %v449
      %v471 = vpop.f32.mrf.mxu0
      %v472 = vadd.f32 0.0, %v471
      %v473 = vpop.f32.mrf.mxu0
      %v474 = vadd.f32 0.0, %v473
      %475 = vdwg.mxu0
      %476 = vmatpush.bf16.msra.mxu0 0
      %477 = vmatpush.bf16.msra.mxu0 0
      %478 = vmatpush.bf16.msra.mxu0 0
      %479 = vmatpush.bf16.msra.mxu0 0
      %480 = vmatpush.bf16.msra.mxu0 0
      %481 = vmatpush.bf16.msra.mxu0 0
      %482 = vmatpush.bf16.msra.mxu0 0
      %483 = vmatpush.bf16.msra.mxu0 %v455
      %484 = vmatmul.bf16.gmra.mxu0 %v446
      %v485 = vpop.f32.mrf.mxu0
      %v486 = vadd.f32 0.0, %v485
      %v487 = vpop.f32.mrf.mxu0
      %v488 = vadd.f32 0.0, %v487
      %489 = vmatmul.bf16.gmra.mxu0 %v449
      %v490 = vpop.f32.mrf.mxu0
      %v491 = vadd.f32 0.0, %v490
      %v492 = vpop.f32.mrf.mxu0
      %v493 = vadd.f32 0.0, %v492
      %494 = vdwg.mxu0
      %v499 = vunpack.c.l.b16 %v379
      %v500 = vunpack.c.l.b16 %v380
      %v501 = vunpack.c.l.b16 %v381
      %v502 = vunpack.c.l.b16 %v382
      %v503 = vpack.c.b16 %v500, %v499
      %v504 = vpack.c.b16 %v502, %v501
      %v506 = vsel %vm321, %v503, 0
      %v509 = vsel %vm321, %v504, 0
      %v512 = vsel %vm325, %v410, 0
      %v515 = vsel %vm325, %v411, 0
      %517 = vmatpush.bf16.msra.mxu0 0
      %518 = vmatpush.bf16.msra.mxu0 0
      %519 = vmatpush.bf16.msra.mxu0 0
      %520 = vmatpush.bf16.msra.mxu0 0
      %521 = vmatpush.bf16.msra.mxu0 0
      %522 = vmatpush.bf16.msra.mxu0 0
      %523 = vmatpush.bf16.msra.mxu0 0
      %524 = vmatpush.bf16.msra.mxu0 %v512
      %525 = vmatmul.bf16.gmra.mxu0 %v506
      %v526 = vpop.f32.mrf.mxu0
      %v527 = vadd.f32 %v467, %v526
      %v528 = vpop.f32.mrf.mxu0
      %v529 = vadd.f32 %v469, %v528
      %530 = vmatmul.bf16.gmra.mxu0 %v509
      %v531 = vpop.f32.mrf.mxu0
      %v532 = vadd.f32 %v472, %v531
      %v533 = vpop.f32.mrf.mxu0
      %v534 = vadd.f32 %v474, %v533
      %535 = vdwg.mxu0
      %536 = vmatpush.bf16.msra.mxu0 0
      %537 = vmatpush.bf16.msra.mxu0 0
      %538 = vmatpush.bf16.msra.mxu0 0
      %539 = vmatpush.bf16.msra.mxu0 0
      %540 = vmatpush.bf16.msra.mxu0 0
      %541 = vmatpush.bf16.msra.mxu0 0
      %542 = vmatpush.bf16.msra.mxu0 0
      %543 = vmatpush.bf16.msra.mxu0 %v515
      %544 = vmatmul.bf16.gmra.mxu0 %v506
      %v545 = vpop.f32.mrf.mxu0
      %v546 = vadd.f32 %v486, %v545
      %v547 = vpop.f32.mrf.mxu0
      %v548 = vadd.f32 %v488, %v547
      %549 = vmatmul.bf16.gmra.mxu0 %v509
      %v550 = vpop.f32.mrf.mxu0
      %v551 = vadd.f32 %v491, %v550
      %v552 = vpop.f32.mrf.mxu0
      %v553 = vadd.f32 %v493, %v552
      %554 = vdwg.mxu0
      %s555 = scalar_lea.vmem %s3, 32
      %v556 = vld [vmem:[%s555] sm:$0xf]
      %v557 = vld [vmem:[%s555 + $0x4] sm:$0xf]
      %v558 = vld [vmem:[%s555 + $0x8] sm:$0xf]
      %v559 = vld [vmem:[%s555 + $0xc] sm:$0xf]
      %v560 = vld [vmem:[#allocation2] sm:$0x3f]
      %562 = vst [vmem:[#allocation1] ss:$9 sm:$0xff] %v308
      %v563 = vld [vmem:[#allocation1] sm:$0xff]
      %v564 = vld [vmem:[#allocation1 + $0x9] sm:$0xff]
      %v565 = vpack.i.b16 %v563, %v563
      %v567 = vperm.slane %v565, 0
      %v568 = vpack.i.b16 %v564, %v564
      %v570 = vperm.slane %v568, 0
      %v571 = vunpack.c.l.bf16 %v560
      %v572 = vunpack.c.h.bf16 %v560
      %v573 = vunpack.c.l.bf16 %v567
      %v574 = vunpack.c.l.bf16 %v570
      %v577 = vrot.slane %v574, 4
      %v578 = vsel %vm400, %v573, %v577
      %579 = vrot.lane.b32.xlu0 %v578, 2
      %v580 = vpop.permute.xlu0 %579
      %v581 = vrot.slane %v580, 4
      %vm582 = vcmask 15360
      %v583 = vsel %vm582, %v581, %v580
      %v586 = vmul.f32 %v571, %v583
      %v587 = vmul.f32 %v572, %v581
      %590 = vst [vmem:[#allocation1] ss:$2 sm:$0xff] %v586
      %s591 = scalar_lea.vmem [#allocation1], 16
      %592 = vst [vmem:[%s591] ss:$2 sm:$0xff] %v587
      %v593 = vld.sshfl [vmem:[#allocation1] sm:$0xff pattern:$0x75316420]
      %v594 = vld.sshfl [vmem:[#allocation1 + $0x8] sm:$0xff pattern:$0x75316420]
      %v595 = vld.sshfl [vmem:[#allocation1 + $0x10] sm:$0xff pattern:$0x75316420]
      %v599 = vpack.c.bf16 %v593, %v593
      %v600 = vpack.c.bf16 %v594, %v594
      %v601 = vpack.c.bf16 %v595, %v595
      %v606 = vunpack.c.l.b16 %v556
      %v607 = vunpack.c.l.b16 %v557
      %v608 = vunpack.c.l.b16 %v558
      %v609 = vunpack.c.l.b16 %v559
      %v610 = vpack.c.b16 %v607, %v606
      %v611 = vpack.c.b16 %v609, %v608
      %615 = vrot.lane.b32.xlu0 %v599, 126
      %v616 = vpop.permute.xlu0 %615
      %617 = vrot.lane.b32.xlu0 %v600, 126
      %v618 = vpop.permute.xlu0 %617
      %619 = vrot.lane.b32.xlu0 %v601, 126
      %v620 = vpop.permute.xlu0 %619
      %vm621 = vcmask 1031168
      %v622 = vsel %vm621, %v616, %v618
      %v623 = vsel %vm621, %v618, %v620
      %v625 = vsel %vm321, %v610, 0
      %v628 = vsel %vm321, %v611, 0
      %v631 = vsel %vm325, %v622, 0
      %v634 = vsel %vm325, %v623, 0
      %636 = vmatpush.bf16.msra.mxu0 0
      %637 = vmatpush.bf16.msra.mxu0 0
      %638 = vmatpush.bf16.msra.mxu0 0
      %639 = vmatpush.bf16.msra.mxu0 0
      %640 = vmatpush.bf16.msra.mxu0 0
      %641 = vmatpush.bf16.msra.mxu0 0
      %642 = vmatpush.bf16.msra.mxu0 0
      %643 = vmatpush.bf16.msra.mxu0 %v631
      %644 = vmatmul.bf16.gmra.mxu0 %v625
      %v645 = vpop.f32.mrf.mxu0
      %v646 = vadd.f32 0.0, %v645
      %v647 = vpop.f32.mrf.mxu0
      %v648 = vadd.f32 0.0, %v647
      %649 = vmatmul.bf16.gmra.mxu0 %v628
      %v650 = vpop.f32.mrf.mxu0
      %v651 = vadd.f32 0.0, %v650
      %v652 = vpop.f32.mrf.mxu0
      %v653 = vadd.f32 0.0, %v652
      %654 = vdwg.mxu0
      %655 = vmatpush.bf16.msra.mxu0 0
      %656 = vmatpush.bf16.msra.mxu0 0
      %657 = vmatpush.bf16.msra.mxu0 0
      %658 = vmatpush.bf16.msra.mxu0 0
      %659 = vmatpush.bf16.msra.mxu0 0
      %660 = vmatpush.bf16.msra.mxu0 0
      %661 = vmatpush.bf16.msra.mxu0 0
      %662 = vmatpush.bf16.msra.mxu0 %v634
      %663 = vmatmul.bf16.gmra.mxu0 %v625
      %v664 = vpop.f32.mrf.mxu0
      %v665 = vadd.f32 0.0, %v664
      %v666 = vpop.f32.mrf.mxu0
      %v667 = vadd.f32 0.0, %v666
      %668 = vmatmul.bf16.gmra.mxu0 %v628
      %v669 = vpop.f32.mrf.mxu0
      %v670 = vadd.f32 0.0, %v669
      %v671 = vpop.f32.mrf.mxu0
      %v672 = vadd.f32 0.0, %v671
      %673 = vdwg.mxu0
      %v674 = vadd.f32 %v527, %v646
      %v675 = vadd.f32 %v546, %v665
      %v676 = vadd.f32 %v529, %v648
      %v677 = vadd.f32 %v548, %v667
      %v678 = vadd.f32 %v532, %v651
      %v679 = vadd.f32 %v551, %v670
      %v680 = vadd.f32 %v534, %v653
      %v681 = vadd.f32 %v553, %v672
      %s682 = scalar_lea.vmem %s3, 48
      %v683 = vld [vmem:[%s682] sm:$0xf]
      %v684 = vld [vmem:[%s682 + $0x4] sm:$0xf]
      %v685 = vld [vmem:[%s682 + $0x8] sm:$0xf]
      %v686 = vld [vmem:[%s682 + $0xc] sm:$0xf]
      %v687 = vld [vmem:[#allocation2] sm:$0x3f]
      %v688 = vunpack.c.l.bf16 %v687
      %v689 = vunpack.c.h.bf16 %v687
      %690 = vrot.lane.b32.xlu0 %v401, 16
      %v691 = vpop.permute.xlu0 %690
      %v692 = vrot.slane %v691, 4
      %vm693 = vcmask 130048
      %v694 = vsel %vm693, %v692, %v691
      %v697 = vmul.f32 %v688, %v694
      %v698 = vmul.f32 %v689, %v692
      %701 = vst [vmem:[#allocation1] ss:$2 sm:$0xff] %v697
      %s702 = scalar_lea.vmem [#allocation1], 16
      %703 = vst [vmem:[%s702] ss:$2 sm:$0xff] %v698
      %v704 = vld.sshfl [vmem:[#allocation1] sm:$0xff pattern:$0x75316420]
      %v705 = vld.sshfl [vmem:[#allocation1 + $0x8] sm:$0xff pattern:$0x75316420]
      %v706 = vld.sshfl [vmem:[#allocation1 + $0x10] sm:$0xff pattern:$0x75316420]
      %v710 = vpack.c.bf16 %v704, %v704
      %v711 = vpack.c.bf16 %v705, %v705
      %v712 = vpack.c.bf16 %v706, %v706
      %v717 = vunpack.c.l.b16 %v683
      %v718 = vunpack.c.l.b16 %v684
      %v719 = vunpack.c.l.b16 %v685
      %v720 = vunpack.c.l.b16 %v686
      %v721 = vpack.c.b16 %v718, %v717
      %v722 = vpack.c.b16 %v720, %v719
      %726 = vrot.lane.b32.xlu0 %v710, 112
      %v727 = vpop.permute.xlu0 %726
      %728 = vrot.lane.b32.xlu0 %v711, 112
      %v729 = vpop.permute.xlu0 %728
      %730 = vrot.lane.b32.xlu0 %v712, 112
      %v731 = vpop.permute.xlu0 %730
      %vm732 = vcmask 916480
      %v733 = vsel %vm732, %v727, %v729
      %v734 = vsel %vm732, %v729, %v731
      %v736 = vsel %vm321, %v721, 0
      %v739 = vsel %vm321, %v722, 0
      %v742 = vsel %vm325, %v733, 0
      %v745 = vsel %vm325, %v734, 0
      %747 = vmatpush.bf16.msra.mxu0 0
      %748 = vmatpush.bf16.msra.mxu0 0
      %749 = vmatpush.bf16.msra.mxu0 0
      %750 = vmatpush.bf16.msra.mxu0 0
      %751 = vmatpush.bf16.msra.mxu0 0
      %752 = vmatpush.bf16.msra.mxu0 0
      %753 = vmatpush.bf16.msra.mxu0 0
      %754 = vmatpush.bf16.msra.mxu0 %v742
      %755 = vmatmul.bf16.gmra.mxu0 %v736
      %v756 = vpop.f32.mrf.mxu0
      %v757 = vadd.f32 0.0, %v756
      %v758 = vpop.f32.mrf.mxu0
      %v759 = vadd.f32 0.0, %v758
      %760 = vmatmul.bf16.gmra.mxu0 %v739
      %v761 = vpop.f32.mrf.mxu0
      %v762 = vadd.f32 0.0, %v761
      %v763 = vpop.f32.mrf.mxu0
      %v764 = vadd.f32 0.0, %v763
      %765 = vdwg.mxu0
      %766 = vmatpush.bf16.msra.mxu0 0
      %767 = vmatpush.bf16.msra.mxu0 0
      %768 = vmatpush.bf16.msra.mxu0 0
      %769 = vmatpush.bf16.msra.mxu0 0
      %770 = vmatpush.bf16.msra.mxu0 0
      %771 = vmatpush.bf16.msra.mxu0 0
      %772 = vmatpush.bf16.msra.mxu0 0
      %773 = vmatpush.bf16.msra.mxu0 %v745
      %774 = vmatmul.bf16.gmra.mxu0 %v736
      %v775 = vpop.f32.mrf.mxu0
      %v776 = vadd.f32 0.0, %v775
      %v777 = vpop.f32.mrf.mxu0
      %v778 = vadd.f32 0.0, %v777
      %779 = vmatmul.bf16.gmra.mxu0 %v739
      %v780 = vpop.f32.mrf.mxu0
      %v781 = vadd.f32 0.0, %v780
      %v782 = vpop.f32.mrf.mxu0
      %v783 = vadd.f32 0.0, %v782
      %784 = vdwg.mxu0
      %v785 = vadd.f32 %v674, %v757
      %v786 = vadd.f32 %v675, %v776
      %v787 = vadd.f32 %v676, %v759
      %v788 = vadd.f32 %v677, %v778
      %v789 = vadd.f32 %v678, %v762
      %v790 = vadd.f32 %v679, %v781
      %v791 = vadd.f32 %v680, %v764
      %v792 = vadd.f32 %v681, %v783
      %s793 = scalar_lea.vmem %s3, 64
      %v794 = vld [vmem:[%s793] sm:$0xf]
      %v795 = vld [vmem:[%s793 + $0x4] sm:$0xf]
      %v796 = vld [vmem:[%s793 + $0x8] sm:$0xf]
      %v797 = vld [vmem:[%s793 + $0xc] sm:$0xf]
      %v798 = vld [vmem:[#allocation2] sm:$0x3f]
      %v803 = vunpack.c.l.b16 %v794
      %v804 = vunpack.c.l.b16 %v795
      %v805 = vunpack.c.l.b16 %v796
      %v806 = vunpack.c.l.b16 %v797
      %v807 = vpack.c.b16 %v804, %v803
      %v808 = vpack.c.b16 %v806, %v805
      %810 = vst [vmem:[#allocation1] ss:$4 sm:$0xff] %v798
      %v811 = vld.sshfl [vmem:[#allocation1] sm:$0xff pattern:$0x73625140]
      %v813 = vld.sshfl [vmem:[#allocation1 + $0x8] sm:$0xff pattern:$0x73625140]
      %v815 = vld.sshfl [vmem:[#allocation1 + $0x10] sm:$0xff pattern:$0x73625140]
      %817 = vrot.lane.b32.xlu0 %v811, 111
      %v818 = vpop.permute.xlu0 %817
      %819 = vrot.lane.b32.xlu0 %v813, 111
      %v820 = vpop.permute.xlu0 %819
      %821 = vrot.lane.b32.xlu0 %v815, 111
      %v822 = vpop.permute.xlu0 %821
      %vm823 = vcmask 908288
      %v824 = vsel %vm823, %v818, %v820
      %v825 = vsel %vm823, %v820, %v822
      %v827 = vsel %vm321, %v807, 0
      %v830 = vsel %vm321, %v808, 0
      %v833 = vsel %vm325, %v824, 0
      %v836 = vsel %vm325, %v825, 0
      %838 = vmatpush.bf16.msra.mxu0 0
      %839 = vmatpush.bf16.msra.mxu0 0
      %840 = vmatpush.bf16.msra.mxu0 0
      %841 = vmatpush.bf16.msra.mxu0 0
      %842 = vmatpush.bf16.msra.mxu0 0
      %843 = vmatpush.bf16.msra.mxu0 0
      %844 = vmatpush.bf16.msra.mxu0 0
      %845 = vmatpush.bf16.msra.mxu0 %v833
      %846 = vmatmul.bf16.gmra.mxu0 %v827
      %v847 = vpop.f32.mrf.mxu0
      %v848 = vadd.f32 0.0, %v847
      %v849 = vpop.f32.mrf.mxu0
      %v850 = vadd.f32 0.0, %v849
      %851 = vmatmul.bf16.gmra.mxu0 %v830
      %v852 = vpop.f32.mrf.mxu0
      %v853 = vadd.f32 0.0, %v852
      %v854 = vpop.f32.mrf.mxu0
      %v855 = vadd.f32 0.0, %v854
      %856 = vdwg.mxu0
      %857 = vmatpush.bf16.msra.mxu0 0
      %858 = vmatpush.bf16.msra.mxu0 0
      %859 = vmatpush.bf16.msra.mxu0 0
      %860 = vmatpush.bf16.msra.mxu0 0
      %861 = vmatpush.bf16.msra.mxu0 0
      %862 = vmatpush.bf16.msra.mxu0 0
      %863 = vmatpush.bf16.msra.mxu0 0
      %864 = vmatpush.bf16.msra.mxu0 %v836
      %865 = vmatmul.bf16.gmra.mxu0 %v827
      %v866 = vpop.f32.mrf.mxu0
      %v867 = vadd.f32 0.0, %v866
      %v868 = vpop.f32.mrf.mxu0
      %v869 = vadd.f32 0.0, %v868
      %870 = vmatmul.bf16.gmra.mxu0 %v830
      %v871 = vpop.f32.mrf.mxu0
      %v872 = vadd.f32 0.0, %v871
      %v873 = vpop.f32.mrf.mxu0
      %v874 = vadd.f32 0.0, %v873
      %875 = vdwg.mxu0
      %v876 = vadd.f32 %v785, %v848
      %v877 = vadd.f32 %v786, %v867
      %v878 = vadd.f32 %v787, %v850
      %v879 = vadd.f32 %v788, %v869
      %v880 = vadd.f32 %v789, %v853
      %v881 = vadd.f32 %v790, %v872
      %v882 = vadd.f32 %v791, %v855
      %v883 = vadd.f32 %v792, %v874
      %s884 = scalar_lea.vmem %s3, 80
      %v885 = vld [vmem:[%s884] sm:$0xf]
      %v886 = vld [vmem:[%s884 + $0x4] sm:$0xf]
      %v887 = vld [vmem:[%s884 + $0x8] sm:$0xf]
      %v888 = vld [vmem:[%s884 + $0xc] sm:$0xf]
      %v889 = vld [vmem:[#allocation2] sm:$0x3f]
      %v890 = vunpack.c.l.bf16 %v889
      %v891 = vunpack.c.h.bf16 %v889
      %892 = vrot.lane.b32.xlu0 %v578, 18
      %v893 = vpop.permute.xlu0 %892
      %v894 = vrot.slane %v893, 4
      %vm895 = vcmask 146432
      %v896 = vsel %vm895, %v894, %v893
      %v899 = vmul.f32 %v890, %v896
      %v900 = vmul.f32 %v891, %v894
      %903 = vst [vmem:[#allocation1] ss:$2 sm:$0xff] %v899
      %s904 = scalar_lea.vmem [#allocation1], 16
      %905 = vst [vmem:[%s904] ss:$2 sm:$0xff] %v900
      %v906 = vld.sshfl [vmem:[#allocation1] sm:$0xff pattern:$0x75316420]
      %v907 = vld.sshfl [vmem:[#allocation1 + $0x8] sm:$0xff pattern:$0x75316420]
      %v908 = vld.sshfl [vmem:[#allocation1 + $0x10] sm:$0xff pattern:$0x75316420]
      %v912 = vpack.c.bf16 %v906, %v906
      %v913 = vpack.c.bf16 %v907, %v907
      %v914 = vpack.c.bf16 %v908, %v908
      %v919 = vunpack.c.l.b16 %v885
      %v920 = vunpack.c.l.b16 %v886
      %v921 = vunpack.c.l.b16 %v887
      %v922 = vunpack.c.l.b16 %v888
      %v923 = vpack.c.b16 %v920, %v919
      %v924 = vpack.c.b16 %v922, %v921
      %928 = vrot.lane.b32.xlu0 %v912, 110
      %v929 = vpop.permute.xlu0 %928
      %930 = vrot.lane.b32.xlu0 %v913, 110
      %v931 = vpop.permute.xlu0 %930
      %932 = vrot.lane.b32.xlu0 %v914, 110
      %v933 = vpop.permute.xlu0 %932
      %vm934 = vcmask 900096
      %v935 = vsel %vm934, %v929, %v931
      %v936 = vsel %vm934, %v931, %v933
      %v938 = vsel %vm321, %v923, 0
      %v941 = vsel %vm321, %v924, 0
      %v944 = vsel %vm325, %v935, 0
      %v947 = vsel %vm325, %v936, 0
      %949 = vmatpush.bf16.msra.mxu0 0
      %950 = vmatpush.bf16.msra.mxu0 0
      %951 = vmatpush.bf16.msra.mxu0 0
      %952 = vmatpush.bf16.msra.mxu0 0
      %953 = vmatpush.bf16.msra.mxu0 0
      %954 = vmatpush.bf16.msra.mxu0 0
      %955 = vmatpush.bf16.msra.mxu0 0
      %956 = vmatpush.bf16.msra.mxu0 %v944
      %957 = vmatmul.bf16.gmra.mxu0 %v938
      %v958 = vpop.f32.mrf.mxu0
      %v959 = vadd.f32 0.0, %v958
      %v960 = vpop.f32.mrf.mxu0
      %v961 = vadd.f32 0.0, %v960
      %962 = vmatmul.bf16.gmra.mxu0 %v941
      %v963 = vpop.f32.mrf.mxu0
      %v964 = vadd.f32 0.0, %v963
      %v965 = vpop.f32.mrf.mxu0
      %v966 = vadd.f32 0.0, %v965
      %967 = vdwg.mxu0
      %968 = vmatpush.bf16.msra.mxu0 0
      %969 = vmatpush.bf16.msra.mxu0 0
      %970 = vmatpush.bf16.msra.mxu0 0
      %971 = vmatpush.bf16.msra.mxu0 0
      %972 = vmatpush.bf16.msra.mxu0 0
      %973 = vmatpush.bf16.msra.mxu0 0
      %974 = vmatpush.bf16.msra.mxu0 0
      %975 = vmatpush.bf16.msra.mxu0 %v947
      %976 = vmatmul.bf16.gmra.mxu0 %v938
      %v977 = vpop.f32.mrf.mxu0
      %v978 = vadd.f32 0.0, %v977
      %v979 = vpop.f32.mrf.mxu0
      %v980 = vadd.f32 0.0, %v979
      %981 = vmatmul.bf16.gmra.mxu0 %v941
      %v982 = vpop.f32.mrf.mxu0
      %v983 = vadd.f32 0.0, %v982
      %v984 = vpop.f32.mrf.mxu0
      %v985 = vadd.f32 0.0, %v984
      %986 = vdwg.mxu0
      %v987 = vadd.f32 %v876, %v959
      %v988 = vadd.f32 %v877, %v978
      %v989 = vadd.f32 %v878, %v961
      %v990 = vadd.f32 %v879, %v980
      %v991 = vadd.f32 %v880, %v964
      %v992 = vadd.f32 %v881, %v983
      %v993 = vadd.f32 %v882, %v966
      %v994 = vadd.f32 %v883, %v985
      %s995 = scalar_lea.vmem %s3, 96
      %v996 = vld [vmem:[%s995] sm:$0xf]
      %v997 = vld [vmem:[%s995 + $0x4] sm:$0xf]
      %v998 = vld [vmem:[%s995 + $0x8] sm:$0xf]
      %v999 = vld [vmem:[%s995 + $0xc] sm:$0xf]
      %v1000 = vld [vmem:[#allocation2] sm:$0x3f]
      %v1001 = vunpack.c.l.bf16 %v1000
      %v1002 = vunpack.c.h.bf16 %v1000
      %1003 = vrot.lane.b32.xlu0 %v401, 32
      %v1004 = vpop.permute.xlu0 %1003
      %v1005 = vrot.slane %v1004, 4
      %vm1006 = vcmask 261120
      %v1007 = vsel %vm1006, %v1005, %v1004
      %v1010 = vmul.f32 %v1001, %v1007
      %v1011 = vmul.f32 %v1002, %v1005
      %1014 = vst [vmem:[#allocation1] ss:$2 sm:$0xff] %v1010
      %s1015 = scalar_lea.vmem [#allocation1], 16
      %1016 = vst [vmem:[%s1015] ss:$2 sm:$0xff] %v1011
      %v1017 = vld.sshfl [vmem:[#allocation1] sm:$0xff pattern:$0x75316420]
      %v1018 = vld.sshfl [vmem:[#allocation1 + $0x8] sm:$0xff pattern:$0x75316420]
      %v1019 = vld.sshfl [vmem:[#allocation1 + $0x10] sm:$0xff pattern:$0x75316420]
      %v1023 = vpack.c.bf16 %v1017, %v1017
      %v1024 = vpack.c.bf16 %v1018, %v1018
      %v1025 = vpack.c.bf16 %v1019, %v1019
      %v1030 = vunpack.c.l.b16 %v996
      %v1031 = vunpack.c.l.b16 %v997
      %v1032 = vunpack.c.l.b16 %v998
      %v1033 = vunpack.c.l.b16 %v999
      %v1034 = vpack.c.b16 %v1031, %v1030
      %v1035 = vpack.c.b16 %v1033, %v1032
      %1039 = vrot.lane.b32.xlu0 %v1023, 96
      %v1040 = vpop.permute.xlu0 %1039
      %1041 = vrot.lane.b32.xlu0 %v1024, 96
      %v1042 = vpop.permute.xlu0 %1041
      %1043 = vrot.lane.b32.xlu0 %v1025, 96
      %v1044 = vpop.permute.xlu0 %1043
      %vm1045 = vcmask 785408
      %v1046 = vsel %vm1045, %v1040, %v1042
      %v1047 = vsel %vm1045, %v1042, %v1044
      %v1049 = vsel %vm321, %v1034, 0
      %v1052 = vsel %vm321, %v1035, 0
      %v1055 = vsel %vm325, %v1046, 0
      %v1058 = vsel %vm325, %v1047, 0
      %1060 = vmatpush.bf16.msra.mxu0 0
      %1061 = vmatpush.bf16.msra.mxu0 0
      %1062 = vmatpush.bf16.msra.mxu0 0
      %1063 = vmatpush.bf16.msra.mxu0 0
      %1064 = vmatpush.bf16.msra.mxu0 0
      %1065 = vmatpush.bf16.msra.mxu0 0
      %1066 = vmatpush.bf16.msra.mxu0 0
      %1067 = vmatpush.bf16.msra.mxu0 %v1055
      %1068 = vmatmul.bf16.gmra.mxu0 %v1049
      %v1069 = vpop.f32.mrf.mxu0
      %v1070 = vadd.f32 0.0, %v1069
      %v1071 = vpop.f32.mrf.mxu0
      %v1072 = vadd.f32 0.0, %v1071
      %1073 = vmatmul.bf16.gmra.mxu0 %v1052
      %v1074 = vpop.f32.mrf.mxu0
      %v1075 = vadd.f32 0.0, %v1074
      %v1076 = vpop.f32.mrf.mxu0
      %v1077 = vadd.f32 0.0, %v1076
      %1078 = vdwg.mxu0
      %1079 = vmatpush.bf16.msra.mxu0 0
      %1080 = vmatpush.bf16.msra.mxu0 0
      %1081 = vmatpush.bf16.msra.mxu0 0
      %1082 = vmatpush.bf16.msra.mxu0 0
      %1083 = vmatpush.bf16.msra.mxu0 0
      %1084 = vmatpush.bf16.msra.mxu0 0
      %1085 = vmatpush.bf16.msra.mxu0 0
      %1086 = vmatpush.bf16.msra.mxu0 %v1058
      %1087 = vmatmul.bf16.gmra.mxu0 %v1049
      %v1088 = vpop.f32.mrf.mxu0
      %v1089 = vadd.f32 0.0, %v1088
      %v1090 = vpop.f32.mrf.mxu0
      %v1091 = vadd.f32 0.0, %v1090
      %1092 = vmatmul.bf16.gmra.mxu0 %v1052
      %v1093 = vpop.f32.mrf.mxu0
      %v1094 = vadd.f32 0.0, %v1093
      %v1095 = vpop.f32.mrf.mxu0
      %v1096 = vadd.f32 0.0, %v1095
      %1097 = vdwg.mxu0
      %v1098 = vadd.f32 %v987, %v1070
      %v1099 = vadd.f32 %v988, %v1089
      %v1100 = vadd.f32 %v989, %v1072
      %v1101 = vadd.f32 %v990, %v1091
      %v1102 = vadd.f32 %v991, %v1075
      %v1103 = vadd.f32 %v992, %v1094
      %v1104 = vadd.f32 %v993, %v1077
      %v1105 = vadd.f32 %v994, %v1096
      %s1106 = scalar_lea.vmem %s3, 112
      %v1107 = vld [vmem:[%s1106] sm:$0xf]
      %v1108 = vld [vmem:[%s1106 + $0x4] sm:$0xf]
      %v1109 = vld [vmem:[%s1106 + $0x8] sm:$0xf]
      %v1110 = vld [vmem:[%s1106 + $0xc] sm:$0xf]
      %v1111 = vld [vmem:[#allocation2] sm:$0x3f]
      %v1116 = vunpack.c.l.b16 %v1107
      %v1117 = vunpack.c.l.b16 %v1108
      %v1118 = vunpack.c.l.b16 %v1109
      %v1119 = vunpack.c.l.b16 %v1110
      %v1120 = vpack.c.b16 %v1117, %v1116
      %v1121 = vpack.c.b16 %v1119, %v1118
      %1123 = vst [vmem:[#allocation1] ss:$4 sm:$0xff] %v1111
      %v1124 = vld.sshfl [vmem:[#allocation1] sm:$0xff pattern:$0x73625140]
      %v1126 = vld.sshfl [vmem:[#allocation1 + $0x8] sm:$0xff pattern:$0x73625140]
      %v1128 = vld.sshfl [vmem:[#allocation1 + $0x10] sm:$0xff pattern:$0x73625140]
      %1130 = vrot.lane.b32.xlu0 %v1124, 95
      %v1131 = vpop.permute.xlu0 %1130
      %1132 = vrot.lane.b32.xlu0 %v1126, 95
      %v1133 = vpop.permute.xlu0 %1132
      %1134 = vrot.lane.b32.xlu0 %v1128, 95
      %v1135 = vpop.permute.xlu0 %1134
      %vm1136 = vcmask 777216
      %v1137 = vsel %vm1136, %v1131, %v1133
      %v1138 = vsel %vm1136, %v1133, %v1135
      %v1140 = vsel %vm321, %v1120, 0
      %v1143 = vsel %vm321, %v1121, 0
      %v1146 = vsel %vm325, %v1137, 0
      %v1149 = vsel %vm325, %v1138, 0
      %1151 = vmatpush.bf16.msra.mxu0 0
      %1152 = vmatpush.bf16.msra.mxu0 0
      %1153 = vmatpush.bf16.msra.mxu0 0
      %1154 = vmatpush.bf16.msra.mxu0 0
      %1155 = vmatpush.bf16.msra.mxu0 0
      %1156 = vmatpush.bf16.msra.mxu0 0
      %1157 = vmatpush.bf16.msra.mxu0 0
      %1158 = vmatpush.bf16.msra.mxu0 %v1146
      %1159 = vmatmul.bf16.gmra.mxu0 %v1140
      %v1160 = vpop.f32.mrf.mxu0
      %v1161 = vadd.f32 0.0, %v1160
      %v1162 = vpop.f32.mrf.mxu0
      %v1163 = vadd.f32 0.0, %v1162
      %1164 = vmatmul.bf16.gmra.mxu0 %v1143
      %v1165 = vpop.f32.mrf.mxu0
      %v1166 = vadd.f32 0.0, %v1165
      %v1167 = vpop.f32.mrf.mxu0
      %v1168 = vadd.f32 0.0, %v1167
      %1169 = vdwg.mxu0
      %1170 = vmatpush.bf16.msra.mxu0 0
      %1171 = vmatpush.bf16.msra.mxu0 0
      %1172 = vmatpush.bf16.msra.mxu0 0
      %1173 = vmatpush.bf16.msra.mxu0 0
      %1174 = vmatpush.bf16.msra.mxu0 0
      %1175 = vmatpush.bf16.msra.mxu0 0
      %1176 = vmatpush.bf16.msra.mxu0 0
      %1177 = vmatpush.bf16.msra.mxu0 %v1149
      %1178 = vmatmul.bf16.gmra.mxu0 %v1140
      %v1179 = vpop.f32.mrf.mxu0
      %v1180 = vadd.f32 0.0, %v1179
      %v1181 = vpop.f32.mrf.mxu0
      %v1182 = vadd.f32 0.0, %v1181
      %1183 = vmatmul.bf16.gmra.mxu0 %v1143
      %v1184 = vpop.f32.mrf.mxu0
      %v1185 = vadd.f32 0.0, %v1184
      %v1186 = vpop.f32.mrf.mxu0
      %v1187 = vadd.f32 0.0, %v1186
      %1188 = vdwg.mxu0
      %v1189 = vadd.f32 %v1098, %v1161
      %v1190 = vadd.f32 %v1099, %v1180
      %v1191 = vadd.f32 %v1100, %v1163
      %v1192 = vadd.f32 %v1101, %v1182
      %v1193 = vadd.f32 %v1102, %v1166
      %v1194 = vadd.f32 %v1103, %v1185
      %v1195 = vadd.f32 %v1104, %v1168
      %v1196 = vadd.f32 %v1105, %v1187
      %s1197 = scalar_lea.vmem %s3, 128
      %v1198 = vld [vmem:[%s1197] sm:$0xf]
      %v1199 = vld [vmem:[%s1197 + $0x4] sm:$0xf]
      %v1200 = vld [vmem:[%s1197 + $0x8] sm:$0xf]
      %v1201 = vld [vmem:[%s1197 + $0xc] sm:$0xf]
      %v1202 = vld [vmem:[#allocation2] sm:$0x3f]
      %v1203 = vunpack.c.l.bf16 %v1202
      %v1204 = vunpack.c.h.bf16 %v1202
      %1205 = vrot.lane.b32.xlu0 %v578, 34
      %v1206 = vpop.permute.xlu0 %1205
      %v1207 = vrot.slane %v1206, 4
      %vm1208 = vcmask 277504
      %v1209 = vsel %vm1208, %v1207, %v1206
      %v1212 = vmul.f32 %v1203, %v1209
      %v1213 = vmul.f32 %v1204, %v1207
      %1216 = vst [vmem:[#allocation1] ss:$2 sm:$0xff] %v1212
      %s1217 = scalar_lea.vmem [#allocation1], 16
      %1218 = vst [vmem:[%s1217] ss:$2 sm:$0xff] %v1213
      %v1219 = vld.sshfl [vmem:[#allocation1] sm:$0xff pattern:$0x75316420]
      %v1220 = vld.sshfl [vmem:[#allocation1 + $0x8] sm:$0xff pattern:$0x75316420]
      %v1221 = vld.sshfl [vmem:[#allocation1 + $0x10] sm:$0xff pattern:$0x75316420]
      %v1225 = vpack.c.bf16 %v1219, %v1219
      %v1226 = vpack.c.bf16 %v1220, %v1220
      %v1227 = vpack.c.bf16 %v1221, %v1221
      %v1232 = vunpack.c.l.b16 %v1198
      %v1233 = vunpack.c.l.b16 %v1199
      %v1234 = vunpack.c.l.b16 %v1200
      %v1235 = vunpack.c.l.b16 %v1201
      %v1236 = vpack.c.b16 %v1233, %v1232
      %v1237 = vpack.c.b16 %v1235, %v1234
      %1241 = vrot.lane.b32.xlu0 %v1225, 94
      %v1242 = vpop.permute.xlu0 %1241
      %1243 = vrot.lane.b32.xlu0 %v1226, 94
      %v1244 = vpop.permute.xlu0 %1243
      %1245 = vrot.lane.b32.xlu0 %v1227, 94
      %v1246 = vpop.permute.xlu0 %1245
      %vm1247 = vcmask 769024
      %v1248 = vsel %vm1247, %v1242, %v1244
      %v1249 = vsel %vm1247, %v1244, %v1246
      %v1251 = vsel %vm321, %v1236, 0
      %v1254 = vsel %vm321, %v1237, 0
      %v1257 = vsel %vm325, %v1248, 0
      %v1260 = vsel %vm325, %v1249, 0
      %1262 = vmatpush.bf16.msra.mxu0 0
      %1263 = vmatpush.bf16.msra.mxu0 0
      %1264 = vmatpush.bf16.msra.mxu0 0
      %1265 = vmatpush.bf16.msra.mxu0 0
      %1266 = vmatpush.bf16.msra.mxu0 0
      %1267 = vmatpush.bf16.msra.mxu0 0
      %1268 = vmatpush.bf16.msra.mxu0 0
      %1269 = vmatpush.bf16.msra.mxu0 %v1257
      %1270 = vmatmul.bf16.gmra.mxu0 %v1251
      %v1271 = vpop.f32.mrf.mxu0
      %v1272 = vadd.f32 0.0, %v1271
      %v1273 = vpop.f32.mrf.mxu0
      %v1274 = vadd.f32 0.0, %v1273
      %1275 = vmatmul.bf16.gmra.mxu0 %v1254
      %v1276 = vpop.f32.mrf.mxu0
      %v1277 = vadd.f32 0.0, %v1276
      %v1278 = vpop.f32.mrf.mxu0
      %v1279 = vadd.f32 0.0, %v1278
      %1280 = vdwg.mxu0
      %1281 = vmatpush.bf16.msra.mxu0 0
      %1282 = vmatpush.bf16.msra.mxu0 0
      %1283 = vmatpush.bf16.msra.mxu0 0
      %1284 = vmatpush.bf16.msra.mxu0 0
      %1285 = vmatpush.bf16.msra.mxu0 0
      %1286 = vmatpush.bf16.msra.mxu0 0
      %1287 = vmatpush.bf16.msra.mxu0 0
      %1288 = vmatpush.bf16.msra.mxu0 %v1260
      %1289 = vmatmul.bf16.gmra.mxu0 %v1251
      %v1290 = vpop.f32.mrf.mxu0
      %v1291 = vadd.f32 0.0, %v1290
      %v1292 = vpop.f32.mrf.mxu0
      %v1293 = vadd.f32 0.0, %v1292
      %1294 = vmatmul.bf16.gmra.mxu0 %v1254
      %v1295 = vpop.f32.mrf.mxu0
      %v1296 = vadd.f32 0.0, %v1295
      %v1297 = vpop.f32.mrf.mxu0
      %v1298 = vadd.f32 0.0, %v1297
      %1299 = vdwg.mxu0
      %v1300 = vadd.f32 %v1189, %v1272
      %v1301 = vadd.f32 %v1190, %v1291
      %v1302 = vadd.f32 %v1191, %v1274
      %v1303 = vadd.f32 %v1192, %v1293
      %v1304 = vadd.f32 %v1193, %v1277
      %v1305 = vadd.f32 %v1194, %v1296
      %v1306 = vadd.f32 %v1195, %v1279
      %v1307 = vadd.f32 %v1196, %v1298
      %v1308 = vld [vmem:[%s4] sm:$0xff]
      %v1309 = vld [vmem:[%s4 + $0x8] sm:$0xff]
      %v1310 = vld [vmem:[%s4 + $0x10] sm:$0xff]
      %v1311 = vld [vmem:[%s4 + $0x18] sm:$0xff]
      %1313 = vset.pattern.permute.xlu0 0
      %1314 = vperm.xlu0 %1313, %v1308
      %v1315 = vpop.permute.xlu0 %1314
      %1318 = vset.pattern.permute.xlu0 0
      %1319 = vperm.xlu0 %1318, %v1309
      %v1320 = vpop.permute.xlu0 %1319
      %1323 = vset.pattern.permute.xlu0 0
      %1324 = vperm.xlu0 %1323, %v1310
      %v1325 = vpop.permute.xlu0 %1324
      %1328 = vset.pattern.permute.xlu0 0
      %1329 = vperm.xlu0 %1328, %v1311
      %v1330 = vpop.permute.xlu0 %1329
      %v1332 = vadd.f32 %v1300, %v1315
      %v1333 = vadd.f32 %v1301, %v1315
      %v1334 = vadd.f32 %v1302, %v1320
      %v1335 = vadd.f32 %v1303, %v1320
      %v1336 = vadd.f32 %v1304, %v1325
      %v1337 = vadd.f32 %v1305, %v1325
      %v1338 = vadd.f32 %v1306, %v1330
      %v1339 = vadd.f32 %v1307, %v1330
      %v1340 = vxor.u32 %v1332, 2147483648
      %v1341 = vxor.u32 %v1333, 2147483648
      %v1342 = vxor.u32 %v1334, 2147483648
      %v1343 = vxor.u32 %v1335, 2147483648
      %v1344 = vxor.u32 %v1336, 2147483648
      %v1345 = vxor.u32 %v1337, 2147483648
      %v1346 = vxor.u32 %v1338, 2147483648
      %v1347 = vxor.u32 %v1339, 2147483648
      %v1348 = vmul.f32 %v1340, 1.442695
      %v1349 = vpow.pop %v1348
      %v1350 = vmul.f32 %v1341, 1.442695
      %v1351 = vpow.pop %v1350
      %v1352 = vmul.f32 %v1342, 1.442695
      %v1353 = vpow.pop %v1352
      %v1354 = vmul.f32 %v1343, 1.442695
      %v1355 = vpow.pop %v1354
      %v1356 = vmul.f32 %v1344, 1.442695
      %v1357 = vpow.pop %v1356
      %v1358 = vmul.f32 %v1345, 1.442695
      %v1359 = vpow.pop %v1358
      %v1360 = vmul.f32 %v1346, 1.442695
      %v1361 = vpow.pop %v1360
      %v1362 = vmul.f32 %v1347, 1.442695
      %v1363 = vpow.pop %v1362
      %v1364 = vadd.f32 %v1349, 1.0
      %v1365 = vadd.f32 %v1351, 1.0
      %v1366 = vadd.f32 %v1353, 1.0
      %v1367 = vadd.f32 %v1355, 1.0
      %v1368 = vadd.f32 %v1357, 1.0
      %v1369 = vadd.f32 %v1359, 1.0
      %v1370 = vadd.f32 %v1361, 1.0
      %v1371 = vadd.f32 %v1363, 1.0
      %v1372 = vrcp.pop %v1364
      %v1373 = vmul.f32 %v1364, %v1372
      %v1374 = vsub.f32 1.0, %v1373
      %v1375 = vmul.f32 %v1372, %v1374
      %v1376 = vadd.f32 %v1372, %v1375
      %vm1377 = vweird.f32 %v1364
      %vm1378 = vweird.f32 %v1372
      %vm1379 = vmor %vm1377, %vm1378
      %v1380 = vsel %vm1379, %v1372, %v1376
      %v1381 = vand.u32 2147483647, %v1364
      %vm1382 = vcmp.eq.f32.partialorder %v1381, 8.507059e+37
      %v1383 = vand.u32 %v1364, 2147483648
      %v1384 = vor.u32 1.1754944e-38, %v1383
      %v1385 = vsel %vm1382, %v1384, %v1380
      %v1386 = vmul.f32 1.0, %v1385
      %v1387 = vrcp.pop %v1365
      %v1388 = vmul.f32 %v1365, %v1387
      %v1389 = vsub.f32 1.0, %v1388
      %v1390 = vmul.f32 %v1387, %v1389
      %v1391 = vadd.f32 %v1387, %v1390
      %vm1392 = vweird.f32 %v1365
      %vm1393 = vweird.f32 %v1387
      %vm1394 = vmor %vm1392, %vm1393
      %v1395 = vsel %vm1394, %v1387, %v1391
      %v1396 = vand.u32 2147483647, %v1365
      %vm1397 = vcmp.eq.f32.partialorder %v1396, 8.507059e+37
      %v1398 = vand.u32 %v1365, 2147483648
      %v1399 = vor.u32 1.1754944e-38, %v1398
      %v1400 = vsel %vm1397, %v1399, %v1395
      %v1401 = vmul.f32 1.0, %v1400
      %v1402 = vrcp.pop %v1366
      %v1403 = vmul.f32 %v1366, %v1402
      %v1404 = vsub.f32 1.0, %v1403
      %v1405 = vmul.f32 %v1402, %v1404
      %v1406 = vadd.f32 %v1402, %v1405
      %vm1407 = vweird.f32 %v1366
      %vm1408 = vweird.f32 %v1402
      %vm1409 = vmor %vm1407, %vm1408
      %v1410 = vsel %vm1409, %v1402, %v1406
      %v1411 = vand.u32 2147483647, %v1366
      %vm1412 = vcmp.eq.f32.partialorder %v1411, 8.507059e+37
      %v1413 = vand.u32 %v1366, 2147483648
      %v1414 = vor.u32 1.1754944e-38, %v1413
      %v1415 = vsel %vm1412, %v1414, %v1410
      %v1416 = vmul.f32 1.0, %v1415
      %v1417 = vrcp.pop %v1367
      %v1418 = vmul.f32 %v1367, %v1417
      %v1419 = vsub.f32 1.0, %v1418
      %v1420 = vmul.f32 %v1417, %v1419
      %v1421 = vadd.f32 %v1417, %v1420
      %vm1422 = vweird.f32 %v1367
      %vm1423 = vweird.f32 %v1417
      %vm1424 = vmor %vm1422, %vm1423
      %v1425 = vsel %vm1424, %v1417, %v1421
      %v1426 = vand.u32 2147483647, %v1367
      %vm1427 = vcmp.eq.f32.partialorder %v1426, 8.507059e+37
      %v1428 = vand.u32 %v1367, 2147483648
      %v1429 = vor.u32 1.1754944e-38, %v1428
      %v1430 = vsel %vm1427, %v1429, %v1425
      %v1431 = vmul.f32 1.0, %v1430
      %v1432 = vrcp.pop %v1368
      %v1433 = vmul.f32 %v1368, %v1432
      %v1434 = vsub.f32 1.0, %v1433
      %v1435 = vmul.f32 %v1432, %v1434
      %v1436 = vadd.f32 %v1432, %v1435
      %vm1437 = vweird.f32 %v1368
      %vm1438 = vweird.f32 %v1432
      %vm1439 = vmor %vm1437, %vm1438
      %v1440 = vsel %vm1439, %v1432, %v1436
      %v1441 = vand.u32 2147483647, %v1368
      %vm1442 = vcmp.eq.f32.partialorder %v1441, 8.507059e+37
      %v1443 = vand.u32 %v1368, 2147483648
      %v1444 = vor.u32 1.1754944e-38, %v1443
      %v1445 = vsel %vm1442, %v1444, %v1440
      %v1446 = vmul.f32 1.0, %v1445
      %v1447 = vrcp.pop %v1369
      %v1448 = vmul.f32 %v1369, %v1447
      %v1449 = vsub.f32 1.0, %v1448
      %v1450 = vmul.f32 %v1447, %v1449
      %v1451 = vadd.f32 %v1447, %v1450
      %vm1452 = vweird.f32 %v1369
      %vm1453 = vweird.f32 %v1447
      %vm1454 = vmor %vm1452, %vm1453
      %v1455 = vsel %vm1454, %v1447, %v1451
      %v1456 = vand.u32 2147483647, %v1369
      %vm1457 = vcmp.eq.f32.partialorder %v1456, 8.507059e+37
      %v1458 = vand.u32 %v1369, 2147483648
      %v1459 = vor.u32 1.1754944e-38, %v1458
      %v1460 = vsel %vm1457, %v1459, %v1455
      %v1461 = vmul.f32 1.0, %v1460
      %v1462 = vrcp.pop %v1370
      %v1463 = vmul.f32 %v1370, %v1462
      %v1464 = vsub.f32 1.0, %v1463
      %v1465 = vmul.f32 %v1462, %v1464
      %v1466 = vadd.f32 %v1462, %v1465
      %vm1467 = vweird.f32 %v1370
      %vm1468 = vweird.f32 %v1462
      %vm1469 = vmor %vm1467, %vm1468
      %v1470 = vsel %vm1469, %v1462, %v1466
      %v1471 = vand.u32 2147483647, %v1370
      %vm1472 = vcmp.eq.f32.partialorder %v1471, 8.507059e+37
      %v1473 = vand.u32 %v1370, 2147483648
      %v1474 = vor.u32 1.1754944e-38, %v1473
      %v1475 = vsel %vm1472, %v1474, %v1470
      %v1476 = vmul.f32 1.0, %v1475
      %v1477 = vrcp.pop %v1371
      %v1478 = vmul.f32 %v1371, %v1477
      %v1479 = vsub.f32 1.0, %v1478
      %v1480 = vmul.f32 %v1477, %v1479
      %v1481 = vadd.f32 %v1477, %v1480
      %vm1482 = vweird.f32 %v1371
      %vm1483 = vweird.f32 %v1477
      %vm1484 = vmor %vm1482, %vm1483
      %v1485 = vsel %vm1484, %v1477, %v1481
      %v1486 = vand.u32 2147483647, %v1371
      %vm1487 = vcmp.eq.f32.partialorder %v1486, 8.507059e+37
      %v1488 = vand.u32 %v1371, 2147483648
      %v1489 = vor.u32 1.1754944e-38, %v1488
      %v1490 = vsel %vm1487, %v1489, %v1485
      %v1491 = vmul.f32 1.0, %v1490
      %v1492 = vmul.f32 %v1332, %v1386
      %v1493 = vmul.f32 %v1333, %v1401
      %v1494 = vmul.f32 %v1334, %v1416
      %v1495 = vmul.f32 %v1335, %v1431
      %v1496 = vmul.f32 %v1336, %v1446
      %v1497 = vmul.f32 %v1337, %v1461
      %v1498 = vmul.f32 %v1338, %v1476
      %v1499 = vmul.f32 %v1339, %v1491
      %v1500 = vpack.c.bf16 %v1493, %v1492
      %v1501 = vpack.c.bf16 %v1495, %v1494
      %v1502 = vpack.c.bf16 %v1497, %v1496
      %v1503 = vpack.c.bf16 %v1499, %v1498
      %1504 = vst [vmem:[#allocation3] sm:$0xff] 0
      %vm1505 = vcmask 273408
      %1506 = vst.msk [vmem:[#allocation3 + $0x8] sm:$0xf] %vm1505, 0
      %1507 = vst [vmem:[#allocation3 + $0xc] sm:$0xff] 0
      %1508 = vst.msk [vmem:[#allocation3 + $0x14] sm:$0xf] %vm1505, 0
      %1509 = vst [vmem:[#allocation3 + $0x18] sm:$0xff] 0
      %1510 = vst.msk [vmem:[#allocation3 + $0x20] sm:$0xf] %vm1505, 0
      %1511 = vst [vmem:[#allocation3 + $0x24] sm:$0xff] 0
      %1512 = vst.msk [vmem:[#allocation3 + $0x2c] sm:$0xf] %vm1505, 0
      %1517 = vrot.lane.b32.xlu0 %v1500, 17
      %v1518 = vpop.permute.xlu0 %1517
      %1519 = vrot.lane.b32.xlu0 %v1501, 17
      %v1520 = vpop.permute.xlu0 %1519
      %1521 = vrot.lane.b32.xlu0 %v1502, 17
      %v1522 = vpop.permute.xlu0 %1521
      %1523 = vrot.lane.b32.xlu0 %v1503, 17
      %v1524 = vpop.permute.xlu0 %1523
      %v1525 = vrot.slane %v1518, 4
      %v1526 = vrot.slane %v1520, 4
      %v1527 = vrot.slane %v1522, 4
      %v1528 = vrot.slane %v1524, 4
      %v1529 = vsel %vm371, %v1525, %v1518
      %v1530 = vsel %vm371, %v1526, %v1520
      %v1531 = vsel %vm371, %v1527, %v1522
      %v1532 = vsel %vm371, %v1528, %v1524
      %vm1541 = vcmask 1043592
      %vm1542 = vcmask 1047556
      %vm1543 = vmor %vm1542, %vm1541
      %1544 = vst.msk [vmem:[#allocation3] sm:$0xff] %vm1543, %v1529
      %vm1545 = vcmask 134144
      %1546 = vst.msk [vmem:[#allocation3 + $0x8] sm:$0xf] %vm1545, %v1525
      %1547 = vst.msk [vmem:[#allocation3 + $0xc] sm:$0xff] %vm1543, %v1530
      %1548 = vst.msk [vmem:[#allocation3 + $0x14] sm:$0xf] %vm1545, %v1526
      %1549 = vst.msk [vmem:[#allocation3 + $0x18] sm:$0xff] %vm1543, %v1531
      %1550 = vst.msk [vmem:[#allocation3 + $0x20] sm:$0xf] %vm1545, %v1527
      %1551 = vst.msk [vmem:[#allocation3 + $0x24] sm:$0xff] %vm1543, %v1532
      %1552 = vst.msk [vmem:[#allocation3 + $0x2c] sm:$0xf] %vm1545, %v1528
      %v1553 = vld [vmem:[%s5] sm:$0x3]
      %v1554 = vld [vmem:[#allocation3] sm:$0xff]
      %v1555 = vld [vmem:[#allocation3 + $0xc] sm:$0xff]
      %v1556 = vld [vmem:[#allocation3 + $0x18] sm:$0xff]
      %v1557 = vld [vmem:[#allocation3 + $0x24] sm:$0xff]
      %1558 = vst [vmem:[#allocation1] ss:$9 sm:$0xff] %v307
      %v1559 = vld [vmem:[#allocation1] sm:$0xff]
      %v1560 = vld [vmem:[#allocation1 + $0x9] sm:$0xff]
      %v1561 = vpack.i.b16 %v1559, %v1559
      %v1563 = vperm.slane %v1561, 0
      %v1564 = vpack.i.b16 %v1560, %v1560
      %v1566 = vperm.slane %v1564, 0
      %v1567 = vunpack.c.l.bf16 %v1554
      %v1568 = vunpack.c.h.bf16 %v1554
      %v1569 = vunpack.c.l.bf16 %v1555
      %v1570 = vunpack.c.h.bf16 %v1555
      %v1571 = vunpack.c.l.bf16 %v1556
      %v1572 = vunpack.c.h.bf16 %v1556
      %v1573 = vunpack.c.l.bf16 %v1557
      %v1574 = vunpack.c.h.bf16 %v1557
      %v1575 = vunpack.c.l.bf16 %v1563
      %v1576 = vunpack.c.l.bf16 %v1566
      %v1577 = vmul.f32 %v1567, %v1575
      %v1578 = vmul.f32 %v1568, %v1576
      %v1579 = vmul.f32 %v1569, %v1575
      %v1580 = vmul.f32 %v1570, %v1576
      %v1581 = vmul.f32 %v1571, %v1575
      %v1582 = vmul.f32 %v1572, %v1576
      %v1583 = vmul.f32 %v1573, %v1575
      %v1584 = vmul.f32 %v1574, %v1576
      %v1585 = vpack.c.bf16 %v1579, %v1577
      %v1586 = vpack.c.bf16 %v1580, %v1578
      %v1587 = vpack.c.bf16 %v1583, %v1581
      %v1588 = vpack.c.bf16 %v1584, %v1582
      %s1589 = scalar_lea.vmem %s5, 2
      %v1590 = vld [vmem:[%s1589] sm:$0x3]
      %v1591 = vld [vmem:[#allocation3] sm:$0xff]
      %v1592 = vld [vmem:[#allocation3 + $0x8] sm:$0xf]
      %v1593 = vld [vmem:[#allocation3 + $0xc] sm:$0xff]
      %v1594 = vld [vmem:[#allocation3 + $0x14] sm:$0xf]
      %v1595 = vld [vmem:[#allocation3 + $0x18] sm:$0xff]
      %v1596 = vld [vmem:[#allocation3 + $0x20] sm:$0xf]
      %v1597 = vld [vmem:[#allocation3 + $0x24] sm:$0xff]
      %v1598 = vld [vmem:[#allocation3 + $0x2c] sm:$0xf]
      %v1607 = vunpack.c.l.b16 %v1591
      %v1608 = vunpack.c.h.b16 %v1591
      %v1609 = vunpack.c.l.b16 %v1592
      %v1610 = vunpack.c.l.b16 %v1593
      %v1611 = vunpack.c.h.b16 %v1593
      %v1612 = vunpack.c.l.b16 %v1594
      %v1613 = vunpack.c.l.b16 %v1595
      %v1614 = vunpack.c.h.b16 %v1595
      %v1615 = vunpack.c.l.b16 %v1596
      %v1616 = vunpack.c.l.b16 %v1597
      %v1617 = vunpack.c.h.b16 %v1597
      %v1618 = vunpack.c.l.b16 %v1598
      %v1619 = vpack.c.b16 %v1610, %v1607
      %v1620 = vpack.c.b16 %v1611, %v1608
      %v1621 = vpack.c.b16 %v1612, %v1609
      %v1622 = vpack.c.b16 %v1616, %v1613
      %v1623 = vpack.c.b16 %v1617, %v1614
      %v1624 = vpack.c.b16 %v1618, %v1615
      %1625 = vrot.lane.b32.xlu0 %v1619, 127
      %v1626 = vpop.permute.xlu0 %1625
      %1627 = vrot.lane.b32.xlu0 %v1620, 127
      %v1628 = vpop.permute.xlu0 %1627
      %1629 = vrot.lane.b32.xlu0 %v1621, 127
      %v1630 = vpop.permute.xlu0 %1629
      %1631 = vrot.lane.b32.xlu0 %v1622, 127
      %v1632 = vpop.permute.xlu0 %1631
      %1633 = vrot.lane.b32.xlu0 %v1623, 127
      %v1634 = vpop.permute.xlu0 %1633
      %1635 = vrot.lane.b32.xlu0 %v1624, 127
      %v1636 = vpop.permute.xlu0 %1635
      %v1637 = vsel %vm442, %v1626, %v1628
      %v1638 = vsel %vm442, %v1628, %v1630
      %v1639 = vsel %vm442, %v1632, %v1634
      %v1640 = vsel %vm442, %v1634, %v1636
      %v1646 = vsel %vm1006, %v1590, 0
      %1648 = vmatpush.bf16.msra.mxu0 0
      %1649 = vmatpush.bf16.msra.mxu0 0
      %1650 = vmatpush.bf16.msra.mxu0 0
      %1651 = vmatpush.bf16.msra.mxu0 0
      %1652 = vmatpush.bf16.msra.mxu0 0
      %1653 = vmatpush.bf16.msra.mxu0 0
      %1654 = vmatpush.bf16.msra.mxu0 %v1639
      %1655 = vmatpush.bf16.msra.mxu0 %v1637
      %1656 = vmatmul.bf16.gmra.mxu0 %v1646
      %v1657 = vpop.f32.mrf.mxu0
      %v1658 = vadd.f32 0.0, %v1657
      %v1659 = vpop.f32.mrf.mxu0
      %1660 = vdwg.mxu0
      %1661 = vmatpush.bf16.msra.mxu0 0
      %1662 = vmatpush.bf16.msra.mxu0 0
      %1663 = vmatpush.bf16.msra.mxu0 0
      %1664 = vmatpush.bf16.msra.mxu0 0
      %1665 = vmatpush.bf16.msra.mxu0 0
      %1666 = vmatpush.bf16.msra.mxu0 0
      %1667 = vmatpush.bf16.msra.mxu0 %v1640
      %1668 = vmatpush.bf16.msra.mxu0 %v1638
      %1669 = vmatmul.bf16.gmra.mxu0 %v1646
      %v1670 = vpop.f32.mrf.mxu0
      %v1671 = vadd.f32 0.0, %v1670
      %v1672 = vpop.f32.mrf.mxu0
      %1673 = vdwg.mxu0
      %v1675 = vsel %vm1006, %v1553, 0
      %1677 = vmatpush.bf16.msra.mxu0 0
      %1678 = vmatpush.bf16.msra.mxu0 0
      %1679 = vmatpush.bf16.msra.mxu0 0
      %1680 = vmatpush.bf16.msra.mxu0 0
      %1681 = vmatpush.bf16.msra.mxu0 0
      %1682 = vmatpush.bf16.msra.mxu0 0
      %1683 = vmatpush.bf16.msra.mxu0 %v1587
      %1684 = vmatpush.bf16.msra.mxu0 %v1585
      %1685 = vmatmul.bf16.gmra.mxu0 %v1675
      %v1686 = vpop.f32.mrf.mxu0
      %v1687 = vadd.f32 %v1658, %v1686
      %v1688 = vpop.f32.mrf.mxu0
      %1689 = vdwg.mxu0
      %1690 = vmatpush.bf16.msra.mxu0 0
      %1691 = vmatpush.bf16.msra.mxu0 0
      %1692 = vmatpush.bf16.msra.mxu0 0
      %1693 = vmatpush.bf16.msra.mxu0 0
      %1694 = vmatpush.bf16.msra.mxu0 0
      %1695 = vmatpush.bf16.msra.mxu0 0
      %1696 = vmatpush.bf16.msra.mxu0 %v1588
      %1697 = vmatpush.bf16.msra.mxu0 %v1586
      %1698 = vmatmul.bf16.gmra.mxu0 %v1675
      %v1699 = vpop.f32.mrf.mxu0
      %v1700 = vadd.f32 %v1671, %v1699
      %v1701 = vpop.f32.mrf.mxu0
      %1702 = vdwg.mxu0
      %s1703 = scalar_lea.vmem %s5, 4
      %v1704 = vld [vmem:[%s1703] sm:$0x3]
      %v1705 = vunpack.c.l.bf16 %v1591
      %v1706 = vunpack.c.h.bf16 %v1591
      %v1707 = vunpack.c.l.bf16 %v1592
      %v1708 = vunpack.c.l.bf16 %v1593
      %v1709 = vunpack.c.h.bf16 %v1593
      %v1710 = vunpack.c.l.bf16 %v1594
      %v1711 = vunpack.c.l.bf16 %v1595
      %v1712 = vunpack.c.h.bf16 %v1595
      %v1713 = vunpack.c.l.bf16 %v1596
      %v1714 = vunpack.c.l.bf16 %v1597
      %v1715 = vunpack.c.h.bf16 %v1597
      %v1716 = vunpack.c.l.bf16 %v1598
      %1719 = vrot.lane.b32.xlu0 %v1575, 16
      %v1720 = vpop.permute.xlu0 %1719
      %1721 = vrot.lane.b32.xlu0 %v1576, 16
      %v1722 = vpop.permute.xlu0 %1721
      %v1723 = vsel %vm693, %v1720, %v1722
      %v1727 = vmul.f32 %v1705, %v1720
      %v1728 = vmul.f32 %v1706, %v1723
      %v1729 = vmul.f32 %v1707, %v1722
      %v1730 = vmul.f32 %v1708, %v1720
      %v1731 = vmul.f32 %v1709, %v1723
      %v1732 = vmul.f32 %v1710, %v1722
      %v1733 = vmul.f32 %v1711, %v1720
      %v1734 = vmul.f32 %v1712, %v1723
      %v1735 = vmul.f32 %v1713, %v1722
      %v1736 = vmul.f32 %v1714, %v1720
      %v1737 = vmul.f32 %v1715, %v1723
      %v1738 = vmul.f32 %v1716, %v1722
      %v1739 = vpack.c.bf16 %v1730, %v1727
      %v1740 = vpack.c.bf16 %v1731, %v1728
      %v1741 = vpack.c.bf16 %v1732, %v1729
      %v1742 = vpack.c.bf16 %v1736, %v1733
      %v1743 = vpack.c.bf16 %v1737, %v1734
      %v1744 = vpack.c.bf16 %v1738, %v1735
      %1751 = vrot.lane.b32.xlu0 %v1739, 112
      %v1752 = vpop.permute.xlu0 %1751
      %1753 = vrot.lane.b32.xlu0 %v1740, 112
      %v1754 = vpop.permute.xlu0 %1753
      %1755 = vrot.lane.b32.xlu0 %v1741, 112
      %v1756 = vpop.permute.xlu0 %1755
      %1757 = vrot.lane.b32.xlu0 %v1742, 112
      %v1758 = vpop.permute.xlu0 %1757
      %1759 = vrot.lane.b32.xlu0 %v1743, 112
      %v1760 = vpop.permute.xlu0 %1759
      %1761 = vrot.lane.b32.xlu0 %v1744, 112
      %v1762 = vpop.permute.xlu0 %1761
      %v1763 = vsel %vm732, %v1752, %v1754
      %v1764 = vsel %vm732, %v1754, %v1756
      %v1765 = vsel %vm732, %v1758, %v1760
      %v1766 = vsel %vm732, %v1760, %v1762
      %v1772 = vsel %vm1006, %v1704, 0
      %1774 = vmatpush.bf16.msra.mxu0 0
      %1775 = vmatpush.bf16.msra.mxu0 0
      %1776 = vmatpush.bf16.msra.mxu0 0
      %1777 = vmatpush.bf16.msra.mxu0 0
      %1778 = vmatpush.bf16.msra.mxu0 0
      %1779 = vmatpush.bf16.msra.mxu0 0
      %1780 = vmatpush.bf16.msra.mxu0 %v1765
      %1781 = vmatpush.bf16.msra.mxu0 %v1763
      %1782 = vmatmul.bf16.gmra.mxu0 %v1772
      %v1783 = vpop.f32.mrf.mxu0
      %v1784 = vadd.f32 0.0, %v1783
      %v1785 = vpop.f32.mrf.mxu0
      %1786 = vdwg.mxu0
      %1787 = vmatpush.bf16.msra.mxu0 0
      %1788 = vmatpush.bf16.msra.mxu0 0
      %1789 = vmatpush.bf16.msra.mxu0 0
      %1790 = vmatpush.bf16.msra.mxu0 0
      %1791 = vmatpush.bf16.msra.mxu0 0
      %1792 = vmatpush.bf16.msra.mxu0 0
      %1793 = vmatpush.bf16.msra.mxu0 %v1766
      %1794 = vmatpush.bf16.msra.mxu0 %v1764
      %1795 = vmatmul.bf16.gmra.mxu0 %v1772
      %v1796 = vpop.f32.mrf.mxu0
      %v1797 = vadd.f32 0.0, %v1796
      %v1798 = vpop.f32.mrf.mxu0
      %1799 = vdwg.mxu0
      %v1800 = vadd.f32 %v1687, %v1784
      %v1801 = vadd.f32 %v1700, %v1797
      %s1802 = scalar_lea.vmem %s5, 6
      %v1803 = vld [vmem:[%s1802] sm:$0x3]
      %1804 = vrot.lane.b32.xlu0 %v1619, 111
      %v1805 = vpop.permute.xlu0 %1804
      %1806 = vrot.lane.b32.xlu0 %v1620, 111
      %v1807 = vpop.permute.xlu0 %1806
      %1808 = vrot.lane.b32.xlu0 %v1621, 111
      %v1809 = vpop.permute.xlu0 %1808
      %1810 = vrot.lane.b32.xlu0 %v1622, 111
      %v1811 = vpop.permute.xlu0 %1810
      %1812 = vrot.lane.b32.xlu0 %v1623, 111
      %v1813 = vpop.permute.xlu0 %1812
      %1814 = vrot.lane.b32.xlu0 %v1624, 111
      %v1815 = vpop.permute.xlu0 %1814
      %v1816 = vsel %vm823, %v1805, %v1807
      %v1817 = vsel %vm823, %v1807, %v1809
      %v1818 = vsel %vm823, %v1811, %v1813
      %v1819 = vsel %vm823, %v1813, %v1815
      %v1825 = vsel %vm1006, %v1803, 0
      %1827 = vmatpush.bf16.msra.mxu0 0
      %1828 = vmatpush.bf16.msra.mxu0 0
      %1829 = vmatpush.bf16.msra.mxu0 0
      %1830 = vmatpush.bf16.msra.mxu0 0
      %1831 = vmatpush.bf16.msra.mxu0 0
      %1832 = vmatpush.bf16.msra.mxu0 0
      %1833 = vmatpush.bf16.msra.mxu0 %v1818
      %1834 = vmatpush.bf16.msra.mxu0 %v1816
      %1835 = vmatmul.bf16.gmra.mxu0 %v1825
      %v1836 = vpop.f32.mrf.mxu0
      %v1837 = vadd.f32 0.0, %v1836
      %v1838 = vpop.f32.mrf.mxu0
      %1839 = vdwg.mxu0
      %1840 = vmatpush.bf16.msra.mxu0 0
      %1841 = vmatpush.bf16.msra.mxu0 0
      %1842 = vmatpush.bf16.msra.mxu0 0
      %1843 = vmatpush.bf16.msra.mxu0 0
      %1844 = vmatpush.bf16.msra.mxu0 0
      %1845 = vmatpush.bf16.msra.mxu0 0
      %1846 = vmatpush.bf16.msra.mxu0 %v1819
      %1847 = vmatpush.bf16.msra.mxu0 %v1817
      %1848 = vmatmul.bf16.gmra.mxu0 %v1825
      %v1849 = vpop.f32.mrf.mxu0
      %v1850 = vadd.f32 0.0, %v1849
      %v1851 = vpop.f32.mrf.mxu0
      %1852 = vdwg.mxu0
      %v1853 = vadd.f32 %v1800, %v1837
      %v1854 = vadd.f32 %v1801, %v1850
      %v1855 = vld [vmem:[%s6] sm:$0x7]
      %1857 = vset.pattern.permute.xlu0 0
      %1858 = vperm.xlu0 %1857, %v1855
      %v1859 = vpop.permute.xlu0 %1858
      %v1861 = vadd.f32 %v1853, %v1859
      %v1862 = vadd.f32 %v1854, %v1859
      %v1865 = vrot.slane %v1862, 4
      %v1866 = vsel %vm400, %v1861, %v1865
      %1868 = vst [vmem:[%s305] sm:$0x77] %v1866
      %s1869 = scalar_lea.vmem %s5, 8
      %v1870 = vld [vmem:[%s1869] sm:$0x3]
      %v1871 = vld [vmem:[#allocation3] sm:$0xff]
      %v1872 = vld [vmem:[#allocation3 + $0x8] sm:$0xf]
      %v1873 = vld [vmem:[#allocation3 + $0xc] sm:$0xff]
      %v1874 = vld [vmem:[#allocation3 + $0x14] sm:$0xf]
      %v1875 = vld [vmem:[#allocation3 + $0x18] sm:$0xff]
      %v1876 = vld [vmem:[#allocation3 + $0x20] sm:$0xf]
      %v1877 = vld [vmem:[#allocation3 + $0x24] sm:$0xff]
      %v1878 = vld [vmem:[#allocation3 + $0x2c] sm:$0xf]
      %s1879 = scalar_lea.vmem %s5, 10
      %v1880 = vld [vmem:[%s1879] sm:$0x3]
      %1881 = vst [vmem:[#allocation1] ss:$9 sm:$0xff] %v308
      %v1882 = vld [vmem:[#allocation1] sm:$0xff]
      %v1883 = vld [vmem:[#allocation1 + $0x9] sm:$0xff]
      %v1884 = vpack.i.b16 %v1882, %v1882
      %v1886 = vperm.slane %v1884, 0
      %v1887 = vpack.i.b16 %v1883, %v1883
      %v1889 = vperm.slane %v1887, 0
      %v1890 = vunpack.c.l.bf16 %v1871
      %v1891 = vunpack.c.h.bf16 %v1871
      %v1892 = vunpack.c.l.bf16 %v1872
      %v1893 = vunpack.c.l.bf16 %v1873
      %v1894 = vunpack.c.h.bf16 %v1873
      %v1895 = vunpack.c.l.bf16 %v1874
      %v1896 = vunpack.c.l.bf16 %v1875
      %v1897 = vunpack.c.h.bf16 %v1875
      %v1898 = vunpack.c.l.bf16 %v1876
      %v1899 = vunpack.c.l.bf16 %v1877
      %v1900 = vunpack.c.h.bf16 %v1877
      %v1901 = vunpack.c.l.bf16 %v1878
      %v1902 = vunpack.c.l.bf16 %v1886
      %v1903 = vunpack.c.l.bf16 %v1889
      %1906 = vrot.lane.b32.xlu0 %v1902, 2
      %v1907 = vpop.permute.xlu0 %1906
      %1908 = vrot.lane.b32.xlu0 %v1903, 2
      %v1909 = vpop.permute.xlu0 %1908
      %v1910 = vsel %vm582, %v1907, %v1909
      %v1914 = vmul.f32 %v1890, %v1907
      %v1915 = vmul.f32 %v1891, %v1910
      %v1916 = vmul.f32 %v1892, %v1909
      %v1917 = vmul.f32 %v1893, %v1907
      %v1918 = vmul.f32 %v1894, %v1910
      %v1919 = vmul.f32 %v1895, %v1909
      %v1920 = vmul.f32 %v1896, %v1907
      %v1921 = vmul.f32 %v1897, %v1910
      %v1922 = vmul.f32 %v1898, %v1909
      %v1923 = vmul.f32 %v1899, %v1907
      %v1924 = vmul.f32 %v1900, %v1910
      %v1925 = vmul.f32 %v1901, %v1909
      %v1926 = vpack.c.bf16 %v1917, %v1914
      %v1927 = vpack.c.bf16 %v1918, %v1915
      %v1928 = vpack.c.bf16 %v1919, %v1916
      %v1929 = vpack.c.bf16 %v1923, %v1920
      %v1930 = vpack.c.bf16 %v1924, %v1921
      %v1931 = vpack.c.bf16 %v1925, %v1922
      %1938 = vrot.lane.b32.xlu0 %v1926, 126
      %v1939 = vpop.permute.xlu0 %1938
      %1940 = vrot.lane.b32.xlu0 %v1927, 126
      %v1941 = vpop.permute.xlu0 %1940
      %1942 = vrot.lane.b32.xlu0 %v1928, 126
      %v1943 = vpop.permute.xlu0 %1942
      %1944 = vrot.lane.b32.xlu0 %v1929, 126
      %v1945 = vpop.permute.xlu0 %1944
      %1946 = vrot.lane.b32.xlu0 %v1930, 126
      %v1947 = vpop.permute.xlu0 %1946
      %1948 = vrot.lane.b32.xlu0 %v1931, 126
      %v1949 = vpop.permute.xlu0 %1948
      %v1950 = vsel %vm621, %v1939, %v1941
      %v1951 = vsel %vm621, %v1941, %v1943
      %v1952 = vsel %vm621, %v1945, %v1947
      %v1953 = vsel %vm621, %v1947, %v1949
      %v1959 = vsel %vm1006, %v1880, 0
      %1961 = vmatpush.bf16.msra.mxu0 0
      %1962 = vmatpush.bf16.msra.mxu0 0
      %1963 = vmatpush.bf16.msra.mxu0 0
      %1964 = vmatpush.bf16.msra.mxu0 0
      %1965 = vmatpush.bf16.msra.mxu0 0
      %1966 = vmatpush.bf16.msra.mxu0 0
      %1967 = vmatpush.bf16.msra.mxu0 %v1952
      %1968 = vmatpush.bf16.msra.mxu0 %v1950
      %1969 = vmatmul.bf16.gmra.mxu0 %v1959
      %v1970 = vpop.f32.mrf.mxu0
      %v1971 = vadd.f32 0.0, %v1970
      %v1972 = vpop.f32.mrf.mxu0
      %1973 = vdwg.mxu0
      %1974 = vmatpush.bf16.msra.mxu0 0
      %1975 = vmatpush.bf16.msra.mxu0 0
      %1976 = vmatpush.bf16.msra.mxu0 0
      %1977 = vmatpush.bf16.msra.mxu0 0
      %1978 = vmatpush.bf16.msra.mxu0 0
      %1979 = vmatpush.bf16.msra.mxu0 0
      %1980 = vmatpush.bf16.msra.mxu0 %v1953
      %1981 = vmatpush.bf16.msra.mxu0 %v1951
      %1982 = vmatmul.bf16.gmra.mxu0 %v1959
      %v1983 = vpop.f32.mrf.mxu0
      %v1984 = vadd.f32 0.0, %v1983
      %v1985 = vpop.f32.mrf.mxu0
      %1986 = vdwg.mxu0
      %v1995 = vunpack.c.l.b16 %v1871
      %v1996 = vunpack.c.h.b16 %v1871
      %v1997 = vunpack.c.l.b16 %v1872
      %v1998 = vunpack.c.l.b16 %v1873
      %v1999 = vunpack.c.h.b16 %v1873
      %v2000 = vunpack.c.l.b16 %v1874
      %v2001 = vunpack.c.l.b16 %v1875
      %v2002 = vunpack.c.h.b16 %v1875
      %v2003 = vunpack.c.l.b16 %v1876
      %v2004 = vunpack.c.l.b16 %v1877
      %v2005 = vunpack.c.h.b16 %v1877
      %v2006 = vunpack.c.l.b16 %v1878
      %v2007 = vpack.c.b16 %v1998, %v1995
      %v2008 = vpack.c.b16 %v1999, %v1996
      %v2009 = vpack.c.b16 %v2000, %v1997
      %v2010 = vpack.c.b16 %v2004, %v2001
      %v2011 = vpack.c.b16 %v2005, %v2002
      %v2012 = vpack.c.b16 %v2006, %v2003
      %2013 = vrot.lane.b32.xlu0 %v2007, 127
      %v2014 = vpop.permute.xlu0 %2013
      %2015 = vrot.lane.b32.xlu0 %v2008, 127
      %v2016 = vpop.permute.xlu0 %2015
      %2017 = vrot.lane.b32.xlu0 %v2009, 127
      %v2018 = vpop.permute.xlu0 %2017
      %2019 = vrot.lane.b32.xlu0 %v2010, 127
      %v2020 = vpop.permute.xlu0 %2019
      %2021 = vrot.lane.b32.xlu0 %v2011, 127
      %v2022 = vpop.permute.xlu0 %2021
      %2023 = vrot.lane.b32.xlu0 %v2012, 127
      %v2024 = vpop.permute.xlu0 %2023
      %v2025 = vsel %vm442, %v2014, %v2016
      %v2026 = vsel %vm442, %v2016, %v2018
      %v2027 = vsel %vm442, %v2020, %v2022
      %v2028 = vsel %vm442, %v2022, %v2024
      %v2034 = vsel %vm1006, %v1870, 0
      %2036 = vmatpush.bf16.msra.mxu0 0
      %2037 = vmatpush.bf16.msra.mxu0 0
      %2038 = vmatpush.bf16.msra.mxu0 0
      %2039 = vmatpush.bf16.msra.mxu0 0
      %2040 = vmatpush.bf16.msra.mxu0 0
      %2041 = vmatpush.bf16.msra.mxu0 0
      %2042 = vmatpush.bf16.msra.mxu0 %v2027
      %2043 = vmatpush.bf16.msra.mxu0 %v2025
      %2044 = vmatmul.bf16.gmra.mxu0 %v2034
      %v2045 = vpop.f32.mrf.mxu0
      %v2046 = vadd.f32 %v1971, %v2045
      %v2047 = vpop.f32.mrf.mxu0
      %2048 = vdwg.mxu0
      %2049 = vmatpush.bf16.msra.mxu0 0
      %2050 = vmatpush.bf16.msra.mxu0 0
      %2051 = vmatpush.bf16.msra.mxu0 0
      %2052 = vmatpush.bf16.msra.mxu0 0
      %2053 = vmatpush.bf16.msra.mxu0 0
      %2054 = vmatpush.bf16.msra.mxu0 0
      %2055 = vmatpush.bf16.msra.mxu0 %v2028
      %2056 = vmatpush.bf16.msra.mxu0 %v2026
      %2057 = vmatmul.bf16.gmra.mxu0 %v2034
      %v2058 = vpop.f32.mrf.mxu0
      %v2059 = vadd.f32 %v1984, %v2058
      %v2060 = vpop.f32.mrf.mxu0
      %2061 = vdwg.mxu0
      %s2062 = scalar_lea.vmem %s5, 12
      %v2063 = vld [vmem:[%s2062] sm:$0x3]
      %v2064 = vld [vmem:[#allocation3] sm:$0xff]
      %v2065 = vld [vmem:[#allocation3 + $0x8] sm:$0xf]
      %v2066 = vld [vmem:[#allocation3 + $0xc] sm:$0xff]
      %v2067 = vld [vmem:[#allocation3 + $0x14] sm:$0xf]
      %v2068 = vld [vmem:[#allocation3 + $0x18] sm:$0xff]
      %v2069 = vld [vmem:[#allocation3 + $0x20] sm:$0xf]
      %v2070 = vld [vmem:[#allocation3 + $0x24] sm:$0xff]
      %v2071 = vld [vmem:[#allocation3 + $0x2c] sm:$0xf]
      %v2080 = vunpack.c.l.b16 %v2064
      %v2081 = vunpack.c.h.b16 %v2064
      %v2082 = vunpack.c.l.b16 %v2065
      %v2083 = vunpack.c.l.b16 %v2066
      %v2084 = vunpack.c.h.b16 %v2066
      %v2085 = vunpack.c.l.b16 %v2067
      %v2086 = vunpack.c.l.b16 %v2068
      %v2087 = vunpack.c.h.b16 %v2068
      %v2088 = vunpack.c.l.b16 %v2069
      %v2089 = vunpack.c.l.b16 %v2070
      %v2090 = vunpack.c.h.b16 %v2070
      %v2091 = vunpack.c.l.b16 %v2071
      %v2092 = vpack.c.b16 %v2083, %v2080
      %v2093 = vpack.c.b16 %v2084, %v2081
      %v2094 = vpack.c.b16 %v2085, %v2082
      %v2095 = vpack.c.b16 %v2089, %v2086
      %v2096 = vpack.c.b16 %v2090, %v2087
      %v2097 = vpack.c.b16 %v2091, %v2088
      %2098 = vrot.lane.b32.xlu0 %v2092, 111
      %v2099 = vpop.permute.xlu0 %2098
      %2100 = vrot.lane.b32.xlu0 %v2093, 111
      %v2101 = vpop.permute.xlu0 %2100
      %2102 = vrot.lane.b32.xlu0 %v2094, 111
      %v2103 = vpop.permute.xlu0 %2102
      %2104 = vrot.lane.b32.xlu0 %v2095, 111
      %v2105 = vpop.permute.xlu0 %2104
      %2106 = vrot.lane.b32.xlu0 %v2096, 111
      %v2107 = vpop.permute.xlu0 %2106
      %2108 = vrot.lane.b32.xlu0 %v2097, 111
      %v2109 = vpop.permute.xlu0 %2108
      %v2110 = vsel %vm823, %v2099, %v2101
      %v2111 = vsel %vm823, %v2101, %v2103
      %v2112 = vsel %vm823, %v2105, %v2107
      %v2113 = vsel %vm823, %v2107, %v2109
      %v2119 = vsel %vm1006, %v2063, 0
      %2121 = vmatpush.bf16.msra.mxu0 0
      %2122 = vmatpush.bf16.msra.mxu0 0
      %2123 = vmatpush.bf16.msra.mxu0 0
      %2124 = vmatpush.bf16.msra.mxu0 0
      %2125 = vmatpush.bf16.msra.mxu0 0
      %2126 = vmatpush.bf16.msra.mxu0 0
      %2127 = vmatpush.bf16.msra.mxu0 %v2112
      %2128 = vmatpush.bf16.msra.mxu0 %v2110
      %2129 = vmatmul.bf16.gmra.mxu0 %v2119
      %v2130 = vpop.f32.mrf.mxu0
      %v2131 = vadd.f32 0.0, %v2130
      %v2132 = vpop.f32.mrf.mxu0
      %2133 = vdwg.mxu0
      %2134 = vmatpush.bf16.msra.mxu0 0
      %2135 = vmatpush.bf16.msra.mxu0 0
      %2136 = vmatpush.bf16.msra.mxu0 0
      %2137 = vmatpush.bf16.msra.mxu0 0
      %2138 = vmatpush.bf16.msra.mxu0 0
      %2139 = vmatpush.bf16.msra.mxu0 0
      %2140 = vmatpush.bf16.msra.mxu0 %v2113
      %2141 = vmatpush.bf16.msra.mxu0 %v2111
      %2142 = vmatmul.bf16.gmra.mxu0 %v2119
      %v2143 = vpop.f32.mrf.mxu0
      %v2144 = vadd.f32 0.0, %v2143
      %v2145 = vpop.f32.mrf.mxu0
      %2146 = vdwg.mxu0
      %v2147 = vadd.f32 %v2046, %v2131
      %v2148 = vadd.f32 %v2059, %v2144
      %s2149 = scalar_lea.vmem %s5, 14
      %v2150 = vld [vmem:[%s2149] sm:$0x3]
      %v2151 = vunpack.c.l.bf16 %v2064
      %v2152 = vunpack.c.h.bf16 %v2064
      %v2153 = vunpack.c.l.bf16 %v2065
      %v2154 = vunpack.c.l.bf16 %v2066
      %v2155 = vunpack.c.h.bf16 %v2066
      %v2156 = vunpack.c.l.bf16 %v2067
      %v2157 = vunpack.c.l.bf16 %v2068
      %v2158 = vunpack.c.h.bf16 %v2068
      %v2159 = vunpack.c.l.bf16 %v2069
      %v2160 = vunpack.c.l.bf16 %v2070
      %v2161 = vunpack.c.h.bf16 %v2070
      %v2162 = vunpack.c.l.bf16 %v2071
      %2163 = vrot.lane.b32.xlu0 %v1902, 18
      %v2164 = vpop.permute.xlu0 %2163
      %2165 = vrot.lane.b32.xlu0 %v1903, 18
      %v2166 = vpop.permute.xlu0 %2165
      %v2167 = vsel %vm895, %v2164, %v2166
      %v2171 = vmul.f32 %v2151, %v2164
      %v2172 = vmul.f32 %v2152, %v2167
      %v2173 = vmul.f32 %v2153, %v2166
      %v2174 = vmul.f32 %v2154, %v2164
      %v2175 = vmul.f32 %v2155, %v2167
      %v2176 = vmul.f32 %v2156, %v2166
      %v2177 = vmul.f32 %v2157, %v2164
      %v2178 = vmul.f32 %v2158, %v2167
      %v2179 = vmul.f32 %v2159, %v2166
      %v2180 = vmul.f32 %v2160, %v2164
      %v2181 = vmul.f32 %v2161, %v2167
      %v2182 = vmul.f32 %v2162, %v2166
      %v2183 = vpack.c.bf16 %v2174, %v2171
      %v2184 = vpack.c.bf16 %v2175, %v2172
      %v2185 = vpack.c.bf16 %v2176, %v2173
      %v2186 = vpack.c.bf16 %v2180, %v2177
      %v2187 = vpack.c.bf16 %v2181, %v2178
      %v2188 = vpack.c.bf16 %v2182, %v2179
      %2195 = vrot.lane.b32.xlu0 %v2183, 110
      %v2196 = vpop.permute.xlu0 %2195
      %2197 = vrot.lane.b32.xlu0 %v2184, 110
      %v2198 = vpop.permute.xlu0 %2197
      %2199 = vrot.lane.b32.xlu0 %v2185, 110
      %v2200 = vpop.permute.xlu0 %2199
      %2201 = vrot.lane.b32.xlu0 %v2186, 110
      %v2202 = vpop.permute.xlu0 %2201
      %2203 = vrot.lane.b32.xlu0 %v2187, 110
      %v2204 = vpop.permute.xlu0 %2203
      %2205 = vrot.lane.b32.xlu0 %v2188, 110
      %v2206 = vpop.permute.xlu0 %2205
      %v2207 = vsel %vm934, %v2196, %v2198
      %v2208 = vsel %vm934, %v2198, %v2200
      %v2209 = vsel %vm934, %v2202, %v2204
      %v2210 = vsel %vm934, %v2204, %v2206
      %v2216 = vsel %vm1006, %v2150, 0
      %2218 = vmatpush.bf16.msra.mxu0 0
      %2219 = vmatpush.bf16.msra.mxu0 0
      %2220 = vmatpush.bf16.msra.mxu0 0
      %2221 = vmatpush.bf16.msra.mxu0 0
      %2222 = vmatpush.bf16.msra.mxu0 0
      %2223 = vmatpush.bf16.msra.mxu0 0
      %2224 = vmatpush.bf16.msra.mxu0 %v2209
      %2225 = vmatpush.bf16.msra.mxu0 %v2207
      %2226 = vmatmul.bf16.gmra.mxu0 %v2216
      %v2227 = vpop.f32.mrf.mxu0
      %v2228 = vadd.f32 0.0, %v2227
      %v2229 = vpop.f32.mrf.mxu0
      %2230 = vdwg.mxu0
      %2231 = vmatpush.bf16.msra.mxu0 0
      %2232 = vmatpush.bf16.msra.mxu0 0
      %2233 = vmatpush.bf16.msra.mxu0 0
      %2234 = vmatpush.bf16.msra.mxu0 0
      %2235 = vmatpush.bf16.msra.mxu0 0
      %2236 = vmatpush.bf16.msra.mxu0 0
      %2237 = vmatpush.bf16.msra.mxu0 %v2210
      %2238 = vmatpush.bf16.msra.mxu0 %v2208
      %2239 = vmatmul.bf16.gmra.mxu0 %v2216
      %v2240 = vpop.f32.mrf.mxu0
      %v2241 = vadd.f32 0.0, %v2240
      %v2242 = vpop.f32.mrf.mxu0
      %2243 = vdwg.mxu0
      %v2244 = vadd.f32 %v2147, %v2228
      %v2245 = vadd.f32 %v2148, %v2241
      %v2246 = vld [vmem:[%s6] sm:$0x7]
      %2248 = vset.pattern.permute.xlu0 0
      %2249 = vperm.xlu0 %2248, %v2246
      %v2250 = vpop.permute.xlu0 %2249
      %v2252 = vadd.f32 %v2244, %v2250
      %v2253 = vadd.f32 %v2245, %v2250
      %v2256 = vrot.slane %v2253, 4
      %v2257 = vsel %vm400, %v2252, %v2256
      %s2259 = scalar_lea.vmem %s305, 8
      %2260 = vst [vmem:[%s2259] sm:$0x77] %v2257
      %s2261 = scalar_lea.vmem %s5, 16
      %v2262 = vld [vmem:[%s2261] sm:$0x3]
      %v2263 = vld [vmem:[#allocation3] sm:$0xff]
      %v2264 = vld [vmem:[#allocation3 + $0x8] sm:$0xf]
      %v2265 = vld [vmem:[#allocation3 + $0xc] sm:$0xff]
      %v2266 = vld [vmem:[#allocation3 + $0x14] sm:$0xf]
      %v2267 = vld [vmem:[#allocation3 + $0x18] sm:$0xff]
      %v2268 = vld [vmem:[#allocation3 + $0x20] sm:$0xf]
      %v2269 = vld [vmem:[#allocation3 + $0x24] sm:$0xff]
      %v2270 = vld [vmem:[#allocation3 + $0x2c] sm:$0xf]
      %v2271 = vunpack.c.l.bf16 %v2263
      %v2272 = vunpack.c.h.bf16 %v2263
      %v2273 = vunpack.c.l.bf16 %v2264
      %v2274 = vunpack.c.l.bf16 %v2265
      %v2275 = vunpack.c.h.bf16 %v2265
      %v2276 = vunpack.c.l.bf16 %v2266
      %v2277 = vunpack.c.l.bf16 %v2267
      %v2278 = vunpack.c.h.bf16 %v2267
      %v2279 = vunpack.c.l.bf16 %v2268
      %v2280 = vunpack.c.l.bf16 %v2269
      %v2281 = vunpack.c.h.bf16 %v2269
      %v2282 = vunpack.c.l.bf16 %v2270
      %v2283 = vmul.f32 %v2271, %v1720
      %v2284 = vmul.f32 %v2272, %v1723
      %v2285 = vmul.f32 %v2273, %v1722
      %v2286 = vmul.f32 %v2274, %v1720
      %v2287 = vmul.f32 %v2275, %v1723
      %v2288 = vmul.f32 %v2276, %v1722
      %v2289 = vmul.f32 %v2277, %v1720
      %v2290 = vmul.f32 %v2278, %v1723
      %v2291 = vmul.f32 %v2279, %v1722
      %v2292 = vmul.f32 %v2280, %v1720
      %v2293 = vmul.f32 %v2281, %v1723
      %v2294 = vmul.f32 %v2282, %v1722
      %v2295 = vpack.c.bf16 %v2286, %v2283
      %v2296 = vpack.c.bf16 %v2287, %v2284
      %v2297 = vpack.c.bf16 %v2288, %v2285
      %v2298 = vpack.c.bf16 %v2292, %v2289
      %v2299 = vpack.c.bf16 %v2293, %v2290
      %v2300 = vpack.c.bf16 %v2294, %v2291
      %s2301 = scalar_lea.vmem %s5, 18
      %v2302 = vld [vmem:[%s2301] sm:$0x3]
      %v2311 = vunpack.c.l.b16 %v2263
      %v2312 = vunpack.c.h.b16 %v2263
      %v2313 = vunpack.c.l.b16 %v2264
      %v2314 = vunpack.c.l.b16 %v2265
      %v2315 = vunpack.c.h.b16 %v2265
      %v2316 = vunpack.c.l.b16 %v2266
      %v2317 = vunpack.c.l.b16 %v2267
      %v2318 = vunpack.c.h.b16 %v2267
      %v2319 = vunpack.c.l.b16 %v2268
      %v2320 = vunpack.c.l.b16 %v2269
      %v2321 = vunpack.c.h.b16 %v2269
      %v2322 = vunpack.c.l.b16 %v2270
      %v2323 = vpack.c.b16 %v2314, %v2311
      %v2324 = vpack.c.b16 %v2315, %v2312
      %v2325 = vpack.c.b16 %v2316, %v2313
      %v2326 = vpack.c.b16 %v2320, %v2317
      %v2327 = vpack.c.b16 %v2321, %v2318
      %v2328 = vpack.c.b16 %v2322, %v2319
      %2329 = vrot.lane.b32.xlu0 %v2323, 111
      %v2330 = vpop.permute.xlu0 %2329
      %2331 = vrot.lane.b32.xlu0 %v2324, 111
      %v2332 = vpop.permute.xlu0 %2331
      %2333 = vrot.lane.b32.xlu0 %v2325, 111
      %v2334 = vpop.permute.xlu0 %2333
      %2335 = vrot.lane.b32.xlu0 %v2326, 111
      %v2336 = vpop.permute.xlu0 %2335
      %2337 = vrot.lane.b32.xlu0 %v2327, 111
      %v2338 = vpop.permute.xlu0 %2337
      %2339 = vrot.lane.b32.xlu0 %v2328, 111
      %v2340 = vpop.permute.xlu0 %2339
      %v2341 = vsel %vm823, %v2330, %v2332
      %v2342 = vsel %vm823, %v2332, %v2334
      %v2343 = vsel %vm823, %v2336, %v2338
      %v2344 = vsel %vm823, %v2338, %v2340
      %v2350 = vsel %vm1006, %v2302, 0
      %2352 = vmatpush.bf16.msra.mxu0 0
      %2353 = vmatpush.bf16.msra.mxu0 0
      %2354 = vmatpush.bf16.msra.mxu0 0
      %2355 = vmatpush.bf16.msra.mxu0 0
      %2356 = vmatpush.bf16.msra.mxu0 0
      %2357 = vmatpush.bf16.msra.mxu0 0
      %2358 = vmatpush.bf16.msra.mxu0 %v2343
      %2359 = vmatpush.bf16.msra.mxu0 %v2341
      %2360 = vmatmul.bf16.gmra.mxu0 %v2350
      %v2361 = vpop.f32.mrf.mxu0
      %v2362 = vadd.f32 0.0, %v2361
      %v2363 = vpop.f32.mrf.mxu0
      %2364 = vdwg.mxu0
      %2365 = vmatpush.bf16.msra.mxu0 0
      %2366 = vmatpush.bf16.msra.mxu0 0
      %2367 = vmatpush.bf16.msra.mxu0 0
      %2368 = vmatpush.bf16.msra.mxu0 0
      %2369 = vmatpush.bf16.msra.mxu0 0
      %2370 = vmatpush.bf16.msra.mxu0 0
      %2371 = vmatpush.bf16.msra.mxu0 %v2344
      %2372 = vmatpush.bf16.msra.mxu0 %v2342
      %2373 = vmatmul.bf16.gmra.mxu0 %v2350
      %v2374 = vpop.f32.mrf.mxu0
      %v2375 = vadd.f32 0.0, %v2374
      %v2376 = vpop.f32.mrf.mxu0
      %2377 = vdwg.mxu0
      %2384 = vrot.lane.b32.xlu0 %v2295, 112
      %v2385 = vpop.permute.xlu0 %2384
      %2386 = vrot.lane.b32.xlu0 %v2296, 112
      %v2387 = vpop.permute.xlu0 %2386
      %2388 = vrot.lane.b32.xlu0 %v2297, 112
      %v2389 = vpop.permute.xlu0 %2388
      %2390 = vrot.lane.b32.xlu0 %v2298, 112
      %v2391 = vpop.permute.xlu0 %2390
      %2392 = vrot.lane.b32.xlu0 %v2299, 112
      %v2393 = vpop.permute.xlu0 %2392
      %2394 = vrot.lane.b32.xlu0 %v2300, 112
      %v2395 = vpop.permute.xlu0 %2394
      %v2396 = vsel %vm732, %v2385, %v2387
      %v2397 = vsel %vm732, %v2387, %v2389
      %v2398 = vsel %vm732, %v2391, %v2393
      %v2399 = vsel %vm732, %v2393, %v2395
      %v2405 = vsel %vm1006, %v2262, 0
      %2407 = vmatpush.bf16.msra.mxu0 0
      %2408 = vmatpush.bf16.msra.mxu0 0
      %2409 = vmatpush.bf16.msra.mxu0 0
      %2410 = vmatpush.bf16.msra.mxu0 0
      %2411 = vmatpush.bf16.msra.mxu0 0
      %2412 = vmatpush.bf16.msra.mxu0 0
      %2413 = vmatpush.bf16.msra.mxu0 %v2398
      %2414 = vmatpush.bf16.msra.mxu0 %v2396
      %2415 = vmatmul.bf16.gmra.mxu0 %v2405
      %v2416 = vpop.f32.mrf.mxu0
      %v2417 = vadd.f32 %v2362, %v2416
      %v2418 = vpop.f32.mrf.mxu0
      %2419 = vdwg.mxu0
      %2420 = vmatpush.bf16.msra.mxu0 0
      %2421 = vmatpush.bf16.msra.mxu0 0
      %2422 = vmatpush.bf16.msra.mxu0 0
      %2423 = vmatpush.bf16.msra.mxu0 0
      %2424 = vmatpush.bf16.msra.mxu0 0
      %2425 = vmatpush.bf16.msra.mxu0 0
      %2426 = vmatpush.bf16.msra.mxu0 %v2399
      %2427 = vmatpush.bf16.msra.mxu0 %v2397
      %2428 = vmatmul.bf16.gmra.mxu0 %v2405
      %v2429 = vpop.f32.mrf.mxu0
      %v2430 = vadd.f32 %v2375, %v2429
      %v2431 = vpop.f32.mrf.mxu0
      %2432 = vdwg.mxu0
      %s2433 = scalar_lea.vmem %s5, 20
      %v2434 = vld [vmem:[%s2433] sm:$0x3]
      %2435 = vrot.lane.b32.xlu0 %v1575, 32
      %v2436 = vpop.permute.xlu0 %2435
      %2437 = vrot.lane.b32.xlu0 %v1576, 32
      %v2438 = vpop.permute.xlu0 %2437
      %v2439 = vsel %vm1006, %v2436, %v2438
      %v2443 = vmul.f32 %v2271, %v2436
      %v2444 = vmul.f32 %v2272, %v2439
      %v2445 = vmul.f32 %v2273, %v2438
      %v2446 = vmul.f32 %v2274, %v2436
      %v2447 = vmul.f32 %v2275, %v2439
      %v2448 = vmul.f32 %v2276, %v2438
      %v2449 = vmul.f32 %v2277, %v2436
      %v2450 = vmul.f32 %v2278, %v2439
      %v2451 = vmul.f32 %v2279, %v2438
      %v2452 = vmul.f32 %v2280, %v2436
      %v2453 = vmul.f32 %v2281, %v2439
      %v2454 = vmul.f32 %v2282, %v2438
      %v2455 = vpack.c.bf16 %v2446, %v2443
      %v2456 = vpack.c.bf16 %v2447, %v2444
      %v2457 = vpack.c.bf16 %v2448, %v2445
      %v2458 = vpack.c.bf16 %v2452, %v2449
      %v2459 = vpack.c.bf16 %v2453, %v2450
      %v2460 = vpack.c.bf16 %v2454, %v2451
      %2467 = vrot.lane.b32.xlu0 %v2455, 96
      %v2468 = vpop.permute.xlu0 %2467
      %2469 = vrot.lane.b32.xlu0 %v2456, 96
      %v2470 = vpop.permute.xlu0 %2469
      %2471 = vrot.lane.b32.xlu0 %v2457, 96
      %v2472 = vpop.permute.xlu0 %2471
      %2473 = vrot.lane.b32.xlu0 %v2458, 96
      %v2474 = vpop.permute.xlu0 %2473
      %2475 = vrot.lane.b32.xlu0 %v2459, 96
      %v2476 = vpop.permute.xlu0 %2475
      %2477 = vrot.lane.b32.xlu0 %v2460, 96
      %v2478 = vpop.permute.xlu0 %2477
      %v2479 = vsel %vm1045, %v2468, %v2470
      %v2480 = vsel %vm1045, %v2470, %v2472
      %v2481 = vsel %vm1045, %v2474, %v2476
      %v2482 = vsel %vm1045, %v2476, %v2478
      %v2488 = vsel %vm1006, %v2434, 0
      %2490 = vmatpush.bf16.msra.mxu0 0
      %2491 = vmatpush.bf16.msra.mxu0 0
      %2492 = vmatpush.bf16.msra.mxu0 0
      %2493 = vmatpush.bf16.msra.mxu0 0
      %2494 = vmatpush.bf16.msra.mxu0 0
      %2495 = vmatpush.bf16.msra.mxu0 0
      %2496 = vmatpush.bf16.msra.mxu0 %v2481
      %2497 = vmatpush.bf16.msra.mxu0 %v2479
      %2498 = vmatmul.bf16.gmra.mxu0 %v2488
      %v2499 = vpop.f32.mrf.mxu0
      %v2500 = vadd.f32 0.0, %v2499
      %v2501 = vpop.f32.mrf.mxu0
      %2502 = vdwg.mxu0
      %2503 = vmatpush.bf16.msra.mxu0 0
      %2504 = vmatpush.bf16.msra.mxu0 0
      %2505 = vmatpush.bf16.msra.mxu0 0
      %2506 = vmatpush.bf16.msra.mxu0 0
      %2507 = vmatpush.bf16.msra.mxu0 0
      %2508 = vmatpush.bf16.msra.mxu0 0
      %2509 = vmatpush.bf16.msra.mxu0 %v2482
      %2510 = vmatpush.bf16.msra.mxu0 %v2480
      %2511 = vmatmul.bf16.gmra.mxu0 %v2488
      %v2512 = vpop.f32.mrf.mxu0
      %v2513 = vadd.f32 0.0, %v2512
      %v2514 = vpop.f32.mrf.mxu0
      %2515 = vdwg.mxu0
      %v2516 = vadd.f32 %v2417, %v2500
      %v2517 = vadd.f32 %v2430, %v2513
      %s2518 = scalar_lea.vmem %s5, 22
      %v2519 = vld [vmem:[%s2518] sm:$0x3]
      %2520 = vrot.lane.b32.xlu0 %v2323, 95
      %v2521 = vpop.permute.xlu0 %2520
      %2522 = vrot.lane.b32.xlu0 %v2324, 95
      %v2523 = vpop.permute.xlu0 %2522
      %2524 = vrot.lane.b32.xlu0 %v2325, 95
      %v2525 = vpop.permute.xlu0 %2524
      %2526 = vrot.lane.b32.xlu0 %v2326, 95
      %v2527 = vpop.permute.xlu0 %2526
      %2528 = vrot.lane.b32.xlu0 %v2327, 95
      %v2529 = vpop.permute.xlu0 %2528
      %2530 = vrot.lane.b32.xlu0 %v2328, 95
      %v2531 = vpop.permute.xlu0 %2530
      %v2532 = vsel %vm1136, %v2521, %v2523
      %v2533 = vsel %vm1136, %v2523, %v2525
      %v2534 = vsel %vm1136, %v2527, %v2529
      %v2535 = vsel %vm1136, %v2529, %v2531
      %v2541 = vsel %vm1006, %v2519, 0
      %2543 = vmatpush.bf16.msra.mxu0 0
      %2544 = vmatpush.bf16.msra.mxu0 0
      %2545 = vmatpush.bf16.msra.mxu0 0
      %2546 = vmatpush.bf16.msra.mxu0 0
      %2547 = vmatpush.bf16.msra.mxu0 0
      %2548 = vmatpush.bf16.msra.mxu0 0
      %2549 = vmatpush.bf16.msra.mxu0 %v2534
      %2550 = vmatpush.bf16.msra.mxu0 %v2532
      %2551 = vmatmul.bf16.gmra.mxu0 %v2541
      %v2552 = vpop.f32.mrf.mxu0
      %v2553 = vadd.f32 0.0, %v2552
      %v2554 = vpop.f32.mrf.mxu0
      %2555 = vdwg.mxu0
      %2556 = vmatpush.bf16.msra.mxu0 0
      %2557 = vmatpush.bf16.msra.mxu0 0
      %2558 = vmatpush.bf16.msra.mxu0 0
      %2559 = vmatpush.bf16.msra.mxu0 0
      %2560 = vmatpush.bf16.msra.mxu0 0
      %2561 = vmatpush.bf16.msra.mxu0 0
      %2562 = vmatpush.bf16.msra.mxu0 %v2535
      %2563 = vmatpush.bf16.msra.mxu0 %v2533
      %2564 = vmatmul.bf16.gmra.mxu0 %v2541
      %v2565 = vpop.f32.mrf.mxu0
      %v2566 = vadd.f32 0.0, %v2565
      %v2567 = vpop.f32.mrf.mxu0
      %2568 = vdwg.mxu0
      %v2569 = vadd.f32 %v2516, %v2553
      %v2570 = vadd.f32 %v2517, %v2566
      %v2571 = vld [vmem:[%s6] sm:$0x7]
      %2573 = vset.pattern.permute.xlu0 0
      %2574 = vperm.xlu0 %2573, %v2571
      %v2575 = vpop.permute.xlu0 %2574
      %v2577 = vadd.f32 %v2569, %v2575
      %v2578 = vadd.f32 %v2570, %v2575
      %v2581 = vrot.slane %v2578, 4
      %v2582 = vsel %vm400, %v2577, %v2581
      %s2584 = scalar_lea.vmem %s305, 16
      %2585 = vst [vmem:[%s2584] sm:$0x77] %v2582
      %s2586 = scalar_lea.vmem %s5, 24
      %v2587 = vld [vmem:[%s2586] sm:$0x3]
      %v2588 = vld [vmem:[#allocation3] sm:$0xff]
      %v2589 = vld [vmem:[#allocation3 + $0x8] sm:$0xf]
      %v2590 = vld [vmem:[#allocation3 + $0xc] sm:$0xff]
      %v2591 = vld [vmem:[#allocation3 + $0x14] sm:$0xf]
      %v2592 = vld [vmem:[#allocation3 + $0x18] sm:$0xff]
      %v2593 = vld [vmem:[#allocation3 + $0x20] sm:$0xf]
      %v2594 = vld [vmem:[#allocation3 + $0x24] sm:$0xff]
      %v2595 = vld [vmem:[#allocation3 + $0x2c] sm:$0xf]
      %s2596 = scalar_lea.vmem %s5, 26
      %v2597 = vld [vmem:[%s2596] sm:$0x3]
      %v2598 = vunpack.c.l.bf16 %v2588
      %v2599 = vunpack.c.h.bf16 %v2588
      %v2600 = vunpack.c.l.bf16 %v2589
      %v2601 = vunpack.c.l.bf16 %v2590
      %v2602 = vunpack.c.h.bf16 %v2590
      %v2603 = vunpack.c.l.bf16 %v2591
      %v2604 = vunpack.c.l.bf16 %v2592
      %v2605 = vunpack.c.h.bf16 %v2592
      %v2606 = vunpack.c.l.bf16 %v2593
      %v2607 = vunpack.c.l.bf16 %v2594
      %v2608 = vunpack.c.h.bf16 %v2594
      %v2609 = vunpack.c.l.bf16 %v2595
      %v2610 = vmul.f32 %v2598, %v2164
      %v2611 = vmul.f32 %v2599, %v2167
      %v2612 = vmul.f32 %v2600, %v2166
      %v2613 = vmul.f32 %v2601, %v2164
      %v2614 = vmul.f32 %v2602, %v2167
      %v2615 = vmul.f32 %v2603, %v2166
      %v2616 = vmul.f32 %v2604, %v2164
      %v2617 = vmul.f32 %v2605, %v2167
      %v2618 = vmul.f32 %v2606, %v2166
      %v2619 = vmul.f32 %v2607, %v2164
      %v2620 = vmul.f32 %v2608, %v2167
      %v2621 = vmul.f32 %v2609, %v2166
      %v2622 = vpack.c.bf16 %v2613, %v2610
      %v2623 = vpack.c.bf16 %v2614, %v2611
      %v2624 = vpack.c.bf16 %v2615, %v2612
      %v2625 = vpack.c.bf16 %v2619, %v2616
      %v2626 = vpack.c.bf16 %v2620, %v2617
      %v2627 = vpack.c.bf16 %v2621, %v2618
      %2634 = vrot.lane.b32.xlu0 %v2622, 110
      %v2635 = vpop.permute.xlu0 %2634
      %2636 = vrot.lane.b32.xlu0 %v2623, 110
      %v2637 = vpop.permute.xlu0 %2636
      %2638 = vrot.lane.b32.xlu0 %v2624, 110
      %v2639 = vpop.permute.xlu0 %2638
      %2640 = vrot.lane.b32.xlu0 %v2625, 110
      %v2641 = vpop.permute.xlu0 %2640
      %2642 = vrot.lane.b32.xlu0 %v2626, 110
      %v2643 = vpop.permute.xlu0 %2642
      %2644 = vrot.lane.b32.xlu0 %v2627, 110
      %v2645 = vpop.permute.xlu0 %2644
      %v2646 = vsel %vm934, %v2635, %v2637
      %v2647 = vsel %vm934, %v2637, %v2639
      %v2648 = vsel %vm934, %v2641, %v2643
      %v2649 = vsel %vm934, %v2643, %v2645
      %v2655 = vsel %vm1006, %v2597, 0
      %2657 = vmatpush.bf16.msra.mxu0 0
      %2658 = vmatpush.bf16.msra.mxu0 0
      %2659 = vmatpush.bf16.msra.mxu0 0
      %2660 = vmatpush.bf16.msra.mxu0 0
      %2661 = vmatpush.bf16.msra.mxu0 0
      %2662 = vmatpush.bf16.msra.mxu0 0
      %2663 = vmatpush.bf16.msra.mxu0 %v2648
      %2664 = vmatpush.bf16.msra.mxu0 %v2646
      %2665 = vmatmul.bf16.gmra.mxu0 %v2655
      %v2666 = vpop.f32.mrf.mxu0
      %v2667 = vadd.f32 0.0, %v2666
      %v2668 = vpop.f32.mrf.mxu0
      %2669 = vdwg.mxu0
      %2670 = vmatpush.bf16.msra.mxu0 0
      %2671 = vmatpush.bf16.msra.mxu0 0
      %2672 = vmatpush.bf16.msra.mxu0 0
      %2673 = vmatpush.bf16.msra.mxu0 0
      %2674 = vmatpush.bf16.msra.mxu0 0
      %2675 = vmatpush.bf16.msra.mxu0 0
      %2676 = vmatpush.bf16.msra.mxu0 %v2649
      %2677 = vmatpush.bf16.msra.mxu0 %v2647
      %2678 = vmatmul.bf16.gmra.mxu0 %v2655
      %v2679 = vpop.f32.mrf.mxu0
      %v2680 = vadd.f32 0.0, %v2679
      %v2681 = vpop.f32.mrf.mxu0
      %2682 = vdwg.mxu0
      %v2691 = vunpack.c.l.b16 %v2588
      %v2692 = vunpack.c.h.b16 %v2588
      %v2693 = vunpack.c.l.b16 %v2589
      %v2694 = vunpack.c.l.b16 %v2590
      %v2695 = vunpack.c.h.b16 %v2590
      %v2696 = vunpack.c.l.b16 %v2591
      %v2697 = vunpack.c.l.b16 %v2592
      %v2698 = vunpack.c.h.b16 %v2592
      %v2699 = vunpack.c.l.b16 %v2593
      %v2700 = vunpack.c.l.b16 %v2594
      %v2701 = vunpack.c.h.b16 %v2594
      %v2702 = vunpack.c.l.b16 %v2595
      %v2703 = vpack.c.b16 %v2694, %v2691
      %v2704 = vpack.c.b16 %v2695, %v2692
      %v2705 = vpack.c.b16 %v2696, %v2693
      %v2706 = vpack.c.b16 %v2700, %v2697
      %v2707 = vpack.c.b16 %v2701, %v2698
      %v2708 = vpack.c.b16 %v2702, %v2699
      %2709 = vrot.lane.b32.xlu0 %v2703, 111
      %v2710 = vpop.permute.xlu0 %2709
      %2711 = vrot.lane.b32.xlu0 %v2704, 111
      %v2712 = vpop.permute.xlu0 %2711
      %2713 = vrot.lane.b32.xlu0 %v2705, 111
      %v2714 = vpop.permute.xlu0 %2713
      %2715 = vrot.lane.b32.xlu0 %v2706, 111
      %v2716 = vpop.permute.xlu0 %2715
      %2717 = vrot.lane.b32.xlu0 %v2707, 111
      %v2718 = vpop.permute.xlu0 %2717
      %2719 = vrot.lane.b32.xlu0 %v2708, 111
      %v2720 = vpop.permute.xlu0 %2719
      %v2721 = vsel %vm823, %v2710, %v2712
      %v2722 = vsel %vm823, %v2712, %v2714
      %v2723 = vsel %vm823, %v2716, %v2718
      %v2724 = vsel %vm823, %v2718, %v2720
      %v2730 = vsel %vm1006, %v2587, 0
      %2732 = vmatpush.bf16.msra.mxu0 0
      %2733 = vmatpush.bf16.msra.mxu0 0
      %2734 = vmatpush.bf16.msra.mxu0 0
      %2735 = vmatpush.bf16.msra.mxu0 0
      %2736 = vmatpush.bf16.msra.mxu0 0
      %2737 = vmatpush.bf16.msra.mxu0 0
      %2738 = vmatpush.bf16.msra.mxu0 %v2723
      %2739 = vmatpush.bf16.msra.mxu0 %v2721
      %2740 = vmatmul.bf16.gmra.mxu0 %v2730
      %v2741 = vpop.f32.mrf.mxu0
      %v2742 = vadd.f32 %v2667, %v2741
      %v2743 = vpop.f32.mrf.mxu0
      %2744 = vdwg.mxu0
      %2745 = vmatpush.bf16.msra.mxu0 0
      %2746 = vmatpush.bf16.msra.mxu0 0
      %2747 = vmatpush.bf16.msra.mxu0 0
      %2748 = vmatpush.bf16.msra.mxu0 0
      %2749 = vmatpush.bf16.msra.mxu0 0
      %2750 = vmatpush.bf16.msra.mxu0 0
      %2751 = vmatpush.bf16.msra.mxu0 %v2724
      %2752 = vmatpush.bf16.msra.mxu0 %v2722
      %2753 = vmatmul.bf16.gmra.mxu0 %v2730
      %v2754 = vpop.f32.mrf.mxu0
      %v2755 = vadd.f32 %v2680, %v2754
      %v2756 = vpop.f32.mrf.mxu0
      %2757 = vdwg.mxu0
      %s2758 = scalar_lea.vmem %s5, 28
      %v2759 = vld [vmem:[%s2758] sm:$0x3]
      %2760 = vrot.lane.b32.xlu0 %v2703, 95
      %v2761 = vpop.permute.xlu0 %2760
      %2762 = vrot.lane.b32.xlu0 %v2704, 95
      %v2763 = vpop.permute.xlu0 %2762
      %2764 = vrot.lane.b32.xlu0 %v2705, 95
      %v2765 = vpop.permute.xlu0 %2764
      %2766 = vrot.lane.b32.xlu0 %v2706, 95
      %v2767 = vpop.permute.xlu0 %2766
      %2768 = vrot.lane.b32.xlu0 %v2707, 95
      %v2769 = vpop.permute.xlu0 %2768
      %2770 = vrot.lane.b32.xlu0 %v2708, 95
      %v2771 = vpop.permute.xlu0 %2770
      %v2772 = vsel %vm1136, %v2761, %v2763
      %v2773 = vsel %vm1136, %v2763, %v2765
      %v2774 = vsel %vm1136, %v2767, %v2769
      %v2775 = vsel %vm1136, %v2769, %v2771
      %v2781 = vsel %vm1006, %v2759, 0
      %2783 = vmatpush.bf16.msra.mxu0 0
      %2784 = vmatpush.bf16.msra.mxu0 0
      %2785 = vmatpush.bf16.msra.mxu0 0
      %2786 = vmatpush.bf16.msra.mxu0 0
      %2787 = vmatpush.bf16.msra.mxu0 0
      %2788 = vmatpush.bf16.msra.mxu0 0
      %2789 = vmatpush.bf16.msra.mxu0 %v2774
      %2790 = vmatpush.bf16.msra.mxu0 %v2772
      %2791 = vmatmul.bf16.gmra.mxu0 %v2781
      %v2792 = vpop.f32.mrf.mxu0
      %v2793 = vadd.f32 0.0, %v2792
      %v2794 = vpop.f32.mrf.mxu0
      %2795 = vdwg.mxu0
      %2796 = vmatpush.bf16.msra.mxu0 0
      %2797 = vmatpush.bf16.msra.mxu0 0
      %2798 = vmatpush.bf16.msra.mxu0 0
      %2799 = vmatpush.bf16.msra.mxu0 0
      %2800 = vmatpush.bf16.msra.mxu0 0
      %2801 = vmatpush.bf16.msra.mxu0 0
      %2802 = vmatpush.bf16.msra.mxu0 %v2775
      %2803 = vmatpush.bf16.msra.mxu0 %v2773
      %2804 = vmatmul.bf16.gmra.mxu0 %v2781
      %v2805 = vpop.f32.mrf.mxu0
      %v2806 = vadd.f32 0.0, %v2805
      %v2807 = vpop.f32.mrf.mxu0
      %2808 = vdwg.mxu0
      %v2809 = vadd.f32 %v2742, %v2793
      %v2810 = vadd.f32 %v2755, %v2806
      %s2811 = scalar_lea.vmem %s5, 30
      %v2812 = vld [vmem:[%s2811] sm:$0x3]
      %2813 = vrot.lane.b32.xlu0 %v1902, 34
      %v2814 = vpop.permute.xlu0 %2813
      %2815 = vrot.lane.b32.xlu0 %v1903, 34
      %v2816 = vpop.permute.xlu0 %2815
      %v2817 = vsel %vm1208, %v2814, %v2816
      %v2821 = vmul.f32 %v2598, %v2814
      %v2822 = vmul.f32 %v2599, %v2817
      %v2823 = vmul.f32 %v2600, %v2816
      %v2824 = vmul.f32 %v2601, %v2814
      %v2825 = vmul.f32 %v2602, %v2817
      %v2826 = vmul.f32 %v2603, %v2816
      %v2827 = vmul.f32 %v2604, %v2814
      %v2828 = vmul.f32 %v2605, %v2817
      %v2829 = vmul.f32 %v2606, %v2816
      %v2830 = vmul.f32 %v2607, %v2814
      %v2831 = vmul.f32 %v2608, %v2817
      %v2832 = vmul.f32 %v2609, %v2816
      %v2833 = vpack.c.bf16 %v2824, %v2821
      %v2834 = vpack.c.bf16 %v2825, %v2822
      %v2835 = vpack.c.bf16 %v2826, %v2823
      %v2836 = vpack.c.bf16 %v2830, %v2827
      %v2837 = vpack.c.bf16 %v2831, %v2828
      %v2838 = vpack.c.bf16 %v2832, %v2829
      %2845 = vrot.lane.b32.xlu0 %v2833, 94
      %v2846 = vpop.permute.xlu0 %2845
      %2847 = vrot.lane.b32.xlu0 %v2834, 94
      %v2848 = vpop.permute.xlu0 %2847
      %2849 = vrot.lane.b32.xlu0 %v2835, 94
      %v2850 = vpop.permute.xlu0 %2849
      %2851 = vrot.lane.b32.xlu0 %v2836, 94
      %v2852 = vpop.permute.xlu0 %2851
      %2853 = vrot.lane.b32.xlu0 %v2837, 94
      %v2854 = vpop.permute.xlu0 %2853
      %2855 = vrot.lane.b32.xlu0 %v2838, 94
      %v2856 = vpop.permute.xlu0 %2855
      %v2857 = vsel %vm1247, %v2846, %v2848
      %v2858 = vsel %vm1247, %v2848, %v2850
      %v2859 = vsel %vm1247, %v2852, %v2854
      %v2860 = vsel %vm1247, %v2854, %v2856
      %v2866 = vsel %vm1006, %v2812, 0
      %2868 = vmatpush.bf16.msra.mxu0 0
      %2869 = vmatpush.bf16.msra.mxu0 0
      %2870 = vmatpush.bf16.msra.mxu0 0
      %2871 = vmatpush.bf16.msra.mxu0 0
      %2872 = vmatpush.bf16.msra.mxu0 0
      %2873 = vmatpush.bf16.msra.mxu0 0
      %2874 = vmatpush.bf16.msra.mxu0 %v2859
      %2875 = vmatpush.bf16.msra.mxu0 %v2857
      %2876 = vmatmul.bf16.gmra.mxu0 %v2866
      %v2877 = vpop.f32.mrf.mxu0
      %v2878 = vadd.f32 0.0, %v2877
      %v2879 = vpop.f32.mrf.mxu0
      %2880 = vdwg.mxu0
      %2881 = vmatpush.bf16.msra.mxu0 0
      %2882 = vmatpush.bf16.msra.mxu0 0
      %2883 = vmatpush.bf16.msra.mxu0 0
      %2884 = vmatpush.bf16.msra.mxu0 0
      %2885 = vmatpush.bf16.msra.mxu0 0
      %2886 = vmatpush.bf16.msra.mxu0 0
      %2887 = vmatpush.bf16.msra.mxu0 %v2860
      %2888 = vmatpush.bf16.msra.mxu0 %v2858
      %2889 = vmatmul.bf16.gmra.mxu0 %v2866
      %v2890 = vpop.f32.mrf.mxu0
      %v2891 = vadd.f32 0.0, %v2890
      %v2892 = vpop.f32.mrf.mxu0
      %2893 = vdwg.mxu0
      %v2894 = vadd.f32 %v2809, %v2878
      %v2895 = vadd.f32 %v2810, %v2891
      %v2896 = vld [vmem:[%s6] sm:$0x7]
      %2898 = vset.pattern.permute.xlu0 0
      %2899 = vperm.xlu0 %2898, %v2896
      %v2900 = vpop.permute.xlu0 %2899
      %v2902 = vadd.f32 %v2894, %v2900
      %v2903 = vadd.f32 %v2895, %v2900
      %v2906 = vrot.slane %v2903, 4
      %v2907 = vsel %vm400, %v2902, %v2906
      %s2909 = scalar_lea.vmem %s305, 24
      %2910 = vst [vmem:[%s2909] sm:$0x77] %v2907
      %p2911 = scmp.lt.s32.totalorder %s19, 1
      %s2912 = scalar_select %p2911, %s19, 1
      %s2913 = smul.addr %s2912, 8
      %s2914 = smul.addr %s2913, 4
      %s2915 = scalar_lea.vmem %s8, %s2914
      // Predicated region
      $region53: #{recon_forward.1} parent=51 // pred_check
        %p2916 = pneg %p210
      $region54: #{recon_forward.1} parent=51 // pred_check_branch
        %2918 = sbr.rel (%p2916) target = $region56
      $region55: #{recon_forward.1} parent=51 // pred_region
        _
      $region56: #{recon_forward.1} parent=51 // pred_fallthru
        _
    $region52: #{recon_forward.1} parent=5 // pred_fallthru
      _
    %p2919 = scmp.le.s32.totalorder 2, %s14
    // Predicated region
    $region57: #{recon_forward.1} parent=5 // pred_check
      %p2920 = pneg %p2919
    $region58: #{recon_forward.1} parent=5 // pred_check_branch
      %2922 = sbr.rel (%p2920) target = $region60
    $region59: #{recon_forward.1} parent=5 // pred_region
      %s2923 = ssub.s32 %s14, 2
      // Predicated region
      $region61: #{recon_forward.1} parent=59 // pred_check
        %p2924 = pneg %p216
      $region62: #{recon_forward.1} parent=59 // pred_check_branch
        %2926 = sbr.rel (%p2924) target = $region64
      $region63: #{recon_forward.1} parent=59 // pred_region
        %p2927 = scmp.lt.s32.totalorder %s20, 1
        %s2928 = scalar_select %p2927, %s20, 1
        %s2929 = smul.addr %s2928, 8
        %s2930 = smul.addr %s2929, 4
        %s2931 = scalar_lea.vmem %s8, %s2930
      $region64: #{recon_forward.1} parent=59 // pred_fallthru
        _
    $region60: #{recon_forward.1} parent=5 // pred_fallthru
      _
  $region6: #{recon_forward.1} parent=0 // loop_footer
    %s18 = sadd.s32 1, %s14
  $region7: #{recon_forward.1} parent=0 // loop_footer_branch
    %13 = sbr.rel target = $region3
  $region8: #{recon_forward.1} parent=0 // loop_exit
    _

</llo_original>
